<compile_context>
chip_gen: v7x
topology: tpu7x:2x2x1
jax: 0.10.0
libtpu: 0.0.40
codegen_flags: <defaults>
</compile_context>

<pallas_src>
import math
import jax
import jax.numpy as jnp
from jax import lax
from jax.experimental import pallas as pl
from jax.experimental.pallas import tpu as pltpu

# ----- Config (mirrors the PyTorch Config / AttentionConfig globals) -----
HIDDEN_DIM = 32
PREDICTION_HORIZON = 3
KERNEL_SIZES = (3, 5, 7)
N_SQUARES = 30
N_TEMPORAL = 10
NUM_HEADS = 8
TEMPORAL_HIDDEN = HIDDEN_DIM // 2
BN_EPS = 1e-5
LN_EPS = 1e-5

# MultiScaleCNN channel split (target = HIDDEN_DIM // 2)
_CNN_TARGET = HIDDEN_DIM // 2
_BASE = _CNN_TARGET // len(KERNEL_SIZES)
_REM = _CNN_TARGET % len(KERNEL_SIZES)
CONV_DIMS = [_BASE + (1 if i < _REM else 0) for i in range(len(KERNEL_SIZES))]
CNN_OUT_DIM = sum(CONV_DIMS)          # 16
MAX_PAD = max(KERNEL_SIZES) // 2      # 3
N_TAPS = 2 * MAX_PAD + 1              # 7

# ----- packed bias layout (row, width) inside one VMEM array -----
_BIAS_LAYOUT = [
    ('b_lstm', 8 * HIDDEN_DIM),
    ('bt1', TEMPORAL_HIDDEN),
    ('bt2', TEMPORAL_HIDDEN),
    ('bfuse', 2 * HIDDEN_DIM),
    ('ln_g', 2 * HIDDEN_DIM),
    ('ln_b', 2 * HIDDEN_DIM),
    ('bq', 2 * HIDDEN_DIM),
    ('bkv', 4 * HIDDEN_DIM),
    ('bo', 2 * HIDDEN_DIM),
    ('bp1', HIDDEN_DIM),
    ('wp2', HIDDEN_DIM),
    ('ba', PREDICTION_HORIZON * HIDDEN_DIM),
    ('bb', PREDICTION_HORIZON * (HIDDEN_DIM // 2)),
    ('bc', PREDICTION_HORIZON * N_SQUARES),
    ('be1', HIDDEN_DIM),
    ('be2', N_SQUARES),
    ('b_conv', CNN_OUT_DIM),
    ('bn_scale', CNN_OUT_DIM),
    ('bn_shift', CNN_OUT_DIM),
]
BIAS_ROWS = {name: (i, w) for i, (name, w) in enumerate(_BIAS_LAYOUT)}
BIAS_PACK_ROWS = len(_BIAS_LAYOUT)
BIAS_PACK_WIDTH = max(w for _, w in _BIAS_LAYOUT)   # 256


# --------------------------------------------------------------------------
# Fused kernel: CNN -> BiLSTM -> temporal encoder -> fusion -> attention ->
#               peak detector/enhancer -> stacked prediction heads
# --------------------------------------------------------------------------
def fused_kernel(scal_ref, x_tm_ref, xtemp_ref, pe_ref,
                 wconv_ref, wi_ref, wh_ref, wt1_ref, wt2_ref, wf_ref,
                 wq_ref, wkv_ref, wo_ref, wp1_ref,
                 wa_ref, wb_ref, wc_ref, we1_ref, we2_ref,
                 hr_ref, he_ref, bias_ref,
                 out_ref, peak_ref):
    f32 = jnp.float32
    S, B, C = x_tm_ref.shape
    H = HIDDEN_DIM
    D2 = 2 * H
    H8 = 8 * H
    P = PREDICTION_HORIZON

    def bvec(name):
        row, width = BIAS_ROWS[name]
        return bias_ref[row:row + 1, :width]                    # (1, width)

    # ---------- Multi-scale CNN (im2col -> one MXU pass) + ReLU + BN(eval) ----------
    x = x_tm_ref[...]                                           # (S, B, C) time-major
    zpad = jnp.zeros((MAX_PAD, B, C), f32)
    xp = jnp.concatenate([zpad, x, zpad], axis=0)               # (S + 2*MAX_PAD, B, C)
    win = jnp.concatenate([xp[j:j + S] for j in range(N_TAPS)], axis=-1)
    win = win.reshape(S * B, N_TAPS * C)                        # row order: s*B + b
    conv = jnp.dot(win, wconv_ref[...], preferred_element_type=f32) + bvec('b_conv')
    conv = jnp.maximum(conv, 0.0)
    cnn = conv * bvec('bn_scale') + bvec('bn_shift')            # Dropout = identity (eval)

    # ---------- BiLSTM: hoisted input projection, fwd+bwd fused per step ----------
    gx = jnp.dot(cnn, wi_ref[...], preferred_element_type=f32) + bvec('b_lstm')
    gx = gx.reshape(S, B, H8)            # gate layout [i_f i_b | f_f f_b | g_f g_b | o_f o_b]
    wh = wh_ref[...]                     # (2H, 8H) block-diagonal hidden weights
    lane = lax.broadcasted_iota(jnp.int32, (B, H8), 1)
    fwd_mask = (lane % D2) < H

    h = jnp.zeros((B, D2), f32)          # [h_fwd | h_bwd]
    c = jnp.zeros((B, D2), f32)
    outs_f = [None] * S
    outs_b = [None] * S
    for t in range(S):                   # static unroll: full scheduler visibility
        gx_t = jnp.where(fwd_mask, gx[t], gx[S - 1 - t])
        gates = gx_t + jnp.dot(h, wh, preferred_element_type=f32)
        sig = jax.nn.sigmoid(gates)      # one full-width EUP pass for i/f/o gates
        i_g = sig[:, 0:D2]
        f_g = sig[:, D2:2 * D2]
        o_g = sig[:, 3 * D2:4 * D2]
        g_g = jnp.tanh(gates[:, 2 * D2:3 * D2])
        c = f_g * c + i_g * g_g
        h = o_g * jnp.tanh(c)
        outs_f[t] = h[:, :H]
        outs_b[S - 1 - t] = h[:, H:]
    h_cat = h                            # == torch.cat([h_n fwd, h_n bwd], dim=1)

    lstm_rows = [jnp.concatenate([outs_f[s], outs_b[s]], axis=-1) for s in range(S)]
    kv_in = jnp.concatenate(lstm_rows, axis=0) + pe_ref[...]    # (S*B, 2H) + pos-enc

    # ---------- Temporal encoder (Linear-ReLU-Linear, eval BN folded into 2nd linear) ----------
    xt = xtemp_ref[...].reshape(B * S, N_TEMPORAL)
    t1 = jnp.maximum(jnp.dot(xt, wt1_ref[...], preferred_element_type=f32) + bvec('bt1'), 0.0)
    te = jnp.dot(t1, wt2_ref[...], preferred_element_type=f32) + bvec('bt2')
    temporal_ctx = jnp.mean(te.reshape(B, S, TEMPORAL_HIDDEN), axis=1)   # (B, Th)

    # ---------- Fusion: Linear -> ReLU -> LayerNorm -> [Dropout=id] ----------
    comb = jnp.concatenate([h_cat, temporal_ctx], axis=-1)
    fused = jnp.maximum(jnp.dot(comb, wf_ref[...], preferred_element_type=f32) + bvec('bfuse'), 0.0)
    mu = jnp.mean(fused, axis=-1, keepdims=True)
    var = jnp.mean((fused - mu) ** 2, axis=-1, keepdims=True)
    fused = (fused - mu) * lax.rsqrt(var + LN_EPS) * bvec('ln_g') + bvec('ln_b')

    # ---------- Multi-head attention: query = fused (len 1), kv = lstm_out + pos-enc ----------
    q = jnp.dot(fused, wq_ref[...], preferred_element_type=f32) + bvec('bq')      # (B, 2H)
    kvp = jnp.dot(kv_in, wkv_ref[...], preferred_element_type=f32) + bvec('bkv')  # (S*B, 4H)
    k = kvp[:, :D2].reshape(S, B, D2)
    v = kvp[:, D2:]
    scores = jnp.dot((k * q[None, :, :]).reshape(S * B, D2), hr_ref[...],
                     preferred_element_type=f32)                 # per-head reduce, scale folded
    scores = scores.reshape(S, B, NUM_HEADS)
    mx = jnp.max(scores, axis=0, keepdims=True)
    ex = jnp.exp(scores - mx)
    w = ex / jnp.sum(ex, axis=0, keepdims=True)                  # softmax over time
    w_full = jnp.dot(w.reshape(S * B, NUM_HEADS), he_ref[...],
                     preferred_element_type=f32)                 # per-head broadcast -> (S*B, 2H)
    attn = jnp.sum((w_full * v).reshape(S, B, D2), axis=0)       # (B, 2H)
    attn = jnp.dot(attn, wo_ref[...], preferred_element_type=f32) + bvec('bo')

    # ---------- Peak detector ----------
    hp = jnp.maximum(jnp.dot(attn, wp1_ref[...], preferred_element_type=f32) + bvec('bp1'), 0.0)
    peak_logits = jnp.sum(hp * bvec('wp2'), axis=-1, keepdims=True) + scal_ref[2]
    peak_ref[...] = peak_logits
    peak_prob = jax.nn.sigmoid(peak_logits)

    # ---------- Peak enhancer on last traffic value ----------
    last = x_tm_ref[S - 1]                                       # x_traffic[:, -1, :]  (B, N)
    e1 = jnp.maximum(jnp.dot(last, we1_ref[...], preferred_element_type=f32) + bvec('be1'), 0.0)
    enh = jnp.tanh(jnp.dot(e1, we2_ref[...], preferred_element_type=f32) + bvec('be2')) * peak_prob

    # ---------- Stacked prediction heads (block-diag) + residuals, lane-dense store ----------
    h1 = jnp.maximum(jnp.dot(attn, wa_ref[...], preferred_element_type=f32) + bvec('ba'), 0.0)
    h2 = jnp.maximum(jnp.dot(h1, wb_ref[...], preferred_element_type=f32) + bvec('bb'), 0.0)
    preds = jnp.dot(h2, wc_ref[...], preferred_element_type=f32) + bvec('bc')     # (B, P*N)
    resid = scal_ref[0] * last + scal_ref[1] * enh                                # rw, prw in SMEM
    out_ref[...] = preds + jnp.concatenate([resid] * P, axis=-1)


# --------------------------------------------------------------------------
# Wrapper
# --------------------------------------------------------------------------
def positional_encoding(seq_len, d_model):
    pos = jnp.arange(seq_len, dtype=jnp.float32)[:, None]
    div = jnp.exp(jnp.arange(0, d_model, 2, dtype=jnp.float32)
                  * (-math.log(10000.0) / d_model))
    pe = jnp.zeros((seq_len, d_model), jnp.float32)
    pe = pe.at[:, 0::2].set(jnp.sin(pos * div))
    pe = pe.at[:, 1::2].set(jnp.cos(pos * div))
    return pe


@jax.jit
def forward(x_traffic, x_temporal, fp):
    B, S, _ = x_traffic.shape
    x_tm = jnp.transpose(x_traffic, (1, 0, 2))                        # time-major
    pe_flat = jnp.repeat(positional_encoding(S, 2 * HIDDEN_DIM), B, axis=0)   # row s*B+b

    args = (fp['scal'], x_tm, x_temporal, pe_flat,
            fp['w_conv'], fp['wi'], fp['wh'], fp['wt1'], fp['wt2'], fp['wf'],
            fp['wq'], fp['wkv'], fp['wo'], fp['wp1'],
            fp['wa'], fp['wb'], fp['wc'], fp['we1'], fp['we2'],
            fp['hr'], fp['he'], fp['bias'])

    smem = pl.BlockSpec(memory_space=pltpu.MemorySpace.SMEM)
    vmem = pl.BlockSpec(memory_space=pltpu.MemorySpace.VMEM)
    in_specs = [smem] + [vmem] * (len(args) - 1)

    D2, H8, Hh = 2 * HIDDEN_DIM, 8 * HIDDEN_DIM, HIDDEN_DIM // 2
    SB = S * B
    P = PREDICTION_HORIZON
    flops = 2 * (SB * (N_TAPS * N_SQUARES * CNN_OUT_DIM + CNN_OUT_DIM * H8 + D2 * H8
                       + N_TEMPORAL * TEMPORAL_HIDDEN + TEMPORAL_HIDDEN * TEMPORAL_HIDDEN
                       + D2 * 2 * D2 + 2 * D2 * NUM_HEADS)
                 + B * ((D2 + TEMPORAL_HIDDEN) * D2 + 3 * D2 * D2 + D2 * HIDDEN_DIM
                        + 2 * N_SQUARES * HIDDEN_DIM + D2 * P * HIDDEN_DIM
                        + P * HIDDEN_DIM * P * Hh + P * Hh * P * N_SQUARES))
    transcendentals = SB * (2 * H8 + D2 + NUM_HEADS) + B * (2 + N_SQUARES + D2)
    bytes_accessed = 4 * (sum(int(a.size) for a in args) + B * (P * N_SQUARES + 1))

    out, peak = pl.pallas_call(
        fused_kernel,
        out_shape=(jax.ShapeDtypeStruct((B, P * N_SQUARES), jnp.float32),
                   jax.ShapeDtypeStruct((B, 1), jnp.float32)),
        in_specs=in_specs,
        out_specs=(vmem, vmem),
        cost_estimate=pl.CostEstimate(flops=int(flops),
                                      transcendentals=int(transcendentals),
                                      bytes_accessed=int(bytes_accessed)),
    )(*args)
    return out.reshape(B, P, N_SQUARES), peak


# --------------------------------------------------------------------------
# Parameter init (torch-like, pre-transposed (in, out)) + fused-operand packing
# --------------------------------------------------------------------------
def init_params(key):
    keys = iter(jax.random.split(key, 96))

    def nrm(shape, scale=0.1):
        return scale * jax.random.normal(next(keys), shape, dtype=jnp.float32)

    p = {}
    for i, (ksz, cdim) in enumerate(zip(KERNEL_SIZES, CONV_DIMS)):
        p[f'cw{i}'] = nrm((ksz, N_SQUARES, cdim))
        p[f'cb{i}'] = nrm((1, cdim))
    p['cg'] = 1.0 + nrm((1, CNN_OUT_DIM))
    p['cbeta'] = nrm((1, CNN_OUT_DIM))
    p['cmu'] = nrm((1, CNN_OUT_DIM))
    p['cvar'] = 1.0 + 0.1 * jnp.abs(jax.random.normal(next(keys), (1, CNN_OUT_DIM),
                                                      dtype=jnp.float32))
    H4 = 4 * HIDDEN_DIM
    p['wif'] = nrm((CNN_OUT_DIM, H4)); p['whf'] = nrm((HIDDEN_DIM, H4)); p['bf'] = nrm((1, H4))
    p['wib'] = nrm((CNN_OUT_DIM, H4)); p['whb'] = nrm((HIDDEN_DIM, H4)); p['bb'] = nrm((1, H4))
    p['wt1'] = nrm((N_TEMPORAL, TEMPORAL_HIDDEN)); p['bt1'] = nrm((1, TEMPORAL_HIDDEN))
    p['wt2'] = nrm((TEMPORAL_HIDDEN, TEMPORAL_HIDDEN)); p['bt2'] = nrm((1, TEMPORAL_HIDDEN))
    p['tg'] = 1.0 + nrm((1, TEMPORAL_HIDDEN)); p['tb'] = nrm((1, TEMPORAL_HIDDEN))
    p['tmu'] = nrm((1, TEMPORAL_HIDDEN))
    p['tvar'] = 1.0 + 0.1 * jnp.abs(jax.random.normal(next(keys), (1, TEMPORAL_HIDDEN),
                                                      dtype=jnp.float32))
    D2 = 2 * HIDDEN_DIM
    p['wf'] = nrm((D2 + TEMPORAL_HIDDEN, D2)); p['bfuse'] = nrm((1, D2))
    p['lng'] = 1.0 + nrm((1, D2)); p['lnb'] = nrm((1, D2))
    for name in ('wq', 'wk', 'wv', 'wo'):
        p[name] = nrm((D2, D2))
    for name in ('bq', 'bk', 'bv', 'bo'):
        p[name] = nrm((1, D2))
    p['wp1'] = nrm((D2, HIDDEN_DIM)); p['bp1'] = nrm((1, HIDDEN_DIM))
    p['wp2'] = nrm((1, HIDDEN_DIM)); p['bp2'] = nrm((1, 1))
    P = PREDICTION_HORIZON
    p['ha'] = nrm((P, D2, HIDDEN_DIM));              p['hba'] = nrm((P, 1, HIDDEN_DIM))
    p['hb'] = nrm((P, HIDDEN_DIM, HIDDEN_DIM // 2)); p['hbb'] = nrm((P, 1, HIDDEN_DIM // 2))
    p['hc'] = nrm((P, HIDDEN_DIM // 2, N_SQUARES));  p['hbc'] = nrm((P, 1, N_SQUARES))
    p['we1'] = nrm((N_SQUARES, HIDDEN_DIM)); p['be1'] = nrm((1, HIDDEN_DIM))
    p['we2'] = nrm((HIDDEN_DIM, N_SQUARES)); p['be2'] = nrm((1, N_SQUARES))
    p['rw'] = jnp.full((1, 1), 0.1, jnp.float32)
    p['prw'] = jnp.full((1, 1), 0.3, jnp.float32)
    return p


def pack_params(p):
    f32 = jnp.float32
    H, D2, H8 = HIDDEN_DIM, 2 * HIDDEN_DIM, 8 * HIDDEN_DIM
    P, Hh = PREDICTION_HORIZON, HIDDEN_DIM // 2
    fp = {}

    # im2col conv weight (taps of all 3 kernel sizes share MAX_PAD alignment)
    w_conv = jnp.zeros((N_TAPS * N_SQUARES, CNN_OUT_DIM), f32)
    col = 0
    for i, (ksz, cd) in enumerate(zip(KERNEL_SIZES, CONV_DIMS)):
        pad = ksz // 2
        cw = p[f'cw{i}']                              # (ksz, Cin, cd)
        for j in range(ksz):
            r = (MAX_PAD - pad + j) * N_SQUARES
            w_conv = w_conv.at[r:r + N_SQUARES, col:col + cd].set(cw[j])
        col += cd
    fp['w_conv'] = w_conv
    b_conv = jnp.concatenate([p['cb0'], p['cb1'], p['cb2']], axis=-1)
    bn_scale = p['cg'] * lax.rsqrt(p['cvar'] + BN_EPS)
    bn_shift = p['cbeta'] - p['cmu'] * bn_scale

    # BiLSTM packed weights: gate-grouped [i_f i_b | f_f f_b | g_f g_b | o_f o_b]
    wi = jnp.zeros((CNN_OUT_DIM, H8), f32)
    wh = jnp.zeros((D2, H8), f32)
    bl = jnp.zeros((1, H8), f32)
    for g in range(4):
        wi = wi.at[:, g * D2:g * D2 + H].set(p['wif'][:, g * H:(g + 1) * H])
        wi = wi.at[:, g * D2 + H:(g + 1) * D2].set(p['wib'][:, g * H:(g + 1) * H])
        wh = wh.at[0:H, g * D2:g * D2 + H].set(p['whf'][:, g * H:(g + 1) * H])
        wh = wh.at[H:D2, g * D2 + H:(g + 1) * D2].set(p['whb'][:, g * H:(g + 1) * H])
        bl = bl.at[:, g * D2:g * D2 + H].set(p['bf'][:, g * H:(g + 1) * H])
        bl = bl.at[:, g * D2 + H:(g + 1) * D2].set(p['bb'][:, g * H:(g + 1) * H])
    fp['wi'], fp['wh'] = wi, wh

    # temporal encoder (eval BN folded into second linear)
    s_t = (p['tg'] * lax.rsqrt(p['tvar'] + BN_EPS)).reshape(-1)
    sh_t = p['tb'].reshape(-1) - p['tmu'].reshape(-1) * s_t
    fp['wt1'] = p['wt1']
    fp['wt2'] = p['wt2'] * s_t[None, :]
    bt2_eff = p['bt2'].reshape(-1) * s_t + sh_t

    fp['wf'] = p['wf']
    fp['wq'] = p['wq']
    fp['wkv'] = jnp.concatenate([p['wk'], p['wv']], axis=-1)
    fp['wo'] = p['wo']
    fp['wp1'] = p['wp1']
    fp['we1'] = p['we1']
    fp['we2'] = p['we2']

    # stacked / block-diagonal prediction heads
    wa = jnp.zeros((D2, P * H), f32)
    wb = jnp.zeros((P * H, P * Hh), f32)
    wc = jnp.zeros((P * Hh, P * N_SQUARES), f32)
    for q in range(P):
        wa = wa.at[:, q * H:(q + 1) * H].set(p['ha'][q])
        wb = wb.at[q * H:(q + 1) * H, q * Hh:(q + 1) * Hh].set(p['hb'][q])
        wc = wc.at[q * Hh:(q + 1) * Hh, q * N_SQUARES:(q + 1) * N_SQUARES].set(p['hc'][q])
    fp['wa'], fp['wb'], fp['wc'] = wa, wb, wc

    # attention per-head reduce / expand matrices (softmax scale folded into 'hr')
    hd = D2 // NUM_HEADS
    eye = jnp.eye(NUM_HEADS, dtype=f32)
    fp['hr'] = jnp.repeat(eye, hd, axis=0) / math.sqrt(hd)       # (2H, NH)
    fp['he'] = jnp.repeat(eye, hd, axis=1)                       # (NH, 2H)

    # packed bias / affine vectors
    vecs = {
        'b_lstm': bl.reshape(-1),
        'bt1': p['bt1'].reshape(-1),
        'bt2': bt2_eff,
        'bfuse': p['bfuse'].reshape(-1),
        'ln_g': p['lng'].reshape(-1),
        'ln_b': p['lnb'].reshape(-1),
        'bq': p['bq'].reshape(-1),
        'bkv': jnp.concatenate([p['bk'], p['bv']], axis=-1).reshape(-1),
        'bo': p['bo'].reshape(-1),
        'bp1': p['bp1'].reshape(-1),
        'wp2': p['wp2'].reshape(-1),
        'ba': jnp.concatenate([p['hba'][q] for q in range(P)], axis=-1).reshape(-1),
        'bb': jnp.concatenate([p['hbb'][q] for q in range(P)], axis=-1).reshape(-1),
        'bc': jnp.concatenate([p['hbc'][q] for q in range(P)], axis=-1).reshape(-1),
        'be1': p['be1'].reshape(-1),
        'be2': p['be2'].reshape(-1),
        'b_conv': b_conv.reshape(-1),
        'bn_scale': bn_scale.reshape(-1),
        'bn_shift': bn_shift.reshape(-1),
    }
    bias = jnp.zeros((BIAS_PACK_ROWS, BIAS_PACK_WIDTH), f32)
    for name, vec in vecs.items():
        row, width = BIAS_ROWS[name]
        bias = bias.at[row, :width].set(vec)
    fp['bias'] = bias

    # SMEM scalars: [residual_weight, peak_residual_weight, peak-detector final bias]
    fp['scal'] = jnp.stack([p['rw'].reshape(()), p['prw'].reshape(()),
                            p['bp2'].reshape(())]).astype(f32)
    return fp


if __name__ == "__main__":
    key = jax.random.PRNGKey(0)
    kp, kx, kt = jax.random.split(key, 3)
    params = init_params(kp)
    fp = pack_params(params)

    B, S = 2, 8
    x_traffic = jax.random.normal(kx, (B, S, N_SQUARES), dtype=jnp.float32)
    x_temporal = jax.random.normal(kt, (B, S, N_TEMPORAL), dtype=jnp.float32)

    out, peak_logits = forward(x_traffic, x_temporal, fp)
    jax.block_until_ready((out, peak_logits))

    assert out.shape == (B, PREDICTION_HORIZON, N_SQUARES)
    assert peak_logits.shape == (B, 1)
    assert bool(jnp.all(jnp.isfinite(out))) and bool(jnp.all(jnp.isfinite(peak_logits)))
    print("KERNEL_OK")
</pallas_src>

<mosaic_0001>
module attributes {stable_mosaic.version = 11 : i64} {
  func.func @fused_kernel(%arg0: memref<3xf32, #tpu.memory_space<smem>>, %arg1: memref<8x2x30xf32, #tpu.memory_space<vmem>>, %arg2: memref<2x8x10xf32, #tpu.memory_space<vmem>>, %arg3: memref<16x64xf32, #tpu.memory_space<vmem>>, %arg4: memref<210x16xf32, #tpu.memory_space<vmem>>, %arg5: memref<16x256xf32, #tpu.memory_space<vmem>>, %arg6: memref<64x256xf32, #tpu.memory_space<vmem>>, %arg7: memref<10x16xf32, #tpu.memory_space<vmem>>, %arg8: memref<16x16xf32, #tpu.memory_space<vmem>>, %arg9: memref<80x64xf32, #tpu.memory_space<vmem>>, %arg10: memref<64x64xf32, #tpu.memory_space<vmem>>, %arg11: memref<64x128xf32, #tpu.memory_space<vmem>>, %arg12: memref<64x64xf32, #tpu.memory_space<vmem>>, %arg13: memref<64x32xf32, #tpu.memory_space<vmem>>, %arg14: memref<64x96xf32, #tpu.memory_space<vmem>>, %arg15: memref<96x48xf32, #tpu.memory_space<vmem>>, %arg16: memref<48x90xf32, #tpu.memory_space<vmem>>, %arg17: memref<30x32xf32, #tpu.memory_space<vmem>>, %arg18: memref<32x30xf32, #tpu.memory_space<vmem>>, %arg19: memref<64x8xf32, #tpu.memory_space<vmem>>, %arg20: memref<8x64xf32, #tpu.memory_space<vmem>>, %arg21: memref<19x256xf32, #tpu.memory_space<vmem>>, %arg22: memref<2x90xf32, #tpu.memory_space<vmem>>, %arg23: memref<2x1xf32, #tpu.memory_space<vmem>>) attributes {dimension_semantics = [], scalar_prefetch = 0 : i64, scratch_operands = 0 : i64, tpu.core_type = #tpu.core_type<tc>} {
    %c0 = arith.constant 0 : index
    %c0_0 = arith.constant 0 : index
    %c0_1 = arith.constant 0 : index
    %0 = vector.load %arg1[%c0, %c0_0, %c0_1] : memref<8x2x30xf32, #tpu.memory_space<vmem>>, vector<8x2x30xf32>
    %cst = arith.constant 0.000000e+00 : f32
    %1 = vector.broadcast %cst : f32 to vector<3x2x30xf32>
    %2 = tpu.concatenate %1, %0, %1 in 0 : vector<3x2x30xf32>, vector<8x2x30xf32>, vector<3x2x30xf32> -> vector<14x2x30xf32>
    %3 = vector.extract_strided_slice %2 {offsets = [0, 0, 0], sizes = [8, 2, 30], strides = [1, 1, 1]} : vector<14x2x30xf32> to vector<8x2x30xf32>
    %4 = vector.extract_strided_slice %2 {offsets = [1, 0, 0], sizes = [8, 2, 30], strides = [1, 1, 1]} : vector<14x2x30xf32> to vector<8x2x30xf32>
    %5 = vector.extract_strided_slice %2 {offsets = [2, 0, 0], sizes = [8, 2, 30], strides = [1, 1, 1]} : vector<14x2x30xf32> to vector<8x2x30xf32>
    %6 = vector.extract_strided_slice %2 {offsets = [3, 0, 0], sizes = [8, 2, 30], strides = [1, 1, 1]} : vector<14x2x30xf32> to vector<8x2x30xf32>
    %7 = vector.extract_strided_slice %2 {offsets = [4, 0, 0], sizes = [8, 2, 30], strides = [1, 1, 1]} : vector<14x2x30xf32> to vector<8x2x30xf32>
    %8 = vector.extract_strided_slice %2 {offsets = [5, 0, 0], sizes = [8, 2, 30], strides = [1, 1, 1]} : vector<14x2x30xf32> to vector<8x2x30xf32>
    %9 = vector.extract_strided_slice %2 {offsets = [6, 0, 0], sizes = [8, 2, 30], strides = [1, 1, 1]} : vector<14x2x30xf32> to vector<8x2x30xf32>
    %10 = tpu.concatenate %3, %4, %5, %6, %7, %8, %9 in 2 : vector<8x2x30xf32>, vector<8x2x30xf32>, vector<8x2x30xf32>, vector<8x2x30xf32>, vector<8x2x30xf32>, vector<8x2x30xf32>, vector<8x2x30xf32> -> vector<8x2x210xf32>
    %11 = vector.shape_cast %10 : vector<8x2x210xf32> to vector<16x210xf32>
    %c0_2 = arith.constant 0 : index
    %c0_3 = arith.constant 0 : index
    %12 = vector.load %arg4[%c0_2, %c0_3] : memref<210x16xf32, #tpu.memory_space<vmem>>, vector<210x16xf32>
    %cst_4 = arith.constant dense<0.000000e+00> : vector<16x16xf32>
    %13 = tpu.matmul %11, %12, %cst_4 {dimension_numbers = #tpu.dot_dimension_numbers<[1], [0], [0], [1], [0, 0, 1, 1], [], []>} : vector<16x210xf32>, vector<210x16xf32>, vector<16x16xf32> -> vector<16x16xf32>
    %c16 = arith.constant 16 : index
    %c0_5 = arith.constant 0 : index
    %14 = vector.load %arg21[%c16, %c0_5] : memref<19x256xf32, #tpu.memory_space<vmem>>, vector<1x16xf32>
    %15 = vector.broadcast %14 : vector<1x16xf32> to vector<16x16xf32>
    %16 = arith.addf %13, %15 : vector<16x16xf32>
    %cst_6 = arith.constant 0.000000e+00 : f32
    %17 = vector.broadcast %cst_6 : f32 to vector<16x16xf32>
    %18 = arith.maximumf %16, %17 : vector<16x16xf32>
    %c17 = arith.constant 17 : index
    %c0_7 = arith.constant 0 : index
    %19 = vector.load %arg21[%c17, %c0_7] : memref<19x256xf32, #tpu.memory_space<vmem>>, vector<1x16xf32>
    %20 = vector.broadcast %19 : vector<1x16xf32> to vector<16x16xf32>
    %21 = arith.mulf %18, %20 : vector<16x16xf32>
    %c18 = arith.constant 18 : index
    %c0_8 = arith.constant 0 : index
    %22 = vector.load %arg21[%c18, %c0_8] : memref<19x256xf32, #tpu.memory_space<vmem>>, vector<1x16xf32>
    %23 = vector.broadcast %22 : vector<1x16xf32> to vector<16x16xf32>
    %24 = arith.addf %21, %23 : vector<16x16xf32>
    %c0_9 = arith.constant 0 : index
    %c0_10 = arith.constant 0 : index
    %25 = vector.load %arg5[%c0_9, %c0_10] : memref<16x256xf32, #tpu.memory_space<vmem>>, vector<16x256xf32>
    %cst_11 = arith.constant dense<0.000000e+00> : vector<16x256xf32>
    %26 = tpu.matmul %24, %25, %cst_11 {dimension_numbers = #tpu.dot_dimension_numbers<[1], [0], [0], [1], [0, 0, 1, 1], [], []>} : vector<16x16xf32>, vector<16x256xf32>, vector<16x256xf32> -> vector<16x256xf32>
    %c0_12 = arith.constant 0 : index
    %c0_13 = arith.constant 0 : index
    %27 = vector.load %arg21[%c0_12, %c0_13] : memref<19x256xf32, #tpu.memory_space<vmem>>, vector<1x256xf32>
    %28 = vector.broadcast %27 : vector<1x256xf32> to vector<16x256xf32>
    %29 = arith.addf %26, %28 : vector<16x256xf32>
    %30 = vector.shape_cast %29 : vector<16x256xf32> to vector<8x2x256xf32>
    %c0_14 = arith.constant 0 : index
    %c0_15 = arith.constant 0 : index
    %31 = vector.load %arg6[%c0_14, %c0_15] : memref<64x256xf32, #tpu.memory_space<vmem>>, vector<64x256xf32>
    %32 = tpu.iota {dimensions = array<i32: 1>} : vector<2x256xi32>
    %c64_i32 = arith.constant 64 : i32
    %c0_i32 = arith.constant 0 : i32
    %33 = arith.cmpi eq, %c64_i32, %c0_i32 : i32
    %c1_i32 = arith.constant 1 : i32
    %34 = arith.select %33, %c1_i32, %c64_i32 : i32
    %35 = vector.broadcast %34 : i32 to vector<2x256xi32>
    %36 = arith.remsi %32, %35 : vector<2x256xi32>
    %c0_i32_16 = arith.constant 0 : i32
    %37 = vector.broadcast %c0_i32_16 : i32 to vector<2x256xi32>
    %38 = arith.cmpi ne, %36, %37 : vector<2x256xi32>
    %c0_i32_17 = arith.constant 0 : i32
    %39 = vector.broadcast %c0_i32_17 : i32 to vector<2x256xi32>
    %40 = arith.cmpi slt, %36, %39 : vector<2x256xi32>
    %c0_i32_18 = arith.constant 0 : i32
    %41 = arith.cmpi slt, %34, %c0_i32_18 : i32
    %42 = vector.broadcast %41 : i1 to vector<2x256xi1>
    %43 = vector.broadcast %42 : vector<2x256xi1> to vector<2x256xi1>
    %44 = arith.xori %40, %43 : vector<2x256xi1>
    %45 = arith.andi %44, %38 : vector<2x256xi1>
    %46 = vector.broadcast %34 : i32 to vector<2x256xi32>
    %47 = arith.addi %36, %46 : vector<2x256xi32>
    %48 = arith.select %45, %47, %36 : vector<2x256xi1>, vector<2x256xi32>
    %c32_i32 = arith.constant 32 : i32
    %49 = vector.broadcast %c32_i32 : i32 to vector<2x256xi32>
    %50 = arith.cmpi slt, %48, %49 : vector<2x256xi32>
    %cst_19 = arith.constant 0.000000e+00 : f32
    %51 = vector.broadcast %cst_19 : f32 to vector<2x64xf32>
    %cst_20 = arith.constant 0.000000e+00 : f32
    %52 = vector.broadcast %cst_20 : f32 to vector<2x64xf32>
    %53 = vector.extract_strided_slice %30 {offsets = [0, 0, 0], sizes = [1, 2, 256], strides = [1, 1, 1]} : vector<8x2x256xf32> to vector<1x2x256xf32>
    %54 = vector.shape_cast %53 : vector<1x2x256xf32> to vector<2x256xf32>
    %55 = vector.extract_strided_slice %30 {offsets = [7, 0, 0], sizes = [1, 2, 256], strides = [1, 1, 1]} : vector<8x2x256xf32> to vector<1x2x256xf32>
    %56 = vector.shape_cast %55 : vector<1x2x256xf32> to vector<2x256xf32>
    %57 = arith.select %50, %54, %56 : vector<2x256xi1>, vector<2x256xf32>
    %cst_21 = arith.constant dense<0.000000e+00> : vector<2x256xf32>
    %58 = tpu.matmul %51, %31, %cst_21 {dimension_numbers = #tpu.dot_dimension_numbers<[1], [0], [0], [1], [0, 0, 1, 1], [], []>} : vector<2x64xf32>, vector<64x256xf32>, vector<2x256xf32> -> vector<2x256xf32>
    %59 = arith.addf %57, %58 : vector<2x256xf32>
    %60 = arith.negf %59 : vector<2x256xf32>
    %61 = math.exp %60 : vector<2x256xf32>
    %cst_22 = arith.constant 1.000000e+00 : f32
    %62 = vector.broadcast %cst_22 : f32 to vector<2x256xf32>
    %63 = arith.addf %62, %61 : vector<2x256xf32>
    %64 = arith.divf %62, %63 : vector<2x256xf32>
    %65 = vector.extract_strided_slice %64 {offsets = [0, 0], sizes = [2, 64], strides = [1, 1]} : vector<2x256xf32> to vector<2x64xf32>
    %66 = vector.extract_strided_slice %64 {offsets = [0, 64], sizes = [2, 64], strides = [1, 1]} : vector<2x256xf32> to vector<2x64xf32>
    %67 = vector.extract_strided_slice %64 {offsets = [0, 192], sizes = [2, 64], strides = [1, 1]} : vector<2x256xf32> to vector<2x64xf32>
    %68 = vector.extract_strided_slice %59 {offsets = [0, 128], sizes = [2, 64], strides = [1, 1]} : vector<2x256xf32> to vector<2x64xf32>
    %69 = math.tanh %68 : vector<2x64xf32>
    %70 = arith.mulf %66, %52 : vector<2x64xf32>
    %71 = arith.mulf %65, %69 : vector<2x64xf32>
    %72 = arith.addf %70, %71 : vector<2x64xf32>
    %73 = math.tanh %72 : vector<2x64xf32>
    %74 = arith.mulf %67, %73 : vector<2x64xf32>
    %75 = vector.extract_strided_slice %74 {offsets = [0, 0], sizes = [2, 32], strides = [1, 1]} : vector<2x64xf32> to vector<2x32xf32>
    %76 = vector.extract_strided_slice %74 {offsets = [0, 32], sizes = [2, 32], strides = [1, 1]} : vector<2x64xf32> to vector<2x32xf32>
    %77 = vector.extract_strided_slice %30 {offsets = [1, 0, 0], sizes = [1, 2, 256], strides = [1, 1, 1]} : vector<8x2x256xf32> to vector<1x2x256xf32>
    %78 = vector.shape_cast %77 : vector<1x2x256xf32> to vector<2x256xf32>
    %79 = vector.extract_strided_slice %30 {offsets = [6, 0, 0], sizes = [1, 2, 256], strides = [1, 1, 1]} : vector<8x2x256xf32> to vector<1x2x256xf32>
    %80 = vector.shape_cast %79 : vector<1x2x256xf32> to vector<2x256xf32>
    %81 = arith.select %50, %78, %80 : vector<2x256xi1>, vector<2x256xf32>
    %cst_23 = arith.constant dense<0.000000e+00> : vector<2x256xf32>
    %82 = tpu.matmul %74, %31, %cst_23 {dimension_numbers = #tpu.dot_dimension_numbers<[1], [0], [0], [1], [0, 0, 1, 1], [], []>} : vector<2x64xf32>, vector<64x256xf32>, vector<2x256xf32> -> vector<2x256xf32>
    %83 = arith.addf %81, %82 : vector<2x256xf32>
    %84 = arith.negf %83 : vector<2x256xf32>
    %85 = math.exp %84 : vector<2x256xf32>
    %cst_24 = arith.constant 1.000000e+00 : f32
    %86 = vector.broadcast %cst_24 : f32 to vector<2x256xf32>
    %87 = arith.addf %86, %85 : vector<2x256xf32>
    %88 = arith.divf %86, %87 : vector<2x256xf32>
    %89 = vector.extract_strided_slice %88 {offsets = [0, 0], sizes = [2, 64], strides = [1, 1]} : vector<2x256xf32> to vector<2x64xf32>
    %90 = vector.extract_strided_slice %88 {offsets = [0, 64], sizes = [2, 64], strides = [1, 1]} : vector<2x256xf32> to vector<2x64xf32>
    %91 = vector.extract_strided_slice %88 {offsets = [0, 192], sizes = [2, 64], strides = [1, 1]} : vector<2x256xf32> to vector<2x64xf32>
    %92 = vector.extract_strided_slice %83 {offsets = [0, 128], sizes = [2, 64], strides = [1, 1]} : vector<2x256xf32> to vector<2x64xf32>
    %93 = math.tanh %92 : vector<2x64xf32>
    %94 = arith.mulf %90, %72 : vector<2x64xf32>
    %95 = arith.mulf %89, %93 : vector<2x64xf32>
    %96 = arith.addf %94, %95 : vector<2x64xf32>
    %97 = math.tanh %96 : vector<2x64xf32>
    %98 = arith.mulf %91, %97 : vector<2x64xf32>
    %99 = vector.extract_strided_slice %98 {offsets = [0, 0], sizes = [2, 32], strides = [1, 1]} : vector<2x64xf32> to vector<2x32xf32>
    %100 = vector.extract_strided_slice %98 {offsets = [0, 32], sizes = [2, 32], strides = [1, 1]} : vector<2x64xf32> to vector<2x32xf32>
    %101 = vector.extract_strided_slice %30 {offsets = [2, 0, 0], sizes = [1, 2, 256], strides = [1, 1, 1]} : vector<8x2x256xf32> to vector<1x2x256xf32>
    %102 = vector.shape_cast %101 : vector<1x2x256xf32> to vector<2x256xf32>
    %103 = vector.extract_strided_slice %30 {offsets = [5, 0, 0], sizes = [1, 2, 256], strides = [1, 1, 1]} : vector<8x2x256xf32> to vector<1x2x256xf32>
    %104 = vector.shape_cast %103 : vector<1x2x256xf32> to vector<2x256xf32>
    %105 = arith.select %50, %102, %104 : vector<2x256xi1>, vector<2x256xf32>
    %cst_25 = arith.constant dense<0.000000e+00> : vector<2x256xf32>
    %106 = tpu.matmul %98, %31, %cst_25 {dimension_numbers = #tpu.dot_dimension_numbers<[1], [0], [0], [1], [0, 0, 1, 1], [], []>} : vector<2x64xf32>, vector<64x256xf32>, vector<2x256xf32> -> vector<2x256xf32>
    %107 = arith.addf %105, %106 : vector<2x256xf32>
    %108 = arith.negf %107 : vector<2x256xf32>
    %109 = math.exp %108 : vector<2x256xf32>
    %cst_26 = arith.constant 1.000000e+00 : f32
    %110 = vector.broadcast %cst_26 : f32 to vector<2x256xf32>
    %111 = arith.addf %110, %109 : vector<2x256xf32>
    %112 = arith.divf %110, %111 : vector<2x256xf32>
    %113 = vector.extract_strided_slice %112 {offsets = [0, 0], sizes = [2, 64], strides = [1, 1]} : vector<2x256xf32> to vector<2x64xf32>
    %114 = vector.extract_strided_slice %112 {offsets = [0, 64], sizes = [2, 64], strides = [1, 1]} : vector<2x256xf32> to vector<2x64xf32>
    %115 = vector.extract_strided_slice %112 {offsets = [0, 192], sizes = [2, 64], strides = [1, 1]} : vector<2x256xf32> to vector<2x64xf32>
    %116 = vector.extract_strided_slice %107 {offsets = [0, 128], sizes = [2, 64], strides = [1, 1]} : vector<2x256xf32> to vector<2x64xf32>
    %117 = math.tanh %116 : vector<2x64xf32>
    %118 = arith.mulf %114, %96 : vector<2x64xf32>
    %119 = arith.mulf %113, %117 : vector<2x64xf32>
    %120 = arith.addf %118, %119 : vector<2x64xf32>
    %121 = math.tanh %120 : vector<2x64xf32>
    %122 = arith.mulf %115, %121 : vector<2x64xf32>
    %123 = vector.extract_strided_slice %122 {offsets = [0, 0], sizes = [2, 32], strides = [1, 1]} : vector<2x64xf32> to vector<2x32xf32>
    %124 = vector.extract_strided_slice %122 {offsets = [0, 32], sizes = [2, 32], strides = [1, 1]} : vector<2x64xf32> to vector<2x32xf32>
    %125 = vector.extract_strided_slice %30 {offsets = [3, 0, 0], sizes = [1, 2, 256], strides = [1, 1, 1]} : vector<8x2x256xf32> to vector<1x2x256xf32>
    %126 = vector.shape_cast %125 : vector<1x2x256xf32> to vector<2x256xf32>
    %127 = vector.extract_strided_slice %30 {offsets = [4, 0, 0], sizes = [1, 2, 256], strides = [1, 1, 1]} : vector<8x2x256xf32> to vector<1x2x256xf32>
    %128 = vector.shape_cast %127 : vector<1x2x256xf32> to vector<2x256xf32>
    %129 = arith.select %50, %126, %128 : vector<2x256xi1>, vector<2x256xf32>
    %cst_27 = arith.constant dense<0.000000e+00> : vector<2x256xf32>
    %130 = tpu.matmul %122, %31, %cst_27 {dimension_numbers = #tpu.dot_dimension_numbers<[1], [0], [0], [1], [0, 0, 1, 1], [], []>} : vector<2x64xf32>, vector<64x256xf32>, vector<2x256xf32> -> vector<2x256xf32>
    %131 = arith.addf %129, %130 : vector<2x256xf32>
    %132 = arith.negf %131 : vector<2x256xf32>
    %133 = math.exp %132 : vector<2x256xf32>
    %cst_28 = arith.constant 1.000000e+00 : f32
    %134 = vector.broadcast %cst_28 : f32 to vector<2x256xf32>
    %135 = arith.addf %134, %133 : vector<2x256xf32>
    %136 = arith.divf %134, %135 : vector<2x256xf32>
    %137 = vector.extract_strided_slice %136 {offsets = [0, 0], sizes = [2, 64], strides = [1, 1]} : vector<2x256xf32> to vector<2x64xf32>
    %138 = vector.extract_strided_slice %136 {offsets = [0, 64], sizes = [2, 64], strides = [1, 1]} : vector<2x256xf32> to vector<2x64xf32>
    %139 = vector.extract_strided_slice %136 {offsets = [0, 192], sizes = [2, 64], strides = [1, 1]} : vector<2x256xf32> to vector<2x64xf32>
    %140 = vector.extract_strided_slice %131 {offsets = [0, 128], sizes = [2, 64], strides = [1, 1]} : vector<2x256xf32> to vector<2x64xf32>
    %141 = math.tanh %140 : vector<2x64xf32>
    %142 = arith.mulf %138, %120 : vector<2x64xf32>
    %143 = arith.mulf %137, %141 : vector<2x64xf32>
    %144 = arith.addf %142, %143 : vector<2x64xf32>
    %145 = math.tanh %144 : vector<2x64xf32>
    %146 = arith.mulf %139, %145 : vector<2x64xf32>
    %147 = vector.extract_strided_slice %146 {offsets = [0, 0], sizes = [2, 32], strides = [1, 1]} : vector<2x64xf32> to vector<2x32xf32>
    %148 = vector.extract_strided_slice %146 {offsets = [0, 32], sizes = [2, 32], strides = [1, 1]} : vector<2x64xf32> to vector<2x32xf32>
    %149 = vector.extract_strided_slice %30 {offsets = [4, 0, 0], sizes = [1, 2, 256], strides = [1, 1, 1]} : vector<8x2x256xf32> to vector<1x2x256xf32>
    %150 = vector.shape_cast %149 : vector<1x2x256xf32> to vector<2x256xf32>
    %151 = vector.extract_strided_slice %30 {offsets = [3, 0, 0], sizes = [1, 2, 256], strides = [1, 1, 1]} : vector<8x2x256xf32> to vector<1x2x256xf32>
    %152 = vector.shape_cast %151 : vector<1x2x256xf32> to vector<2x256xf32>
    %153 = arith.select %50, %150, %152 : vector<2x256xi1>, vector<2x256xf32>
    %cst_29 = arith.constant dense<0.000000e+00> : vector<2x256xf32>
    %154 = tpu.matmul %146, %31, %cst_29 {dimension_numbers = #tpu.dot_dimension_numbers<[1], [0], [0], [1], [0, 0, 1, 1], [], []>} : vector<2x64xf32>, vector<64x256xf32>, vector<2x256xf32> -> vector<2x256xf32>
    %155 = arith.addf %153, %154 : vector<2x256xf32>
    %156 = arith.negf %155 : vector<2x256xf32>
    %157 = math.exp %156 : vector<2x256xf32>
    %cst_30 = arith.constant 1.000000e+00 : f32
    %158 = vector.broadcast %cst_30 : f32 to vector<2x256xf32>
    %159 = arith.addf %158, %157 : vector<2x256xf32>
    %160 = arith.divf %158, %159 : vector<2x256xf32>
    %161 = vector.extract_strided_slice %160 {offsets = [0, 0], sizes = [2, 64], strides = [1, 1]} : vector<2x256xf32> to vector<2x64xf32>
    %162 = vector.extract_strided_slice %160 {offsets = [0, 64], sizes = [2, 64], strides = [1, 1]} : vector<2x256xf32> to vector<2x64xf32>
    %163 = vector.extract_strided_slice %160 {offsets = [0, 192], sizes = [2, 64], strides = [1, 1]} : vector<2x256xf32> to vector<2x64xf32>
    %164 = vector.extract_strided_slice %155 {offsets = [0, 128], sizes = [2, 64], strides = [1, 1]} : vector<2x256xf32> to vector<2x64xf32>
    %165 = math.tanh %164 : vector<2x64xf32>
    %166 = arith.mulf %162, %144 : vector<2x64xf32>
    %167 = arith.mulf %161, %165 : vector<2x64xf32>
    %168 = arith.addf %166, %167 : vector<2x64xf32>
    %169 = math.tanh %168 : vector<2x64xf32>
    %170 = arith.mulf %163, %169 : vector<2x64xf32>
    %171 = vector.extract_strided_slice %170 {offsets = [0, 0], sizes = [2, 32], strides = [1, 1]} : vector<2x64xf32> to vector<2x32xf32>
    %172 = vector.extract_strided_slice %170 {offsets = [0, 32], sizes = [2, 32], strides = [1, 1]} : vector<2x64xf32> to vector<2x32xf32>
    %173 = vector.extract_strided_slice %30 {offsets = [5, 0, 0], sizes = [1, 2, 256], strides = [1, 1, 1]} : vector<8x2x256xf32> to vector<1x2x256xf32>
    %174 = vector.shape_cast %173 : vector<1x2x256xf32> to vector<2x256xf32>
    %175 = vector.extract_strided_slice %30 {offsets = [2, 0, 0], sizes = [1, 2, 256], strides = [1, 1, 1]} : vector<8x2x256xf32> to vector<1x2x256xf32>
    %176 = vector.shape_cast %175 : vector<1x2x256xf32> to vector<2x256xf32>
    %177 = arith.select %50, %174, %176 : vector<2x256xi1>, vector<2x256xf32>
    %cst_31 = arith.constant dense<0.000000e+00> : vector<2x256xf32>
    %178 = tpu.matmul %170, %31, %cst_31 {dimension_numbers = #tpu.dot_dimension_numbers<[1], [0], [0], [1], [0, 0, 1, 1], [], []>} : vector<2x64xf32>, vector<64x256xf32>, vector<2x256xf32> -> vector<2x256xf32>
    %179 = arith.addf %177, %178 : vector<2x256xf32>
    %180 = arith.negf %179 : vector<2x256xf32>
    %181 = math.exp %180 : vector<2x256xf32>
    %cst_32 = arith.constant 1.000000e+00 : f32
    %182 = vector.broadcast %cst_32 : f32 to vector<2x256xf32>
    %183 = arith.addf %182, %181 : vector<2x256xf32>
    %184 = arith.divf %182, %183 : vector<2x256xf32>
    %185 = vector.extract_strided_slice %184 {offsets = [0, 0], sizes = [2, 64], strides = [1, 1]} : vector<2x256xf32> to vector<2x64xf32>
    %186 = vector.extract_strided_slice %184 {offsets = [0, 64], sizes = [2, 64], strides = [1, 1]} : vector<2x256xf32> to vector<2x64xf32>
    %187 = vector.extract_strided_slice %184 {offsets = [0, 192], sizes = [2, 64], strides = [1, 1]} : vector<2x256xf32> to vector<2x64xf32>
    %188 = vector.extract_strided_slice %179 {offsets = [0, 128], sizes = [2, 64], strides = [1, 1]} : vector<2x256xf32> to vector<2x64xf32>
    %189 = math.tanh %188 : vector<2x64xf32>
    %190 = arith.mulf %186, %168 : vector<2x64xf32>
    %191 = arith.mulf %185, %189 : vector<2x64xf32>
    %192 = arith.addf %190, %191 : vector<2x64xf32>
    %193 = math.tanh %192 : vector<2x64xf32>
    %194 = arith.mulf %187, %193 : vector<2x64xf32>
    %195 = vector.extract_strided_slice %194 {offsets = [0, 0], sizes = [2, 32], strides = [1, 1]} : vector<2x64xf32> to vector<2x32xf32>
    %196 = vector.extract_strided_slice %194 {offsets = [0, 32], sizes = [2, 32], strides = [1, 1]} : vector<2x64xf32> to vector<2x32xf32>
    %197 = vector.extract_strided_slice %30 {offsets = [6, 0, 0], sizes = [1, 2, 256], strides = [1, 1, 1]} : vector<8x2x256xf32> to vector<1x2x256xf32>
    %198 = vector.shape_cast %197 : vector<1x2x256xf32> to vector<2x256xf32>
    %199 = vector.extract_strided_slice %30 {offsets = [1, 0, 0], sizes = [1, 2, 256], strides = [1, 1, 1]} : vector<8x2x256xf32> to vector<1x2x256xf32>
    %200 = vector.shape_cast %199 : vector<1x2x256xf32> to vector<2x256xf32>
    %201 = arith.select %50, %198, %200 : vector<2x256xi1>, vector<2x256xf32>
    %cst_33 = arith.constant dense<0.000000e+00> : vector<2x256xf32>
    %202 = tpu.matmul %194, %31, %cst_33 {dimension_numbers = #tpu.dot_dimension_numbers<[1], [0], [0], [1], [0, 0, 1, 1], [], []>} : vector<2x64xf32>, vector<64x256xf32>, vector<2x256xf32> -> vector<2x256xf32>
    %203 = arith.addf %201, %202 : vector<2x256xf32>
    %204 = arith.negf %203 : vector<2x256xf32>
    %205 = math.exp %204 : vector<2x256xf32>
    %cst_34 = arith.constant 1.000000e+00 : f32
    %206 = vector.broadcast %cst_34 : f32 to vector<2x256xf32>
    %207 = arith.addf %206, %205 : vector<2x256xf32>
    %208 = arith.divf %206, %207 : vector<2x256xf32>
    %209 = vector.extract_strided_slice %208 {offsets = [0, 0], sizes = [2, 64], strides = [1, 1]} : vector<2x256xf32> to vector<2x64xf32>
    %210 = vector.extract_strided_slice %208 {offsets = [0, 64], sizes = [2, 64], strides = [1, 1]} : vector<2x256xf32> to vector<2x64xf32>
    %211 = vector.extract_strided_slice %208 {offsets = [0, 192], sizes = [2, 64], strides = [1, 1]} : vector<2x256xf32> to vector<2x64xf32>
    %212 = vector.extract_strided_slice %203 {offsets = [0, 128], sizes = [2, 64], strides = [1, 1]} : vector<2x256xf32> to vector<2x64xf32>
    %213 = math.tanh %212 : vector<2x64xf32>
    %214 = arith.mulf %210, %192 : vector<2x64xf32>
    %215 = arith.mulf %209, %213 : vector<2x64xf32>
    %216 = arith.addf %214, %215 : vector<2x64xf32>
    %217 = math.tanh %216 : vector<2x64xf32>
    %218 = arith.mulf %211, %217 : vector<2x64xf32>
    %219 = vector.extract_strided_slice %218 {offsets = [0, 0], sizes = [2, 32], strides = [1, 1]} : vector<2x64xf32> to vector<2x32xf32>
    %220 = vector.extract_strided_slice %218 {offsets = [0, 32], sizes = [2, 32], strides = [1, 1]} : vector<2x64xf32> to vector<2x32xf32>
    %221 = vector.extract_strided_slice %30 {offsets = [7, 0, 0], sizes = [1, 2, 256], strides = [1, 1, 1]} : vector<8x2x256xf32> to vector<1x2x256xf32>
    %222 = vector.shape_cast %221 : vector<1x2x256xf32> to vector<2x256xf32>
    %223 = vector.extract_strided_slice %30 {offsets = [0, 0, 0], sizes = [1, 2, 256], strides = [1, 1, 1]} : vector<8x2x256xf32> to vector<1x2x256xf32>
    %224 = vector.shape_cast %223 : vector<1x2x256xf32> to vector<2x256xf32>
    %225 = arith.select %50, %222, %224 : vector<2x256xi1>, vector<2x256xf32>
    %cst_35 = arith.constant dense<0.000000e+00> : vector<2x256xf32>
    %226 = tpu.matmul %218, %31, %cst_35 {dimension_numbers = #tpu.dot_dimension_numbers<[1], [0], [0], [1], [0, 0, 1, 1], [], []>} : vector<2x64xf32>, vector<64x256xf32>, vector<2x256xf32> -> vector<2x256xf32>
    %227 = arith.addf %225, %226 : vector<2x256xf32>
    %228 = arith.negf %227 : vector<2x256xf32>
    %229 = math.exp %228 : vector<2x256xf32>
    %cst_36 = arith.constant 1.000000e+00 : f32
    %230 = vector.broadcast %cst_36 : f32 to vector<2x256xf32>
    %231 = arith.addf %230, %229 : vector<2x256xf32>
    %232 = arith.divf %230, %231 : vector<2x256xf32>
    %233 = vector.extract_strided_slice %232 {offsets = [0, 0], sizes = [2, 64], strides = [1, 1]} : vector<2x256xf32> to vector<2x64xf32>
    %234 = vector.extract_strided_slice %232 {offsets = [0, 64], sizes = [2, 64], strides = [1, 1]} : vector<2x256xf32> to vector<2x64xf32>
    %235 = vector.extract_strided_slice %232 {offsets = [0, 192], sizes = [2, 64], strides = [1, 1]} : vector<2x256xf32> to vector<2x64xf32>
    %236 = vector.extract_strided_slice %227 {offsets = [0, 128], sizes = [2, 64], strides = [1, 1]} : vector<2x256xf32> to vector<2x64xf32>
    %237 = math.tanh %236 : vector<2x64xf32>
    %238 = arith.mulf %234, %216 : vector<2x64xf32>
    %239 = arith.mulf %233, %237 : vector<2x64xf32>
    %240 = arith.addf %238, %239 : vector<2x64xf32>
    %241 = math.tanh %240 : vector<2x64xf32>
    %242 = arith.mulf %235, %241 : vector<2x64xf32>
    %243 = vector.extract_strided_slice %242 {offsets = [0, 0], sizes = [2, 32], strides = [1, 1]} : vector<2x64xf32> to vector<2x32xf32>
    %244 = vector.extract_strided_slice %242 {offsets = [0, 32], sizes = [2, 32], strides = [1, 1]} : vector<2x64xf32> to vector<2x32xf32>
    %245 = tpu.concatenate %75, %244 in 1 : vector<2x32xf32>, vector<2x32xf32> -> vector<2x64xf32>
    %246 = tpu.concatenate %99, %220 in 1 : vector<2x32xf32>, vector<2x32xf32> -> vector<2x64xf32>
    %247 = tpu.concatenate %123, %196 in 1 : vector<2x32xf32>, vector<2x32xf32> -> vector<2x64xf32>
    %248 = tpu.concatenate %147, %172 in 1 : vector<2x32xf32>, vector<2x32xf32> -> vector<2x64xf32>
    %249 = tpu.concatenate %171, %148 in 1 : vector<2x32xf32>, vector<2x32xf32> -> vector<2x64xf32>
    %250 = tpu.concatenate %195, %124 in 1 : vector<2x32xf32>, vector<2x32xf32> -> vector<2x64xf32>
    %251 = tpu.concatenate %219, %100 in 1 : vector<2x32xf32>, vector<2x32xf32> -> vector<2x64xf32>
    %252 = tpu.concatenate %243, %76 in 1 : vector<2x32xf32>, vector<2x32xf32> -> vector<2x64xf32>
    %253 = tpu.concatenate %245, %246, %247, %248, %249, %250, %251, %252 in 0 : vector<2x64xf32>, vector<2x64xf32>, vector<2x64xf32>, vector<2x64xf32>, vector<2x64xf32>, vector<2x64xf32>, vector<2x64xf32>, vector<2x64xf32> -> vector<16x64xf32>
    %c0_37 = arith.constant 0 : index
    %c0_38 = arith.constant 0 : index
    %254 = vector.load %arg3[%c0_37, %c0_38] : memref<16x64xf32, #tpu.memory_space<vmem>>, vector<16x64xf32>
    %255 = arith.addf %253, %254 : vector<16x64xf32>
    %c0_39 = arith.constant 0 : index
    %c0_40 = arith.constant 0 : index
    %c0_41 = arith.constant 0 : index
    %256 = vector.load %arg2[%c0_39, %c0_40, %c0_41] : memref<2x8x10xf32, #tpu.memory_space<vmem>>, vector<2x8x10xf32>
    %257 = vector.shape_cast %256 : vector<2x8x10xf32> to vector<16x10xf32>
    %c0_42 = arith.constant 0 : index
    %c0_43 = arith.constant 0 : index
    %258 = vector.load %arg7[%c0_42, %c0_43] : memref<10x16xf32, #tpu.memory_space<vmem>>, vector<10x16xf32>
    %cst_44 = arith.constant dense<0.000000e+00> : vector<16x16xf32>
    %259 = tpu.matmul %257, %258, %cst_44 {dimension_numbers = #tpu.dot_dimension_numbers<[1], [0], [0], [1], [0, 0, 1, 1], [], []>} : vector<16x10xf32>, vector<10x16xf32>, vector<16x16xf32> -> vector<16x16xf32>
    %c1 = arith.constant 1 : index
    %c0_45 = arith.constant 0 : index
    %260 = vector.load %arg21[%c1, %c0_45] : memref<19x256xf32, #tpu.memory_space<vmem>>, vector<1x16xf32>
    %261 = vector.broadcast %260 : vector<1x16xf32> to vector<16x16xf32>
    %262 = arith.addf %259, %261 : vector<16x16xf32>
    %cst_46 = arith.constant 0.000000e+00 : f32
    %263 = vector.broadcast %cst_46 : f32 to vector<16x16xf32>
    %264 = arith.maximumf %262, %263 : vector<16x16xf32>
    %c0_47 = arith.constant 0 : index
    %c0_48 = arith.constant 0 : index
    %265 = vector.load %arg8[%c0_47, %c0_48] : memref<16x16xf32, #tpu.memory_space<vmem>>, vector<16x16xf32>
    %cst_49 = arith.constant dense<0.000000e+00> : vector<16x16xf32>
    %266 = tpu.matmul %264, %265, %cst_49 {dimension_numbers = #tpu.dot_dimension_numbers<[1], [0], [0], [1], [0, 0, 1, 1], [], []>} : vector<16x16xf32>, vector<16x16xf32>, vector<16x16xf32> -> vector<16x16xf32>
    %c2 = arith.constant 2 : index
    %c0_50 = arith.constant 0 : index
    %267 = vector.load %arg21[%c2, %c0_50] : memref<19x256xf32, #tpu.memory_space<vmem>>, vector<1x16xf32>
    %268 = vector.broadcast %267 : vector<1x16xf32> to vector<16x16xf32>
    %269 = arith.addf %266, %268 : vector<16x16xf32>
    %270 = vector.shape_cast %269 : vector<16x16xf32> to vector<2x8x16xf32>
    %cst_51 = arith.constant dense<0.000000e+00> : vector<2x16xf32>
    %271 = vector.multi_reduction <add>, %270, %cst_51 [1] : vector<2x8x16xf32> to vector<2x16xf32>
    %cst_52 = arith.constant 8.000000e+00 : f32
    %272 = vector.broadcast %cst_52 : f32 to vector<2x16xf32>
    %273 = arith.divf %271, %272 : vector<2x16xf32>
    %274 = tpu.concatenate %242, %273 in 1 : vector<2x64xf32>, vector<2x16xf32> -> vector<2x80xf32>
    %c0_53 = arith.constant 0 : index
    %c0_54 = arith.constant 0 : index
    %275 = vector.load %arg9[%c0_53, %c0_54] : memref<80x64xf32, #tpu.memory_space<vmem>>, vector<80x64xf32>
    %cst_55 = arith.constant dense<0.000000e+00> : vector<2x64xf32>
    %276 = tpu.matmul %274, %275, %cst_55 {dimension_numbers = #tpu.dot_dimension_numbers<[1], [0], [0], [1], [0, 0, 1, 1], [], []>} : vector<2x80xf32>, vector<80x64xf32>, vector<2x64xf32> -> vector<2x64xf32>
    %c3 = arith.constant 3 : index
    %c0_56 = arith.constant 0 : index
    %277 = vector.load %arg21[%c3, %c0_56] : memref<19x256xf32, #tpu.memory_space<vmem>>, vector<1x64xf32>
    %278 = vector.broadcast %277 : vector<1x64xf32> to vector<2x64xf32>
    %279 = arith.addf %276, %278 : vector<2x64xf32>
    %cst_57 = arith.constant 0.000000e+00 : f32
    %280 = vector.broadcast %cst_57 : f32 to vector<2x64xf32>
    %281 = arith.maximumf %279, %280 : vector<2x64xf32>
    %cst_58 = arith.constant dense<0.000000e+00> : vector<2xf32>
    %282 = vector.multi_reduction <add>, %281, %cst_58 [1] : vector<2x64xf32> to vector<2xf32>
    %283 = vector.shape_cast %282 : vector<2xf32> to vector<2x1xf32>
    %cst_59 = arith.constant 6.400000e+01 : f32
    %284 = vector.broadcast %cst_59 : f32 to vector<2x1xf32>
    %285 = arith.divf %283, %284 : vector<2x1xf32>
    %286 = vector.broadcast %285 : vector<2x1xf32> to vector<2x64xf32>
    %287 = arith.subf %281, %286 : vector<2x64xf32>
    %288 = arith.mulf %287, %287 : vector<2x64xf32>
    %cst_60 = arith.constant dense<0.000000e+00> : vector<2xf32>
    %289 = vector.multi_reduction <add>, %288, %cst_60 [1] : vector<2x64xf32> to vector<2xf32>
    %290 = vector.shape_cast %289 : vector<2xf32> to vector<2x1xf32>
    %cst_61 = arith.constant 6.400000e+01 : f32
    %291 = vector.broadcast %cst_61 : f32 to vector<2x1xf32>
    %292 = arith.divf %290, %291 : vector<2x1xf32>
    %293 = vector.broadcast %285 : vector<2x1xf32> to vector<2x64xf32>
    %294 = arith.subf %281, %293 : vector<2x64xf32>
    %cst_62 = arith.constant 9.99999974E-6 : f32
    %295 = vector.broadcast %cst_62 : f32 to vector<2x1xf32>
    %296 = arith.addf %292, %295 : vector<2x1xf32>
    %297 = math.rsqrt %296 : vector<2x1xf32>
    %298 = vector.broadcast %297 : vector<2x1xf32> to vector<2x64xf32>
    %299 = arith.mulf %294, %298 : vector<2x64xf32>
    %c4 = arith.constant 4 : index
    %c0_63 = arith.constant 0 : index
    %300 = vector.load %arg21[%c4, %c0_63] : memref<19x256xf32, #tpu.memory_space<vmem>>, vector<1x64xf32>
    %301 = vector.broadcast %300 : vector<1x64xf32> to vector<2x64xf32>
    %302 = arith.mulf %299, %301 : vector<2x64xf32>
    %c5 = arith.constant 5 : index
    %c0_64 = arith.constant 0 : index
    %303 = vector.load %arg21[%c5, %c0_64] : memref<19x256xf32, #tpu.memory_space<vmem>>, vector<1x64xf32>
    %304 = vector.broadcast %303 : vector<1x64xf32> to vector<2x64xf32>
    %305 = arith.addf %302, %304 : vector<2x64xf32>
    %c0_65 = arith.constant 0 : index
    %c0_66 = arith.constant 0 : index
    %306 = vector.load %arg10[%c0_65, %c0_66] : memref<64x64xf32, #tpu.memory_space<vmem>>, vector<64x64xf32>
    %cst_67 = arith.constant dense<0.000000e+00> : vector<2x64xf32>
    %307 = tpu.matmul %305, %306, %cst_67 {dimension_numbers = #tpu.dot_dimension_numbers<[1], [0], [0], [1], [0, 0, 1, 1], [], []>} : vector<2x64xf32>, vector<64x64xf32>, vector<2x64xf32> -> vector<2x64xf32>
    %c6 = arith.constant 6 : index
    %c0_68 = arith.constant 0 : index
    %308 = vector.load %arg21[%c6, %c0_68] : memref<19x256xf32, #tpu.memory_space<vmem>>, vector<1x64xf32>
    %309 = vector.broadcast %308 : vector<1x64xf32> to vector<2x64xf32>
    %310 = arith.addf %307, %309 : vector<2x64xf32>
    %c0_69 = arith.constant 0 : index
    %c0_70 = arith.constant 0 : index
    %311 = vector.load %arg11[%c0_69, %c0_70] : memref<64x128xf32, #tpu.memory_space<vmem>>, vector<64x128xf32>
    %cst_71 = arith.constant dense<0.000000e+00> : vector<16x128xf32>
    %312 = tpu.matmul %255, %311, %cst_71 {dimension_numbers = #tpu.dot_dimension_numbers<[1], [0], [0], [1], [0, 0, 1, 1], [], []>} : vector<16x64xf32>, vector<64x128xf32>, vector<16x128xf32> -> vector<16x128xf32>
    %c7 = arith.constant 7 : index
    %c0_72 = arith.constant 0 : index
    %313 = vector.load %arg21[%c7, %c0_72] : memref<19x256xf32, #tpu.memory_space<vmem>>, vector<1x128xf32>
    %314 = vector.broadcast %313 : vector<1x128xf32> to vector<16x128xf32>
    %315 = arith.addf %312, %314 : vector<16x128xf32>
    %316 = vector.extract_strided_slice %315 {offsets = [0, 0], sizes = [16, 64], strides = [1, 1]} : vector<16x128xf32> to vector<16x64xf32>
    %317 = vector.shape_cast %316 : vector<16x64xf32> to vector<8x2x64xf32>
    %318 = vector.extract_strided_slice %315 {offsets = [0, 64], sizes = [16, 64], strides = [1, 1]} : vector<16x128xf32> to vector<16x64xf32>
    %319 = vector.shape_cast %310 : vector<2x64xf32> to vector<1x2x64xf32>
    %320 = vector.broadcast %319 : vector<1x2x64xf32> to vector<8x2x64xf32>
    %321 = arith.mulf %317, %320 : vector<8x2x64xf32>
    %322 = vector.shape_cast %321 : vector<8x2x64xf32> to vector<16x64xf32>
    %c0_73 = arith.constant 0 : index
    %c0_74 = arith.constant 0 : index
    %323 = vector.load %arg19[%c0_73, %c0_74] : memref<64x8xf32, #tpu.memory_space<vmem>>, vector<64x8xf32>
    %cst_75 = arith.constant dense<0.000000e+00> : vector<16x8xf32>
    %324 = tpu.matmul %322, %323, %cst_75 {dimension_numbers = #tpu.dot_dimension_numbers<[1], [0], [0], [1], [0, 0, 1, 1], [], []>} : vector<16x64xf32>, vector<64x8xf32>, vector<16x8xf32> -> vector<16x8xf32>
    %325 = vector.shape_cast %324 : vector<16x8xf32> to vector<8x2x8xf32>
    %cst_76 = arith.constant dense<0xFF800000> : vector<2x8xf32>
    %326 = vector.multi_reduction <maximumf>, %325, %cst_76 [0] : vector<8x2x8xf32> to vector<2x8xf32>
    %327 = vector.shape_cast %326 : vector<2x8xf32> to vector<1x2x8xf32>
    %328 = vector.broadcast %327 : vector<1x2x8xf32> to vector<8x2x8xf32>
    %329 = arith.subf %325, %328 : vector<8x2x8xf32>
    %330 = math.exp %329 : vector<8x2x8xf32>
    %cst_77 = arith.constant dense<0.000000e+00> : vector<2x8xf32>
    %331 = vector.multi_reduction <add>, %330, %cst_77 [0] : vector<8x2x8xf32> to vector<2x8xf32>
    %332 = vector.shape_cast %331 : vector<2x8xf32> to vector<1x2x8xf32>
    %333 = vector.broadcast %332 : vector<1x2x8xf32> to vector<8x2x8xf32>
    %334 = arith.divf %330, %333 : vector<8x2x8xf32>
    %335 = vector.shape_cast %334 : vector<8x2x8xf32> to vector<16x8xf32>
    %c0_78 = arith.constant 0 : index
    %c0_79 = arith.constant 0 : index
    %336 = vector.load %arg20[%c0_78, %c0_79] : memref<8x64xf32, #tpu.memory_space<vmem>>, vector<8x64xf32>
    %cst_80 = arith.constant dense<0.000000e+00> : vector<16x64xf32>
    %337 = tpu.matmul %335, %336, %cst_80 {dimension_numbers = #tpu.dot_dimension_numbers<[1], [0], [0], [1], [0, 0, 1, 1], [], []>} : vector<16x8xf32>, vector<8x64xf32>, vector<16x64xf32> -> vector<16x64xf32>
    %338 = arith.mulf %337, %318 : vector<16x64xf32>
    %339 = vector.shape_cast %338 : vector<16x64xf32> to vector<8x2x64xf32>
    %cst_81 = arith.constant dense<0.000000e+00> : vector<2x64xf32>
    %340 = vector.multi_reduction <add>, %339, %cst_81 [0] : vector<8x2x64xf32> to vector<2x64xf32>
    %c0_82 = arith.constant 0 : index
    %c0_83 = arith.constant 0 : index
    %341 = vector.load %arg12[%c0_82, %c0_83] : memref<64x64xf32, #tpu.memory_space<vmem>>, vector<64x64xf32>
    %cst_84 = arith.constant dense<0.000000e+00> : vector<2x64xf32>
    %342 = tpu.matmul %340, %341, %cst_84 {dimension_numbers = #tpu.dot_dimension_numbers<[1], [0], [0], [1], [0, 0, 1, 1], [], []>} : vector<2x64xf32>, vector<64x64xf32>, vector<2x64xf32> -> vector<2x64xf32>
    %c8 = arith.constant 8 : index
    %c0_85 = arith.constant 0 : index
    %343 = vector.load %arg21[%c8, %c0_85] : memref<19x256xf32, #tpu.memory_space<vmem>>, vector<1x64xf32>
    %344 = vector.broadcast %343 : vector<1x64xf32> to vector<2x64xf32>
    %345 = arith.addf %342, %344 : vector<2x64xf32>
    %c0_86 = arith.constant 0 : index
    %c0_87 = arith.constant 0 : index
    %346 = vector.load %arg13[%c0_86, %c0_87] : memref<64x32xf32, #tpu.memory_space<vmem>>, vector<64x32xf32>
    %cst_88 = arith.constant dense<0.000000e+00> : vector<2x32xf32>
    %347 = tpu.matmul %345, %346, %cst_88 {dimension_numbers = #tpu.dot_dimension_numbers<[1], [0], [0], [1], [0, 0, 1, 1], [], []>} : vector<2x64xf32>, vector<64x32xf32>, vector<2x32xf32> -> vector<2x32xf32>
    %c9 = arith.constant 9 : index
    %c0_89 = arith.constant 0 : index
    %348 = vector.load %arg21[%c9, %c0_89] : memref<19x256xf32, #tpu.memory_space<vmem>>, vector<1x32xf32>
    %349 = vector.broadcast %348 : vector<1x32xf32> to vector<2x32xf32>
    %350 = arith.addf %347, %349 : vector<2x32xf32>
    %cst_90 = arith.constant 0.000000e+00 : f32
    %351 = vector.broadcast %cst_90 : f32 to vector<2x32xf32>
    %352 = arith.maximumf %350, %351 : vector<2x32xf32>
    %c10 = arith.constant 10 : index
    %c0_91 = arith.constant 0 : index
    %353 = vector.load %arg21[%c10, %c0_91] : memref<19x256xf32, #tpu.memory_space<vmem>>, vector<1x32xf32>
    %354 = vector.broadcast %353 : vector<1x32xf32> to vector<2x32xf32>
    %355 = arith.mulf %352, %354 : vector<2x32xf32>
    %cst_92 = arith.constant dense<0.000000e+00> : vector<2xf32>
    %356 = vector.multi_reduction <add>, %355, %cst_92 [1] : vector<2x32xf32> to vector<2xf32>
    %357 = vector.shape_cast %356 : vector<2xf32> to vector<2x1xf32>
    %c2_93 = arith.constant 2 : index
    %358 = memref.load %arg0[%c2_93] : memref<3xf32, #tpu.memory_space<smem>>
    %359 = vector.broadcast %358 : f32 to vector<2x1xf32>
    %360 = arith.addf %357, %359 : vector<2x1xf32>
    %c0_94 = arith.constant 0 : index
    %c0_95 = arith.constant 0 : index
    %361 = vector.load %arg23[%c0_94, %c0_95] : memref<2x1xf32, #tpu.memory_space<vmem>>, vector<2x1xf32>
    tpu.vector_store %arg23[%c0_94, %c0_95], %360 {strides = array<i32>} : memref<2x1xf32, #tpu.memory_space<vmem>>, vector<2x1xf32>,
    %362 = arith.negf %360 : vector<2x1xf32>
    %363 = math.exp %362 : vector<2x1xf32>
    %cst_96 = arith.constant 1.000000e+00 : f32
    %364 = vector.broadcast %cst_96 : f32 to vector<2x1xf32>
    %365 = arith.addf %364, %363 : vector<2x1xf32>
    %366 = arith.divf %364, %365 : vector<2x1xf32>
    %c7_97 = arith.constant 7 : index
    %c0_98 = arith.constant 0 : index
    %c0_99 = arith.constant 0 : index
    %367 = vector.load %arg1[%c7_97, %c0_98, %c0_99] : memref<8x2x30xf32, #tpu.memory_space<vmem>>, vector<1x2x30xf32>
    %368 = vector.shape_cast %367 : vector<1x2x30xf32> to vector<2x30xf32>
    %c0_100 = arith.constant 0 : index
    %c0_101 = arith.constant 0 : index
    %369 = vector.load %arg17[%c0_100, %c0_101] : memref<30x32xf32, #tpu.memory_space<vmem>>, vector<30x32xf32>
    %cst_102 = arith.constant dense<0.000000e+00> : vector<2x32xf32>
    %370 = tpu.matmul %368, %369, %cst_102 {dimension_numbers = #tpu.dot_dimension_numbers<[1], [0], [0], [1], [0, 0, 1, 1], [], []>} : vector<2x30xf32>, vector<30x32xf32>, vector<2x32xf32> -> vector<2x32xf32>
    %c14 = arith.constant 14 : index
    %c0_103 = arith.constant 0 : index
    %371 = vector.load %arg21[%c14, %c0_103] : memref<19x256xf32, #tpu.memory_space<vmem>>, vector<1x32xf32>
    %372 = vector.broadcast %371 : vector<1x32xf32> to vector<2x32xf32>
    %373 = arith.addf %370, %372 : vector<2x32xf32>
    %cst_104 = arith.constant 0.000000e+00 : f32
    %374 = vector.broadcast %cst_104 : f32 to vector<2x32xf32>
    %375 = arith.maximumf %373, %374 : vector<2x32xf32>
    %c0_105 = arith.constant 0 : index
    %c0_106 = arith.constant 0 : index
    %376 = vector.load %arg18[%c0_105, %c0_106] : memref<32x30xf32, #tpu.memory_space<vmem>>, vector<32x30xf32>
    %cst_107 = arith.constant dense<0.000000e+00> : vector<2x30xf32>
    %377 = tpu.matmul %375, %376, %cst_107 {dimension_numbers = #tpu.dot_dimension_numbers<[1], [0], [0], [1], [0, 0, 1, 1], [], []>} : vector<2x32xf32>, vector<32x30xf32>, vector<2x30xf32> -> vector<2x30xf32>
    %c15 = arith.constant 15 : index
    %c0_108 = arith.constant 0 : index
    %378 = vector.load %arg21[%c15, %c0_108] : memref<19x256xf32, #tpu.memory_space<vmem>>, vector<1x30xf32>
    %379 = vector.broadcast %378 : vector<1x30xf32> to vector<2x30xf32>
    %380 = arith.addf %377, %379 : vector<2x30xf32>
    %381 = math.tanh %380 : vector<2x30xf32>
    %382 = vector.broadcast %366 : vector<2x1xf32> to vector<2x30xf32>
    %383 = arith.mulf %381, %382 : vector<2x30xf32>
    %c0_109 = arith.constant 0 : index
    %c0_110 = arith.constant 0 : index
    %384 = vector.load %arg14[%c0_109, %c0_110] : memref<64x96xf32, #tpu.memory_space<vmem>>, vector<64x96xf32>
    %cst_111 = arith.constant dense<0.000000e+00> : vector<2x96xf32>
    %385 = tpu.matmul %345, %384, %cst_111 {dimension_numbers = #tpu.dot_dimension_numbers<[1], [0], [0], [1], [0, 0, 1, 1], [], []>} : vector<2x64xf32>, vector<64x96xf32>, vector<2x96xf32> -> vector<2x96xf32>
    %c11 = arith.constant 11 : index
    %c0_112 = arith.constant 0 : index
    %386 = vector.load %arg21[%c11, %c0_112] : memref<19x256xf32, #tpu.memory_space<vmem>>, vector<1x96xf32>
    %387 = vector.broadcast %386 : vector<1x96xf32> to vector<2x96xf32>
    %388 = arith.addf %385, %387 : vector<2x96xf32>
    %cst_113 = arith.constant 0.000000e+00 : f32
    %389 = vector.broadcast %cst_113 : f32 to vector<2x96xf32>
    %390 = arith.maximumf %388, %389 : vector<2x96xf32>
    %c0_114 = arith.constant 0 : index
    %c0_115 = arith.constant 0 : index
    %391 = vector.load %arg15[%c0_114, %c0_115] : memref<96x48xf32, #tpu.memory_space<vmem>>, vector<96x48xf32>
    %cst_116 = arith.constant dense<0.000000e+00> : vector<2x48xf32>
    %392 = tpu.matmul %390, %391, %cst_116 {dimension_numbers = #tpu.dot_dimension_numbers<[1], [0], [0], [1], [0, 0, 1, 1], [], []>} : vector<2x96xf32>, vector<96x48xf32>, vector<2x48xf32> -> vector<2x48xf32>
    %c12 = arith.constant 12 : index
    %c0_117 = arith.constant 0 : index
    %393 = vector.load %arg21[%c12, %c0_117] : memref<19x256xf32, #tpu.memory_space<vmem>>, vector<1x48xf32>
    %394 = vector.broadcast %393 : vector<1x48xf32> to vector<2x48xf32>
    %395 = arith.addf %392, %394 : vector<2x48xf32>
    %cst_118 = arith.constant 0.000000e+00 : f32
    %396 = vector.broadcast %cst_118 : f32 to vector<2x48xf32>
    %397 = arith.maximumf %395, %396 : vector<2x48xf32>
    %c0_119 = arith.constant 0 : index
    %c0_120 = arith.constant 0 : index
    %398 = vector.load %arg16[%c0_119, %c0_120] : memref<48x90xf32, #tpu.memory_space<vmem>>, vector<48x90xf32>
    %cst_121 = arith.constant dense<0.000000e+00> : vector<2x90xf32>
    %399 = tpu.matmul %397, %398, %cst_121 {dimension_numbers = #tpu.dot_dimension_numbers<[1], [0], [0], [1], [0, 0, 1, 1], [], []>} : vector<2x48xf32>, vector<48x90xf32>, vector<2x90xf32> -> vector<2x90xf32>
    %c13 = arith.constant 13 : index
    %c0_122 = arith.constant 0 : index
    %400 = vector.load %arg21[%c13, %c0_122] : memref<19x256xf32, #tpu.memory_space<vmem>>, vector<1x90xf32>
    %401 = vector.broadcast %400 : vector<1x90xf32> to vector<2x90xf32>
    %402 = arith.addf %399, %401 : vector<2x90xf32>
    %c0_123 = arith.constant 0 : index
    %403 = memref.load %arg0[%c0_123] : memref<3xf32, #tpu.memory_space<smem>>
    %404 = vector.broadcast %403 : f32 to vector<2x30xf32>
    %405 = arith.mulf %404, %368 : vector<2x30xf32>
    %c1_124 = arith.constant 1 : index
    %406 = memref.load %arg0[%c1_124] : memref<3xf32, #tpu.memory_space<smem>>
    %407 = vector.broadcast %406 : f32 to vector<2x30xf32>
    %408 = arith.mulf %407, %383 : vector<2x30xf32>
    %409 = arith.addf %405, %408 : vector<2x30xf32>
    %410 = tpu.concatenate %409, %409, %409 in 1 : vector<2x30xf32>, vector<2x30xf32>, vector<2x30xf32> -> vector<2x90xf32>
    %411 = arith.addf %402, %410 : vector<2x90xf32>
    %c0_125 = arith.constant 0 : index
    %c0_126 = arith.constant 0 : index
    %412 = vector.load %arg22[%c0_125, %c0_126] : memref<2x90xf32, #tpu.memory_space<vmem>>, vector<2x90xf32>
    tpu.vector_store %arg22[%c0_125, %c0_126], %411 {strides = array<i32>} : memref<2x90xf32, #tpu.memory_space<vmem>>, vector<2x90xf32>,
    return
  }
}

</mosaic_0001>

<llo_original>
// kernel: forward.1
$region0: #{forward.1}
  #allocation0 [shape = 'u32[]', space=smem, size = 0x4, offset = 0x4, fixed_abs, tag = 'smem constant byte address 0x4 - core index']
  #allocation1 [shape = 'u32[144,128]{1,0:T(1,128)}', space=vmem, size = 0x12000, scoped, tag = 'internal scratch']
  %s0 = inlined_call_operand.vmem [shape: f32[3], index: 0, kind: input, shape index: {}]
  %s1 = inlined_call_operand.vmem [shape: f32[8,2,30], index: 1, kind: input, shape index: {}]
  %s2 = inlined_call_operand.vmem [shape: f32[2,8,10], index: 2, kind: input, shape index: {}]
  %s3 = inlined_call_operand.vmem [shape: f32[16,64], index: 3, kind: input, shape index: {}]
  %s4 = inlined_call_operand.vmem [shape: f32[210,16], index: 4, kind: input, shape index: {}]
  %s5 = inlined_call_operand.vmem [shape: f32[16,256], index: 5, kind: input, shape index: {}]
  %s6 = inlined_call_operand.vmem [shape: f32[64,256], index: 6, kind: input, shape index: {}]
  %s7 = inlined_call_operand.vmem [shape: f32[10,16], index: 7, kind: input, shape index: {}]
  %s8 = inlined_call_operand.vmem [shape: f32[16,16], index: 8, kind: input, shape index: {}]
  %s9 = inlined_call_operand.vmem [shape: f32[80,64], index: 9, kind: input, shape index: {}]
  %s10 = inlined_call_operand.vmem [shape: f32[64,64], index: 10, kind: input, shape index: {}]
  %s11 = inlined_call_operand.vmem [shape: f32[64,128], index: 11, kind: input, shape index: {}]
  %s12 = inlined_call_operand.vmem [shape: f32[64,64], index: 12, kind: input, shape index: {}]
  %s13 = inlined_call_operand.vmem [shape: f32[64,32], index: 13, kind: input, shape index: {}]
  %s14 = inlined_call_operand.vmem [shape: f32[64,96], index: 14, kind: input, shape index: {}]
  %s15 = inlined_call_operand.vmem [shape: f32[96,48], index: 15, kind: input, shape index: {}]
  %s16 = inlined_call_operand.vmem [shape: f32[48,90], index: 16, kind: input, shape index: {}]
  %s17 = inlined_call_operand.vmem [shape: f32[30,32], index: 17, kind: input, shape index: {}]
  %s18 = inlined_call_operand.vmem [shape: f32[32,30], index: 18, kind: input, shape index: {}]
  %s19 = inlined_call_operand.vmem [shape: f32[64,8], index: 19, kind: input, shape index: {}]
  %s20 = inlined_call_operand.vmem [shape: f32[8,64], index: 20, kind: input, shape index: {}]
  %s21 = inlined_call_operand.vmem [shape: f32[19,256], index: 21, kind: input, shape index: {}]
  %s22 = inlined_call_operand.vmem [shape: f32[2,90], index: 22, kind: output, shape index: {0}]
  %s23 = inlined_call_operand.vmem [shape: f32[2,1], index: 23, kind: output, shape index: {1}]
  %24 = xla_tuple %s22, %s23
  %s25 = sld [smem:[#allocation0]]
  $region110: #{forward.1} parent=0
    _
  %s27 = ssub.s32 1, %s25
  %s28 = scalar_select 0, %s27, %s25
  $region1: #{forward.1} parent=0
    #allocation2 [shape = 'u8[512]{0}', space=smem, size = 0x200, scoped, tag = 'input window, operand 0, single buffered']
    #allocation3 [shape = 's32[1]{0}', space=sflag, size = 0x4, scoped, tag = 'scoped memory for forward.1']
    %29 = vsyncpa [#allocation3], 0
    // Predicated region
    $region2: #{forward.1} parent=1 // pred_check
      _
    $region3: #{forward.1} parent=1 // pred_check_branch
      %31 = sbr.rel (0) target = $region5
    $region4: #{forward.1} parent=1 // pred_region
      %s33 = ssub.s32 16, 16
      %34 = vsyncadd [#allocation3], %s33
      %s36 = sshll.u32 %s0, 4
      %s37 = int_to_ptr.vmem [resolvable:$true] %s36
      %39 = dma.vmem_to_smem %s37, 16, [#allocation2], [#allocation3]
    $region5: #{forward.1} parent=1 // pred_fallthru
      _
    // Predicated region
    $region6: #{forward.1} parent=1 // pred_check
      _
    $region7: #{forward.1} parent=1 // pred_check_branch
      %41 = sbr.rel (0) target = $region9
    $region8: #{forward.1} parent=1 // pred_region
      _
    $region9: #{forward.1} parent=1 // pred_fallthru
      _
    // Predicated region
    $region10: #{forward.1} parent=1 // pred_check
      _
    $region11: #{forward.1} parent=1 // pred_check_branch
      %43 = sbr.rel (0) target = $region13
    $region12: #{forward.1} parent=1 // pred_region
      _
    $region13: #{forward.1} parent=1 // pred_fallthru
      _
    // Predicated region
    $region14: #{forward.1} parent=1 // pred_check
      _
    $region15: #{forward.1} parent=1 // pred_check_branch
      %45 = sbr.rel (0) target = $region17
    $region16: #{forward.1} parent=1 // pred_region
      _
    $region17: #{forward.1} parent=1 // pred_fallthru
      _
    // Predicated region
    $region18: #{forward.1} parent=1 // pred_check
      _
    $region19: #{forward.1} parent=1 // pred_check_branch
      %47 = sbr.rel (0) target = $region21
    $region20: #{forward.1} parent=1 // pred_region
      _
    $region21: #{forward.1} parent=1 // pred_fallthru
      _
    // Predicated region
    $region22: #{forward.1} parent=1 // pred_check
      _
    $region23: #{forward.1} parent=1 // pred_check_branch
      %49 = sbr.rel (0) target = $region25
    $region24: #{forward.1} parent=1 // pred_region
      _
    $region25: #{forward.1} parent=1 // pred_fallthru
      _
    // Predicated region
    $region26: #{forward.1} parent=1 // pred_check
      _
    $region27: #{forward.1} parent=1 // pred_check_branch
      %51 = sbr.rel (0) target = $region29
    $region28: #{forward.1} parent=1 // pred_region
      _
    $region29: #{forward.1} parent=1 // pred_fallthru
      _
    // Predicated region
    $region30: #{forward.1} parent=1 // pred_check
      _
    $region31: #{forward.1} parent=1 // pred_check_branch
      %53 = sbr.rel (0) target = $region33
    $region32: #{forward.1} parent=1 // pred_region
      _
    $region33: #{forward.1} parent=1 // pred_fallthru
      _
    // Predicated region
    $region34: #{forward.1} parent=1 // pred_check
      _
    $region35: #{forward.1} parent=1 // pred_check_branch
      %55 = sbr.rel (0) target = $region37
    $region36: #{forward.1} parent=1 // pred_region
      _
    $region37: #{forward.1} parent=1 // pred_fallthru
      _
    // Predicated region
    $region38: #{forward.1} parent=1 // pred_check
      _
    $region39: #{forward.1} parent=1 // pred_check_branch
      %57 = sbr.rel (0) target = $region41
    $region40: #{forward.1} parent=1 // pred_region
      _
    $region41: #{forward.1} parent=1 // pred_fallthru
      _
    // Predicated region
    $region42: #{forward.1} parent=1 // pred_check
      _
    $region43: #{forward.1} parent=1 // pred_check_branch
      %59 = sbr.rel (0) target = $region45
    $region44: #{forward.1} parent=1 // pred_region
      _
    $region45: #{forward.1} parent=1 // pred_fallthru
      _
    // Predicated region
    $region46: #{forward.1} parent=1 // pred_check
      _
    $region47: #{forward.1} parent=1 // pred_check_branch
      %61 = sbr.rel (0) target = $region49
    $region48: #{forward.1} parent=1 // pred_region
      _
    $region49: #{forward.1} parent=1 // pred_fallthru
      _
    // Predicated region
    $region50: #{forward.1} parent=1 // pred_check
      _
    $region51: #{forward.1} parent=1 // pred_check_branch
      %63 = sbr.rel (0) target = $region53
    $region52: #{forward.1} parent=1 // pred_region
      _
    $region53: #{forward.1} parent=1 // pred_fallthru
      _
    // Predicated region
    $region54: #{forward.1} parent=1 // pred_check
      _
    $region55: #{forward.1} parent=1 // pred_check_branch
      %65 = sbr.rel (0) target = $region57
    $region56: #{forward.1} parent=1 // pred_region
      _
    $region57: #{forward.1} parent=1 // pred_fallthru
      _
    // Predicated region
    $region58: #{forward.1} parent=1 // pred_check
      _
    $region59: #{forward.1} parent=1 // pred_check_branch
      %67 = sbr.rel (0) target = $region61
    $region60: #{forward.1} parent=1 // pred_region
      _
    $region61: #{forward.1} parent=1 // pred_fallthru
      _
    // Predicated region
    $region62: #{forward.1} parent=1 // pred_check
      _
    $region63: #{forward.1} parent=1 // pred_check_branch
      %69 = sbr.rel (0) target = $region65
    $region64: #{forward.1} parent=1 // pred_region
      _
    $region65: #{forward.1} parent=1 // pred_fallthru
      _
    // Predicated region
    $region66: #{forward.1} parent=1 // pred_check
      _
    $region67: #{forward.1} parent=1 // pred_check_branch
      %71 = sbr.rel (0) target = $region69
    $region68: #{forward.1} parent=1 // pred_region
      _
    $region69: #{forward.1} parent=1 // pred_fallthru
      _
    // Predicated region
    $region70: #{forward.1} parent=1 // pred_check
      _
    $region71: #{forward.1} parent=1 // pred_check_branch
      %73 = sbr.rel (0) target = $region73
    $region72: #{forward.1} parent=1 // pred_region
      _
    $region73: #{forward.1} parent=1 // pred_fallthru
      _
    // Predicated region
    $region74: #{forward.1} parent=1 // pred_check
      _
    $region75: #{forward.1} parent=1 // pred_check_branch
      %75 = sbr.rel (0) target = $region77
    $region76: #{forward.1} parent=1 // pred_region
      _
    $region77: #{forward.1} parent=1 // pred_fallthru
      _
    // Predicated region
    $region78: #{forward.1} parent=1 // pred_check
      _
    $region79: #{forward.1} parent=1 // pred_check_branch
      %77 = sbr.rel (0) target = $region81
    $region80: #{forward.1} parent=1 // pred_region
      _
    $region81: #{forward.1} parent=1 // pred_fallthru
      _
    // Predicated region
    $region82: #{forward.1} parent=1 // pred_check
      _
    $region83: #{forward.1} parent=1 // pred_check_branch
      %79 = sbr.rel (0) target = $region85
    $region84: #{forward.1} parent=1 // pred_region
      _
    $region85: #{forward.1} parent=1 // pred_fallthru
      _
    // Predicated region
    $region86: #{forward.1} parent=1 // pred_check
      _
    $region87: #{forward.1} parent=1 // pred_check_branch
      %81 = sbr.rel (0) target = $region89
    $region88: #{forward.1} parent=1 // pred_region
      _
    $region89: #{forward.1} parent=1 // pred_fallthru
      _
    // Predicated region
    $region90: #{forward.1} parent=1 // pred_check
      _
    $region91: #{forward.1} parent=1 // pred_check_branch
      %83 = sbr.rel (0) target = $region93
    $region92: #{forward.1} parent=1 // pred_region
      %84 = dma.done [#allocation3], 16
    $region93: #{forward.1} parent=1 // pred_fallthru
      _
    %85 = sfence
    %v86 = vld [vmem:[%s1] sm:$0x3]
    %v87 = vld [vmem:[%s1 + $0x2] sm:$0x3]
    %v88 = vld [vmem:[%s1 + $0x4] sm:$0x3]
    %v89 = vld [vmem:[%s1 + $0x6] sm:$0x3]
    %v90 = vld [vmem:[%s1 + $0x8] sm:$0x3]
    %v91 = vld [vmem:[%s1 + $0xa] sm:$0x3]
    %v92 = vld [vmem:[%s1 + $0xc] sm:$0x3]
    %v93 = vld [vmem:[%s1 + $0xe] sm:$0x3]
    %101 = vrot.lane.b32.xlu0 0.0, 30
    %v102 = vpop.permute.xlu0 %101
    %103 = vrot.lane.b32.xlu0 %v86, 30
    %v104 = vpop.permute.xlu0 %103
    %105 = vrot.lane.b32.xlu0 %v87, 30
    %v106 = vpop.permute.xlu0 %105
    %107 = vrot.lane.b32.xlu0 %v88, 30
    %v108 = vpop.permute.xlu0 %107
    %109 = vrot.lane.b32.xlu0 %v89, 30
    %v110 = vpop.permute.xlu0 %109
    %111 = vrot.lane.b32.xlu0 %v90, 30
    %v112 = vpop.permute.xlu0 %111
    %113 = vrot.lane.b32.xlu0 %v91, 30
    %v114 = vpop.permute.xlu0 %113
    %123 = vrot.lane.b32.xlu0 0.0, 60
    %v124 = vpop.permute.xlu0 %123
    %125 = vrot.lane.b32.xlu0 %v86, 60
    %v126 = vpop.permute.xlu0 %125
    %127 = vrot.lane.b32.xlu0 %v87, 60
    %v128 = vpop.permute.xlu0 %127
    %129 = vrot.lane.b32.xlu0 %v88, 60
    %v130 = vpop.permute.xlu0 %129
    %131 = vrot.lane.b32.xlu0 %v89, 60
    %v132 = vpop.permute.xlu0 %131
    %133 = vrot.lane.b32.xlu0 %v90, 60
    %v134 = vpop.permute.xlu0 %133
    %135 = vrot.lane.b32.xlu0 %v91, 60
    %v136 = vpop.permute.xlu0 %135
    %137 = vrot.lane.b32.xlu0 %v92, 60
    %v138 = vpop.permute.xlu0 %137
    %148 = vrot.lane.b32.xlu0 %v86, 90
    %v149 = vpop.permute.xlu0 %148
    %150 = vrot.lane.b32.xlu0 %v87, 90
    %v151 = vpop.permute.xlu0 %150
    %152 = vrot.lane.b32.xlu0 %v88, 90
    %v153 = vpop.permute.xlu0 %152
    %154 = vrot.lane.b32.xlu0 %v89, 90
    %v155 = vpop.permute.xlu0 %154
    %156 = vrot.lane.b32.xlu0 %v90, 90
    %v157 = vpop.permute.xlu0 %156
    %158 = vrot.lane.b32.xlu0 %v91, 90
    %v159 = vpop.permute.xlu0 %158
    %160 = vrot.lane.b32.xlu0 %v92, 90
    %v161 = vpop.permute.xlu0 %160
    %162 = vrot.lane.b32.xlu0 %v93, 90
    %v163 = vpop.permute.xlu0 %162
    %172 = vrot.lane.b32.xlu0 %v87, 120
    %v173 = vpop.permute.xlu0 %172
    %174 = vrot.lane.b32.xlu0 %v88, 120
    %v175 = vpop.permute.xlu0 %174
    %176 = vrot.lane.b32.xlu0 %v89, 120
    %v177 = vpop.permute.xlu0 %176
    %178 = vrot.lane.b32.xlu0 %v90, 120
    %v179 = vpop.permute.xlu0 %178
    %180 = vrot.lane.b32.xlu0 %v91, 120
    %v181 = vpop.permute.xlu0 %180
    %182 = vrot.lane.b32.xlu0 %v92, 120
    %v183 = vpop.permute.xlu0 %182
    %184 = vrot.lane.b32.xlu0 %v93, 120
    %v185 = vpop.permute.xlu0 %184
    %186 = vrot.lane.b32.xlu0 0.0, 120
    %v187 = vpop.permute.xlu0 %186
    %196 = vrot.lane.b32.xlu0 %v88, 22
    %v197 = vpop.permute.xlu0 %196
    %198 = vrot.lane.b32.xlu0 %v89, 22
    %v199 = vpop.permute.xlu0 %198
    %200 = vrot.lane.b32.xlu0 %v90, 22
    %v201 = vpop.permute.xlu0 %200
    %202 = vrot.lane.b32.xlu0 %v91, 22
    %v203 = vpop.permute.xlu0 %202
    %204 = vrot.lane.b32.xlu0 %v92, 22
    %v205 = vpop.permute.xlu0 %204
    %206 = vrot.lane.b32.xlu0 %v93, 22
    %v207 = vpop.permute.xlu0 %206
    %208 = vrot.lane.b32.xlu0 0.0, 22
    %v209 = vpop.permute.xlu0 %208
    %217 = vrot.lane.b32.xlu0 %v89, 52
    %v218 = vpop.permute.xlu0 %217
    %219 = vrot.lane.b32.xlu0 %v90, 52
    %v220 = vpop.permute.xlu0 %219
    %221 = vrot.lane.b32.xlu0 %v91, 52
    %v222 = vpop.permute.xlu0 %221
    %223 = vrot.lane.b32.xlu0 %v92, 52
    %v224 = vpop.permute.xlu0 %223
    %225 = vrot.lane.b32.xlu0 %v93, 52
    %v226 = vpop.permute.xlu0 %225
    %227 = vrot.lane.b32.xlu0 0.0, 52
    %v228 = vpop.permute.xlu0 %227
    %vm235 = vcmask 244736
    %v236 = vsel %vm235, 0.0, %v102
    %v237 = vsel %vm235, 0.0, %v104
    %v238 = vsel %vm235, %v86, %v106
    %v239 = vsel %vm235, %v87, %v108
    %v240 = vsel %vm235, %v88, %v110
    %v241 = vsel %vm235, %v89, %v112
    %v242 = vsel %vm235, %v90, %v114
    %vm243 = vcmask 490496
    %v244 = vsel %vm243, %v236, %v124
    %v245 = vsel %vm243, %v236, %v126
    %v246 = vsel %vm243, %v237, %v128
    %v247 = vsel %vm243, %v238, %v130
    %v248 = vsel %vm243, %v239, %v132
    %v249 = vsel %vm243, %v240, %v134
    %v250 = vsel %vm243, %v241, %v136
    %v251 = vsel %vm243, %v242, %v138
    %vm252 = vcmask 736256
    %v253 = vsel %vm252, %v244, %v149
    %v254 = vsel %vm252, %v245, %v151
    %v255 = vsel %vm252, %v246, %v153
    %v256 = vsel %vm252, %v247, %v155
    %v257 = vsel %vm252, %v248, %v157
    %v258 = vsel %vm252, %v249, %v159
    %v259 = vsel %vm252, %v250, %v161
    %v260 = vsel %vm252, %v251, %v163
    %vm261 = vcmask 982016
    %v262 = vsel %vm261, %v253, %v173
    %v263 = vsel %vm261, %v254, %v175
    %v264 = vsel %vm261, %v255, %v177
    %v265 = vsel %vm261, %v256, %v179
    %v266 = vsel %vm261, %v257, %v181
    %v267 = vsel %vm261, %v258, %v183
    %v268 = vsel %vm261, %v259, %v185
    %v269 = vsel %vm261, %v260, %v187
    %vm270 = vcmask 179200
    %v271 = vsel %vm270, %v173, %v197
    %v272 = vsel %vm270, %v175, %v199
    %v273 = vsel %vm270, %v177, %v201
    %v274 = vsel %vm270, %v179, %v203
    %v275 = vsel %vm270, %v181, %v205
    %v276 = vsel %vm270, %v183, %v207
    %v277 = vsel %vm270, %v185, %v209
    %v278 = vsel %vm270, %v187, %v209
    %vm279 = vcmask 424960
    %v280 = vsel %vm279, %v271, %v218
    %v281 = vsel %vm279, %v272, %v220
    %v282 = vsel %vm279, %v273, %v222
    %v283 = vsel %vm279, %v274, %v224
    %v284 = vsel %vm279, %v275, %v226
    %v285 = vsel %vm279, %v276, %v228
    %v286 = vsel %vm279, %v277, %v228
    %v287 = vsel %vm279, %v278, %v228
    %v304 = vcombine.low %v262, %v280
    %v306 = vunpack.c.l.s4 1983009808
    %v307 = vunpack.c.0.s8 %v306
    %v308 = vlaneseq
    %v309 = vshrl.u32 %v308, 7
    %v310 = vsub.s32 %v307, %v309
    %v311 = vrot.slane %v304, %v310
    %v312 = vcombine.low %v263, %v281
    %v314 = vunpack.c.l.s4 1983009808
    %v315 = vunpack.c.0.s8 %v314
    %v316 = vlaneseq
    %v317 = vshrl.u32 %v316, 7
    %v318 = vsub.s32 %v315, %v317
    %v319 = vrot.slane %v312, %v318
    %v320 = vcombine.low %v264, %v282
    %v322 = vunpack.c.l.s4 1983009808
    %v323 = vunpack.c.0.s8 %v322
    %v324 = vlaneseq
    %v325 = vshrl.u32 %v324, 7
    %v326 = vsub.s32 %v323, %v325
    %v327 = vrot.slane %v320, %v326
    %v328 = vcombine.low %v265, %v283
    %v330 = vunpack.c.l.s4 1983009808
    %v331 = vunpack.c.0.s8 %v330
    %v332 = vlaneseq
    %v333 = vshrl.u32 %v332, 7
    %v334 = vsub.s32 %v331, %v333
    %v335 = vrot.slane %v328, %v334
    %v336 = vcombine.low %v266, %v284
    %v338 = vunpack.c.l.s4 1983009808
    %v339 = vunpack.c.0.s8 %v338
    %v340 = vlaneseq
    %v341 = vshrl.u32 %v340, 7
    %v342 = vsub.s32 %v339, %v341
    %v343 = vrot.slane %v336, %v342
    %v344 = vcombine.low %v267, %v285
    %v346 = vunpack.c.l.s4 1983009808
    %v347 = vunpack.c.0.s8 %v346
    %v348 = vlaneseq
    %v349 = vshrl.u32 %v348, 7
    %v350 = vsub.s32 %v347, %v349
    %v351 = vrot.slane %v344, %v350
    %v352 = vcombine.low %v268, %v286
    %v354 = vunpack.c.l.s4 1983009808
    %v355 = vunpack.c.0.s8 %v354
    %v356 = vlaneseq
    %v357 = vshrl.u32 %v356, 7
    %v358 = vsub.s32 %v355, %v357
    %v359 = vrot.slane %v352, %v358
    %v360 = vcombine.low %v269, %v287
    %v362 = vunpack.c.l.s4 1983009808
    %v363 = vunpack.c.0.s8 %v362
    %v364 = vlaneseq
    %v365 = vshrl.u32 %v364, 7
    %v366 = vsub.s32 %v363, %v365
    %v367 = vrot.slane %v360, %v366
    %v368 = vld [vmem:[%s4] sm:$0xff]
    %v369 = vld [vmem:[%s4 + $0x8] sm:$0xff]
    %v370 = vld [vmem:[%s4 + $0x10] sm:$0xff]
    %v371 = vld [vmem:[%s4 + $0x18] sm:$0xff]
    %v372 = vld [vmem:[%s4 + $0x20] sm:$0xff]
    %v373 = vld [vmem:[%s4 + $0x28] sm:$0xff]
    %v374 = vld [vmem:[%s4 + $0x30] sm:$0xff]
    %v375 = vld [vmem:[%s4 + $0x38] sm:$0xff]
    %v376 = vld [vmem:[%s4 + $0x40] sm:$0xff]
    %v377 = vld [vmem:[%s4 + $0x48] sm:$0xff]
    %v378 = vld [vmem:[%s4 + $0x50] sm:$0xff]
    %v379 = vld [vmem:[%s4 + $0x58] sm:$0xff]
    %v380 = vld [vmem:[%s4 + $0x60] sm:$0xff]
    %v381 = vld [vmem:[%s4 + $0x68] sm:$0xff]
    %v382 = vld [vmem:[%s4 + $0x70] sm:$0xff]
    %v383 = vld [vmem:[%s4 + $0x78] sm:$0xff]
    %v384 = vld [vmem:[%s4 + $0x80] sm:$0xff]
    %v385 = vld [vmem:[%s4 + $0x88] sm:$0xff]
    %v386 = vld [vmem:[%s4 + $0x90] sm:$0xff]
    %v387 = vld [vmem:[%s4 + $0x98] sm:$0xff]
    %v388 = vld [vmem:[%s4 + $0xa0] sm:$0xff]
    %v389 = vld [vmem:[%s4 + $0xa8] sm:$0xff]
    %v390 = vld [vmem:[%s4 + $0xb0] sm:$0xff]
    %v391 = vld [vmem:[%s4 + $0xb8] sm:$0xff]
    %v392 = vld [vmem:[%s4 + $0xc0] sm:$0xff]
    %v393 = vld [vmem:[%s4 + $0xc8] sm:$0xff]
    %v394 = vld [vmem:[%s4 + $0xd0] sm:$0x3]
    %v395 = vld [vmem:[%s21 + $0x20] ss:$0 sm:$0xff]
    %v396 = vcombine.low %v311, %v319
    %v397 = vcombine.low %v327, %v335
    %v399 = vunpack.c.l.s4 1983009808
    %v400 = vunpack.c.0.s8 %v399
    %v401 = vlaneseq
    %v402 = vshrl.u32 %v401, 7
    %v403 = vsub.s32 %v400, %v402
    %v404 = vrot.slane %v396, %v403
    %v406 = vunpack.c.l.s4 1983009808
    %v407 = vunpack.c.0.s8 %v406
    %v408 = vlaneseq
    %v409 = vshrl.u32 %v408, 7
    %v410 = vsub.s32 %v407, %v409
    %v411 = vrot.slane %v397, %v410
    %v412 = vcombine.low %v404, %v411
    %v413 = vcombine.high %v404, %v411
    %v414 = vcombine.low %v343, %v351
    %v415 = vcombine.low %v359, %v367
    %v417 = vunpack.c.l.s4 1983009808
    %v418 = vunpack.c.0.s8 %v417
    %v419 = vlaneseq
    %v420 = vshrl.u32 %v419, 7
    %v421 = vsub.s32 %v418, %v420
    %v422 = vrot.slane %v414, %v421
    %v424 = vunpack.c.l.s4 1983009808
    %v425 = vunpack.c.0.s8 %v424
    %v426 = vlaneseq
    %v427 = vshrl.u32 %v426, 7
    %v428 = vsub.s32 %v425, %v427
    %v429 = vrot.slane %v415, %v428
    %v430 = vcombine.low %v422, %v429
    %v431 = vcombine.high %v422, %v429
    %vm434 = vcmask 670720
    %v435 = vsel %vm434, %v413, 0
    %v437 = vsel %vm434, %v431, 0
    %vm439 = vcmask 1041408
    %v441 = vsel %vm439, %v394, 0
    %443 = vmatprep.subr.mxu0 0.0
    %444 = vmatpush1.msra.mxu0 %v368
    %445 = vmatprep.subr.mxu0 0.0
    %446 = vmatpush1.msra.mxu0 %v369
    %447 = vmatprep.subr.mxu0 0.0
    %448 = vmatpush1.msra.mxu0 %v370
    %449 = vmatprep.subr.mxu0 0.0
    %450 = vmatpush1.msra.mxu0 %v371
    %451 = vmatprep.subr.mxu0 0.0
    %452 = vmatpush1.msra.mxu0 %v372
    %453 = vmatprep.subr.mxu0 0.0
    %454 = vmatpush1.msra.mxu0 %v373
    %455 = vmatprep.subr.mxu0 0.0
    %456 = vmatpush1.msra.mxu0 %v374
    %457 = vmatprep.subr.mxu0 0.0
    %458 = vmatpush1.msra.mxu0 %v375
    %459 = vmatprep.subr.mxu0 0.0
    %460 = vmatpush1.msra.mxu0 %v376
    %461 = vmatprep.subr.mxu0 0.0
    %462 = vmatpush1.msra.mxu0 %v377
    %463 = vmatprep.subr.mxu0 0.0
    %464 = vmatpush1.msra.mxu0 %v378
    %465 = vmatprep.subr.mxu0 0.0
    %466 = vmatpush1.msra.mxu0 %v379
    %467 = vmatprep.subr.mxu0 0.0
    %468 = vmatpush1.msra.mxu0 %v380
    %469 = vmatprep.subr.mxu0 0.0
    %470 = vmatpush1.msra.mxu0 %v381
    %471 = vmatprep.subr.mxu0 0.0
    %472 = vmatpush1.msra.mxu0 %v382
    %473 = vmatprep.subr.mxu0 0.0
    %474 = vmatpush1.msra.mxu0 %v383
    %475 = vmatprep.subr.mxu0 0.0
    %476 = vmatpush1.msra.mxu0 %v384
    %477 = vmatprep.subr.mxu0 0.0
    %478 = vmatpush1.msra.mxu0 %v385
    %479 = vmatprep.subr.mxu0 0.0
    %480 = vmatpush1.msra.mxu0 %v386
    %481 = vmatprep.subr.mxu0 0.0
    %482 = vmatpush1.msra.mxu0 %v387
    %483 = vmatprep.subr.mxu0 0.0
    %484 = vmatpush1.msra.mxu0 %v388
    %485 = vmatprep.subr.mxu0 0.0
    %486 = vmatpush1.msra.mxu0 %v389
    %487 = vmatprep.subr.mxu0 0.0
    %488 = vmatpush1.msra.mxu0 %v390
    %489 = vmatprep.subr.mxu0 0.0
    %490 = vmatpush1.msra.mxu0 %v391
    %491 = vmatprep.subr.mxu0 0.0
    %492 = vmatpush1.msra.mxu0 %v392
    %493 = vmatprep.subr.mxu0 0.0
    %494 = vmatpush1.msra.mxu0 %v393
    %495 = vmatprep.subr.mxu0 0.0
    %496 = vmatpush1.msra.mxu0 %v441
    %497 = vmatprep.subr.mxu0 0.0
    %498 = vmatpush1.msra.mxu0 0.0
    %499 = vmatprep.subr.mxu0 0.0
    %500 = vmatpush1.msra.mxu0 0.0
    %501 = vmatprep.subr.mxu0 0.0
    %502 = vmatpush1.msra.mxu0 0.0
    %503 = vmatprep.subr.mxu0 0.0
    %504 = vmatpush1.msra.mxu0 0.0
    %505 = vmatprep.subr.mxu0 0.0
    %506 = vmatpush1.msra.mxu0 0.0
    %507 = vmatprep.mubr.f32.mxu0 %v435
    %508 = vmatmul.mubr.f32.gmra.mrb[0].mxu0 %v412
    %v509 = vpop.f32.mrb[0].mxu0
    %v510 = vadd.f32 %v395, %v509
    %v511 = vpop.f32.mrb[0].mxu0
    %512 = vmatprep.mubr.f32.mxu0 %v437
    %513 = vmatmul.mubr.f32.gmra.mrb[0].mxu0 %v430
    %v514 = vpop.f32.mrb[0].mxu0
    %v515 = vadd.f32 %v395, %v514
    %v516 = vpop.f32.mrb[0].mxu0
    %517 = vdwg.mxu0
    %v518 = vmax.f32 %v510, 0.0
    %v519 = vmax.f32 %v515, 0.0
    %v520 = vld [vmem:[%s21 + $0x21] ss:$0 sm:$0xff]
    %v521 = vmul.f32 %v518, %v520
    %v522 = vmul.f32 %v519, %v520
    %v523 = vld [vmem:[%s21 + $0x22] ss:$0 sm:$0xff]
    %v524 = vadd.f32 %v521, %v523
    %v525 = vadd.f32 %v522, %v523
    %v526 = vld [vmem:[%s5] sm:$0xff]
    %v527 = vld [vmem:[%s5 + $0x8] sm:$0xff]
    %v528 = vld [vmem:[%s5 + $0x10] sm:$0xff]
    %v529 = vld [vmem:[%s5 + $0x18] sm:$0xff]
    %v530 = vld [vmem:[%s21] ss:$8 sm:$0x3]
    %v532 = vlaneseq
    %v533 = vshrl.u32 %v532, 7
    %v534 = vsub.s32 0, %v533
    %v535 = vrot.slane %v530, %v534
    %v536 = vlaneseq
    %v537 = vshrl.u32 %v536, 7
    %v538 = vsub.s32 1, %v537
    %v539 = vrot.slane %v530, %v538
    %vm542 = vcmask 130048
    %v544 = vsel %vm542, %v524, 0
    %v547 = vsel %vm542, %v525, 0
    %549 = vmatprep.subr.mxu0 %v527
    %550 = vmatpush1.msra.mxu0 %v526
    %551 = vmatprep.subr.mxu0 %v529
    %552 = vmatpush1.msra.mxu0 %v528
    %553 = vmatprep.subr.mxu0 0.0
    %554 = vmatpush1.msra.mxu0 0.0
    %555 = vmatprep.subr.mxu0 0.0
    %556 = vmatpush1.msra.mxu0 0.0
    %557 = vmatprep.subr.mxu0 0.0
    %558 = vmatpush1.msra.mxu0 0.0
    %559 = vmatprep.subr.mxu0 0.0
    %560 = vmatpush1.msra.mxu0 0.0
    %561 = vmatprep.subr.mxu0 0.0
    %562 = vmatpush1.msra.mxu0 0.0
    %563 = vmatprep.subr.mxu0 0.0
    %564 = vmatpush1.msra.mxu0 0.0
    %565 = vmatprep.subr.mxu0 0.0
    %566 = vmatpush1.msra.mxu0 0.0
    %567 = vmatprep.subr.mxu0 0.0
    %568 = vmatpush1.msra.mxu0 0.0
    %569 = vmatprep.subr.mxu0 0.0
    %570 = vmatpush1.msra.mxu0 0.0
    %571 = vmatprep.subr.mxu0 0.0
    %572 = vmatpush1.msra.mxu0 0.0
    %573 = vmatprep.subr.mxu0 0.0
    %574 = vmatpush1.msra.mxu0 0.0
    %575 = vmatprep.subr.mxu0 0.0
    %576 = vmatpush1.msra.mxu0 0.0
    %577 = vmatprep.subr.mxu0 0.0
    %578 = vmatpush1.msra.mxu0 0.0
    %579 = vmatprep.subr.mxu0 0.0
    %580 = vmatpush1.msra.mxu0 0.0
    %581 = vmatprep.subr.mxu0 0.0
    %582 = vmatpush1.msra.mxu0 0.0
    %583 = vmatprep.subr.mxu0 0.0
    %584 = vmatpush1.msra.mxu0 0.0
    %585 = vmatprep.subr.mxu0 0.0
    %586 = vmatpush1.msra.mxu0 0.0
    %587 = vmatprep.subr.mxu0 0.0
    %588 = vmatpush1.msra.mxu0 0.0
    %589 = vmatprep.subr.mxu0 0.0
    %590 = vmatpush1.msra.mxu0 0.0
    %591 = vmatprep.subr.mxu0 0.0
    %592 = vmatpush1.msra.mxu0 0.0
    %593 = vmatprep.subr.mxu0 0.0
    %594 = vmatpush1.msra.mxu0 0.0
    %595 = vmatprep.subr.mxu0 0.0
    %596 = vmatpush1.msra.mxu0 0.0
    %597 = vmatprep.subr.mxu0 0.0
    %598 = vmatpush1.msra.mxu0 0.0
    %599 = vmatprep.subr.mxu0 0.0
    %600 = vmatpush1.msra.mxu0 0.0
    %601 = vmatprep.subr.mxu0 0.0
    %602 = vmatpush1.msra.mxu0 0.0
    %603 = vmatprep.subr.mxu0 0.0
    %604 = vmatpush1.msra.mxu0 0.0
    %605 = vmatprep.subr.mxu0 0.0
    %606 = vmatpush1.msra.mxu0 0.0
    %607 = vmatprep.subr.mxu0 0.0
    %608 = vmatpush1.msra.mxu0 0.0
    %609 = vmatprep.subr.mxu0 0.0
    %610 = vmatpush1.msra.mxu0 0.0
    %611 = vmatprep.subr.mxu0 0.0
    %612 = vmatpush1.msra.mxu0 0.0
    %613 = vmatprep.mubr.f32.mxu0 0.0
    %614 = vmatmul.mubr.f32.gmra.mrb[0].mxu0 %v544
    %v615 = vpop.f32.mrb[0].mxu0
    %v616 = vadd.f32 %v535, %v615
    %v617 = vpop.f32.mrb[0].mxu0
    %v618 = vadd.f32 %v539, %v617
    %619 = vmatprep.mubr.f32.mxu0 0.0
    %620 = vmatmul.mubr.f32.gmra.mrb[0].mxu0 %v547
    %v621 = vpop.f32.mrb[0].mxu0
    %v622 = vadd.f32 %v535, %v621
    %v623 = vpop.f32.mrb[0].mxu0
    %v624 = vadd.f32 %v539, %v623
    %625 = vdwg.mxu0
    %v630 = vcombine.low %v616, %v618
    %v631 = vcombine.high %v616, %v618
    %v633 = vunpack.c.l.s4 1983009808
    %v634 = vunpack.c.0.s8 %v633
    %v635 = vlaneseq
    %v636 = vshrl.u32 %v635, 7
    %v637 = vsub.s32 %v634, %v636
    %v638 = vrot.slane %v630, %v637
    %v640 = vunpack.c.l.s4 1983009808
    %v641 = vunpack.c.0.s8 %v640
    %v642 = vlaneseq
    %v643 = vshrl.u32 %v642, 7
    %v644 = vsub.s32 %v641, %v643
    %v645 = vrot.slane %v631, %v644
    %v646 = vcombine.high %v638, %v638
    %v647 = vcombine.high %v645, %v645
    %v648 = vcombine.low %v622, %v624
    %v649 = vcombine.high %v622, %v624
    %v651 = vunpack.c.l.s4 1983009808
    %v652 = vunpack.c.0.s8 %v651
    %v653 = vlaneseq
    %v654 = vshrl.u32 %v653, 7
    %v655 = vsub.s32 %v652, %v654
    %v656 = vrot.slane %v648, %v655
    %v658 = vunpack.c.l.s4 1983009808
    %v659 = vunpack.c.0.s8 %v658
    %v660 = vlaneseq
    %v661 = vshrl.u32 %v660, 7
    %v662 = vsub.s32 %v659, %v661
    %v663 = vrot.slane %v649, %v662
    %v664 = vcombine.high %v656, %v656
    %v665 = vcombine.high %v663, %v663
    %v666 = vld [vmem:[%s6] sm:$0xff]
    %v667 = vld [vmem:[%s6 + $0x8] sm:$0xff]
    %v668 = vld [vmem:[%s6 + $0x10] sm:$0xff]
    %v669 = vld [vmem:[%s6 + $0x18] sm:$0xff]
    %v670 = vld [vmem:[%s6 + $0x20] sm:$0xff]
    %v671 = vld [vmem:[%s6 + $0x28] sm:$0xff]
    %v672 = vld [vmem:[%s6 + $0x30] sm:$0xff]
    %v673 = vld [vmem:[%s6 + $0x38] sm:$0xff]
    %v674 = vld [vmem:[%s6 + $0x40] sm:$0xff]
    %v675 = vld [vmem:[%s6 + $0x48] sm:$0xff]
    %v676 = vld [vmem:[%s6 + $0x50] sm:$0xff]
    %v677 = vld [vmem:[%s6 + $0x58] sm:$0xff]
    %v678 = vld [vmem:[%s6 + $0x60] sm:$0xff]
    %v679 = vld [vmem:[%s6 + $0x68] sm:$0xff]
    %v680 = vld [vmem:[%s6 + $0x70] sm:$0xff]
    %v681 = vld [vmem:[%s6 + $0x78] sm:$0xff]
    %v682 = vlaneseq
    %v683 = vand.u32 %v682, 127
    %v684 = vadd.s32 %v683, 128
    %vm685 = vcmp.lt.s32.totalorder %v683, 0
    %v686 = vsub.s32 0, %v683
    %v687 = vsel %vm685, %v686, %v683
    %v688 = vshrl.u32 %v687, 6
    %v689 = vand.u32 %v687, 63
    %v690 = vsub.s32 0, %v689
    %v691 = vsel %vm685, %v690, %v689
    %vm692 = vcmp.lt.s32.totalorder %v684, 0
    %v693 = vsub.s32 0, %v684
    %v694 = vsel %vm692, %v693, %v684
    %v695 = vshrl.u32 %v694, 6
    %v696 = vand.u32 %v694, 63
    %v697 = vsub.s32 0, %v696
    %v698 = vsel %vm692, %v697, %v696
    %vm699 = vcmp.ne.s32.totalorder %v691, 0
    %vm700 = vcmp.ne.s32.totalorder %v698, 0
    %vm701 = vcmp.lt.s32.totalorder %v691, 0
    %vm702 = vcmp.lt.s32.totalorder %v698, 0
    %vm703 = vmand %vm701, %vm699
    %vm704 = vmand %vm702, %vm700
    %v705 = vadd.s32 %v691, 64
    %v706 = vadd.s32 %v698, 64
    %v707 = vsel %vm703, %v705, %v691
    %v708 = vsel %vm704, %v706, %v698
    %vm709 = vcmp.lt.s32.totalorder %v707, 32
    %vm710 = vcmp.lt.s32.totalorder %v708, 32
    %v712 = vunpack.c.l.s4 1983009808
    %v713 = vunpack.c.0.s8 %v712
    %v714 = vlaneseq
    %v715 = vshrl.u32 %v714, 7
    %v716 = vsub.s32 %v713, %v715
    %v717 = vrot.slane %v638, %v716
    %v718 = vcombine.high %v717, %v717
    %v722 = vunpack.c.l.s4 1983009808
    %v723 = vunpack.c.0.s8 %v722
    %v724 = vlaneseq
    %v725 = vshrl.u32 %v724, 7
    %v726 = vsub.s32 %v723, %v725
    %v727 = vrot.slane %v665, %v726
    %v728 = vcombine.high %v727, %v727
    %v731 = vsel %vm709, %v717, %v727
    %v732 = vsel %vm710, %v718, %v728
    %vm733 = vcmask 523264
    %v734 = vsel %vm733, 0.0, 0
    %736 = vmatprep.subr.mxu0 %v667
    %737 = vmatpush1.msra.mxu0 %v666
    %738 = vmatprep.subr.mxu0 %v669
    %739 = vmatpush1.msra.mxu0 %v668
    %740 = vmatprep.subr.mxu0 %v671
    %741 = vmatpush1.msra.mxu0 %v670
    %742 = vmatprep.subr.mxu0 %v673
    %743 = vmatpush1.msra.mxu0 %v672
    %744 = vmatprep.subr.mxu0 %v675
    %745 = vmatpush1.msra.mxu0 %v674
    %746 = vmatprep.subr.mxu0 %v677
    %747 = vmatpush1.msra.mxu0 %v676
    %748 = vmatprep.subr.mxu0 %v679
    %749 = vmatpush1.msra.mxu0 %v678
    %750 = vmatprep.subr.mxu0 %v681
    %751 = vmatpush1.msra.mxu0 %v680
    %752 = vmatprep.subr.mxu0 0.0
    %753 = vmatpush1.msra.mxu0 0.0
    %754 = vmatprep.subr.mxu0 0.0
    %755 = vmatpush1.msra.mxu0 0.0
    %756 = vmatprep.subr.mxu0 0.0
    %757 = vmatpush1.msra.mxu0 0.0
    %758 = vmatprep.subr.mxu0 0.0
    %759 = vmatpush1.msra.mxu0 0.0
    %760 = vmatprep.subr.mxu0 0.0
    %761 = vmatpush1.msra.mxu0 0.0
    %762 = vmatprep.subr.mxu0 0.0
    %763 = vmatpush1.msra.mxu0 0.0
    %764 = vmatprep.subr.mxu0 0.0
    %765 = vmatpush1.msra.mxu0 0.0
    %766 = vmatprep.subr.mxu0 0.0
    %767 = vmatpush1.msra.mxu0 0.0
    %768 = vmatprep.subr.mxu0 0.0
    %769 = vmatpush1.msra.mxu0 0.0
    %770 = vmatprep.subr.mxu0 0.0
    %771 = vmatpush1.msra.mxu0 0.0
    %772 = vmatprep.subr.mxu0 0.0
    %773 = vmatpush1.msra.mxu0 0.0
    %774 = vmatprep.subr.mxu0 0.0
    %775 = vmatpush1.msra.mxu0 0.0
    %776 = vmatprep.subr.mxu0 0.0
    %777 = vmatpush1.msra.mxu0 0.0
    %778 = vmatprep.subr.mxu0 0.0
    %779 = vmatpush1.msra.mxu0 0.0
    %780 = vmatprep.subr.mxu0 0.0
    %781 = vmatpush1.msra.mxu0 0.0
    %782 = vmatprep.subr.mxu0 0.0
    %783 = vmatpush1.msra.mxu0 0.0
    %784 = vmatprep.subr.mxu0 0.0
    %785 = vmatpush1.msra.mxu0 0.0
    %786 = vmatprep.subr.mxu0 0.0
    %787 = vmatpush1.msra.mxu0 0.0
    %788 = vmatprep.subr.mxu0 0.0
    %789 = vmatpush1.msra.mxu0 0.0
    %790 = vmatprep.subr.mxu0 0.0
    %791 = vmatpush1.msra.mxu0 0.0
    %792 = vmatprep.subr.mxu0 0.0
    %793 = vmatpush1.msra.mxu0 0.0
    %794 = vmatprep.subr.mxu0 0.0
    %795 = vmatpush1.msra.mxu0 0.0
    %796 = vmatprep.subr.mxu0 0.0
    %797 = vmatpush1.msra.mxu0 0.0
    %798 = vmatprep.subr.mxu0 0.0
    %799 = vmatpush1.msra.mxu0 0.0
    %800 = vmatprep.mubr.f32.mxu0 0.0
    %801 = vmatmul.mubr.f32.gmra.mrb[0].mxu0 %v734
    %v802 = vpop.f32.mrb[0].mxu0
    %v803 = vadd.f32 0.0, %v802
    %v804 = vpop.f32.mrb[0].mxu0
    %v805 = vadd.f32 0.0, %v804
    %806 = vdwg.mxu0
    %v807 = vadd.f32 %v731, %v803
    %v808 = vadd.f32 %v732, %v805
    %v809 = vxor.u32 %v807, 2147483648
    %v810 = vxor.u32 %v808, 2147483648
    %v811 = vmul.f32 %v809, 1.442695
    %v812 = vpow.pop %v811
    %v813 = vmul.f32 %v810, 1.442695
    %v814 = vpow.pop %v813
    %v815 = vadd.f32 %v812, 1.0
    %v816 = vadd.f32 %v814, 1.0
    %v817 = vrcp.pop %v815
    %v818 = vmul.f32 1.0, %v817
    %v819 = vrcp.pop %v816
    %v820 = vmul.f32 1.0, %v819
    %v821 = vtanh.pop %v808
    %v822 = vmul.f32 %v818, 0.0
    %v823 = vmul.f32 %v818, %v821
    %825 = vrot.lane.b32.xlu0 %v823, 64
    %v826 = vpop.permute.xlu0 %825
    %v828 = vadd.f32 %v822, %v826
    %v829 = vtanh.pop %v828
    %v830 = vmul.f32 %v820, %v829
    %v832 = vunpack.c.l.s4 1983009808
    %v833 = vunpack.c.0.s8 %v832
    %v834 = vlaneseq
    %v835 = vshrl.u32 %v834, 7
    %v836 = vsub.s32 %v833, %v835
    %v837 = vrot.slane %v646, %v836
    %v838 = vcombine.high %v837, %v837
    %v842 = vunpack.c.l.s4 1983009808
    %v843 = vunpack.c.0.s8 %v842
    %v844 = vlaneseq
    %v845 = vshrl.u32 %v844, 7
    %v846 = vsub.s32 %v843, %v845
    %v847 = vrot.slane %v663, %v846
    %v848 = vcombine.high %v847, %v847
    %v851 = vsel %vm709, %v837, %v847
    %v852 = vsel %vm710, %v838, %v848
    %854 = vrot.lane.b32.xlu0 %v830, 64
    %v855 = vpop.permute.xlu0 %854
    %v856 = vsel %vm733, %v855, 0
    %858 = vmatprep.subr.mxu0 %v667
    %859 = vmatpush1.msra.mxu0 %v666
    %860 = vmatprep.subr.mxu0 %v669
    %861 = vmatpush1.msra.mxu0 %v668
    %862 = vmatprep.subr.mxu0 %v671
    %863 = vmatpush1.msra.mxu0 %v670
    %864 = vmatprep.subr.mxu0 %v673
    %865 = vmatpush1.msra.mxu0 %v672
    %866 = vmatprep.subr.mxu0 %v675
    %867 = vmatpush1.msra.mxu0 %v674
    %868 = vmatprep.subr.mxu0 %v677
    %869 = vmatpush1.msra.mxu0 %v676
    %870 = vmatprep.subr.mxu0 %v679
    %871 = vmatpush1.msra.mxu0 %v678
    %872 = vmatprep.subr.mxu0 %v681
    %873 = vmatpush1.msra.mxu0 %v680
    %874 = vmatprep.subr.mxu0 0.0
    %875 = vmatpush1.msra.mxu0 0.0
    %876 = vmatprep.subr.mxu0 0.0
    %877 = vmatpush1.msra.mxu0 0.0
    %878 = vmatprep.subr.mxu0 0.0
    %879 = vmatpush1.msra.mxu0 0.0
    %880 = vmatprep.subr.mxu0 0.0
    %881 = vmatpush1.msra.mxu0 0.0
    %882 = vmatprep.subr.mxu0 0.0
    %883 = vmatpush1.msra.mxu0 0.0
    %884 = vmatprep.subr.mxu0 0.0
    %885 = vmatpush1.msra.mxu0 0.0
    %886 = vmatprep.subr.mxu0 0.0
    %887 = vmatpush1.msra.mxu0 0.0
    %888 = vmatprep.subr.mxu0 0.0
    %889 = vmatpush1.msra.mxu0 0.0
    %890 = vmatprep.subr.mxu0 0.0
    %891 = vmatpush1.msra.mxu0 0.0
    %892 = vmatprep.subr.mxu0 0.0
    %893 = vmatpush1.msra.mxu0 0.0
    %894 = vmatprep.subr.mxu0 0.0
    %895 = vmatpush1.msra.mxu0 0.0
    %896 = vmatprep.subr.mxu0 0.0
    %897 = vmatpush1.msra.mxu0 0.0
    %898 = vmatprep.subr.mxu0 0.0
    %899 = vmatpush1.msra.mxu0 0.0
    %900 = vmatprep.subr.mxu0 0.0
    %901 = vmatpush1.msra.mxu0 0.0
    %902 = vmatprep.subr.mxu0 0.0
    %903 = vmatpush1.msra.mxu0 0.0
    %904 = vmatprep.subr.mxu0 0.0
    %905 = vmatpush1.msra.mxu0 0.0
    %906 = vmatprep.subr.mxu0 0.0
    %907 = vmatpush1.msra.mxu0 0.0
    %908 = vmatprep.subr.mxu0 0.0
    %909 = vmatpush1.msra.mxu0 0.0
    %910 = vmatprep.subr.mxu0 0.0
    %911 = vmatpush1.msra.mxu0 0.0
    %912 = vmatprep.subr.mxu0 0.0
    %913 = vmatpush1.msra.mxu0 0.0
    %914 = vmatprep.subr.mxu0 0.0
    %915 = vmatpush1.msra.mxu0 0.0
    %916 = vmatprep.subr.mxu0 0.0
    %917 = vmatpush1.msra.mxu0 0.0
    %918 = vmatprep.subr.mxu0 0.0
    %919 = vmatpush1.msra.mxu0 0.0
    %920 = vmatprep.subr.mxu0 0.0
    %921 = vmatpush1.msra.mxu0 0.0
    %922 = vmatprep.mubr.f32.mxu0 0.0
    %923 = vmatmul.mubr.f32.gmra.mrb[0].mxu0 %v856
    %v924 = vpop.f32.mrb[0].mxu0
    %v925 = vadd.f32 0.0, %v924
    %v926 = vpop.f32.mrb[0].mxu0
    %v927 = vadd.f32 0.0, %v926
    %928 = vdwg.mxu0
    %v929 = vadd.f32 %v851, %v925
    %v930 = vadd.f32 %v852, %v927
    %v931 = vxor.u32 %v929, 2147483648
    %v932 = vxor.u32 %v930, 2147483648
    %v933 = vmul.f32 %v931, 1.442695
    %v934 = vpow.pop %v933
    %v935 = vmul.f32 %v932, 1.442695
    %v936 = vpow.pop %v935
    %v937 = vadd.f32 %v934, 1.0
    %v938 = vadd.f32 %v936, 1.0
    %v939 = vrcp.pop %v937
    %v940 = vmul.f32 1.0, %v939
    %v941 = vrcp.pop %v938
    %v942 = vmul.f32 1.0, %v941
    %v943 = vtanh.pop %v930
    %v944 = vmul.f32 %v940, %v828
    %v945 = vmul.f32 %v940, %v943
    %947 = vrot.lane.b32.xlu0 %v945, 64
    %v948 = vpop.permute.xlu0 %947
    %v950 = vadd.f32 %v944, %v948
    %v951 = vtanh.pop %v950
    %v952 = vmul.f32 %v942, %v951
    %v954 = vunpack.c.l.s4 1983009808
    %v955 = vunpack.c.0.s8 %v954
    %v956 = vlaneseq
    %v957 = vshrl.u32 %v956, 7
    %v958 = vsub.s32 %v955, %v957
    %v959 = vrot.slane %v645, %v958
    %v960 = vcombine.high %v959, %v959
    %v964 = vunpack.c.l.s4 1983009808
    %v965 = vunpack.c.0.s8 %v964
    %v966 = vlaneseq
    %v967 = vshrl.u32 %v966, 7
    %v968 = vsub.s32 %v965, %v967
    %v969 = vrot.slane %v664, %v968
    %v970 = vcombine.high %v969, %v969
    %v973 = vsel %vm709, %v959, %v969
    %v974 = vsel %vm710, %v960, %v970
    %976 = vrot.lane.b32.xlu0 %v952, 64
    %v977 = vpop.permute.xlu0 %976
    %v978 = vsel %vm733, %v977, 0
    %980 = vmatprep.subr.mxu0 %v667
    %981 = vmatpush1.msra.mxu0 %v666
    %982 = vmatprep.subr.mxu0 %v669
    %983 = vmatpush1.msra.mxu0 %v668
    %984 = vmatprep.subr.mxu0 %v671
    %985 = vmatpush1.msra.mxu0 %v670
    %986 = vmatprep.subr.mxu0 %v673
    %987 = vmatpush1.msra.mxu0 %v672
    %988 = vmatprep.subr.mxu0 %v675
    %989 = vmatpush1.msra.mxu0 %v674
    %990 = vmatprep.subr.mxu0 %v677
    %991 = vmatpush1.msra.mxu0 %v676
    %992 = vmatprep.subr.mxu0 %v679
    %993 = vmatpush1.msra.mxu0 %v678
    %994 = vmatprep.subr.mxu0 %v681
    %995 = vmatpush1.msra.mxu0 %v680
    %996 = vmatprep.subr.mxu0 0.0
    %997 = vmatpush1.msra.mxu0 0.0
    %998 = vmatprep.subr.mxu0 0.0
    %999 = vmatpush1.msra.mxu0 0.0
    %1000 = vmatprep.subr.mxu0 0.0
    %1001 = vmatpush1.msra.mxu0 0.0
    %1002 = vmatprep.subr.mxu0 0.0
    %1003 = vmatpush1.msra.mxu0 0.0
    %1004 = vmatprep.subr.mxu0 0.0
    %1005 = vmatpush1.msra.mxu0 0.0
    %1006 = vmatprep.subr.mxu0 0.0
    %1007 = vmatpush1.msra.mxu0 0.0
    %1008 = vmatprep.subr.mxu0 0.0
    %1009 = vmatpush1.msra.mxu0 0.0
    %1010 = vmatprep.subr.mxu0 0.0
    %1011 = vmatpush1.msra.mxu0 0.0
    %1012 = vmatprep.subr.mxu0 0.0
    %1013 = vmatpush1.msra.mxu0 0.0
    %1014 = vmatprep.subr.mxu0 0.0
    %1015 = vmatpush1.msra.mxu0 0.0
    %1016 = vmatprep.subr.mxu0 0.0
    %1017 = vmatpush1.msra.mxu0 0.0
    %1018 = vmatprep.subr.mxu0 0.0
    %1019 = vmatpush1.msra.mxu0 0.0
    %1020 = vmatprep.subr.mxu0 0.0
    %1021 = vmatpush1.msra.mxu0 0.0
    %1022 = vmatprep.subr.mxu0 0.0
    %1023 = vmatpush1.msra.mxu0 0.0
    %1024 = vmatprep.subr.mxu0 0.0
    %1025 = vmatpush1.msra.mxu0 0.0
    %1026 = vmatprep.subr.mxu0 0.0
    %1027 = vmatpush1.msra.mxu0 0.0
    %1028 = vmatprep.subr.mxu0 0.0
    %1029 = vmatpush1.msra.mxu0 0.0
    %1030 = vmatprep.subr.mxu0 0.0
    %1031 = vmatpush1.msra.mxu0 0.0
    %1032 = vmatprep.subr.mxu0 0.0
    %1033 = vmatpush1.msra.mxu0 0.0
    %1034 = vmatprep.subr.mxu0 0.0
    %1035 = vmatpush1.msra.mxu0 0.0
    %1036 = vmatprep.subr.mxu0 0.0
    %1037 = vmatpush1.msra.mxu0 0.0
    %1038 = vmatprep.subr.mxu0 0.0
    %1039 = vmatpush1.msra.mxu0 0.0
    %1040 = vmatprep.subr.mxu0 0.0
    %1041 = vmatpush1.msra.mxu0 0.0
    %1042 = vmatprep.subr.mxu0 0.0
    %1043 = vmatpush1.msra.mxu0 0.0
    %1044 = vmatprep.mubr.f32.mxu0 0.0
    %1045 = vmatmul.mubr.f32.gmra.mrb[0].mxu0 %v978
    %v1046 = vpop.f32.mrb[0].mxu0
    %v1047 = vadd.f32 0.0, %v1046
    %v1048 = vpop.f32.mrb[0].mxu0
    %v1049 = vadd.f32 0.0, %v1048
    %1050 = vdwg.mxu0
    %v1051 = vadd.f32 %v973, %v1047
    %v1052 = vadd.f32 %v974, %v1049
    %v1053 = vxor.u32 %v1051, 2147483648
    %v1054 = vxor.u32 %v1052, 2147483648
    %v1055 = vmul.f32 %v1053, 1.442695
    %v1056 = vpow.pop %v1055
    %v1057 = vmul.f32 %v1054, 1.442695
    %v1058 = vpow.pop %v1057
    %v1059 = vadd.f32 %v1056, 1.0
    %v1060 = vadd.f32 %v1058, 1.0
    %v1061 = vrcp.pop %v1059
    %v1062 = vmul.f32 1.0, %v1061
    %v1063 = vrcp.pop %v1060
    %v1064 = vmul.f32 1.0, %v1063
    %v1065 = vtanh.pop %v1052
    %v1066 = vmul.f32 %v1062, %v950
    %v1067 = vmul.f32 %v1062, %v1065
    %1069 = vrot.lane.b32.xlu0 %v1067, 64
    %v1070 = vpop.permute.xlu0 %1069
    %v1072 = vadd.f32 %v1066, %v1070
    %v1073 = vtanh.pop %v1072
    %v1074 = vmul.f32 %v1064, %v1073
    %v1076 = vunpack.c.l.s4 1983009808
    %v1077 = vunpack.c.0.s8 %v1076
    %v1078 = vlaneseq
    %v1079 = vshrl.u32 %v1078, 7
    %v1080 = vsub.s32 %v1077, %v1079
    %v1081 = vrot.slane %v647, %v1080
    %v1082 = vcombine.high %v1081, %v1081
    %v1086 = vunpack.c.l.s4 1983009808
    %v1087 = vunpack.c.0.s8 %v1086
    %v1088 = vlaneseq
    %v1089 = vshrl.u32 %v1088, 7
    %v1090 = vsub.s32 %v1087, %v1089
    %v1091 = vrot.slane %v656, %v1090
    %v1092 = vcombine.high %v1091, %v1091
    %v1095 = vsel %vm709, %v1081, %v1091
    %v1096 = vsel %vm710, %v1082, %v1092
    %1098 = vrot.lane.b32.xlu0 %v1074, 64
    %v1099 = vpop.permute.xlu0 %1098
    %v1100 = vsel %vm733, %v1099, 0
    %1102 = vmatprep.subr.mxu0 %v667
    %1103 = vmatpush1.msra.mxu0 %v666
    %1104 = vmatprep.subr.mxu0 %v669
    %1105 = vmatpush1.msra.mxu0 %v668
    %1106 = vmatprep.subr.mxu0 %v671
    %1107 = vmatpush1.msra.mxu0 %v670
    %1108 = vmatprep.subr.mxu0 %v673
    %1109 = vmatpush1.msra.mxu0 %v672
    %1110 = vmatprep.subr.mxu0 %v675
    %1111 = vmatpush1.msra.mxu0 %v674
    %1112 = vmatprep.subr.mxu0 %v677
    %1113 = vmatpush1.msra.mxu0 %v676
    %1114 = vmatprep.subr.mxu0 %v679
    %1115 = vmatpush1.msra.mxu0 %v678
    %1116 = vmatprep.subr.mxu0 %v681
    %1117 = vmatpush1.msra.mxu0 %v680
    %1118 = vmatprep.subr.mxu0 0.0
    %1119 = vmatpush1.msra.mxu0 0.0
    %1120 = vmatprep.subr.mxu0 0.0
    %1121 = vmatpush1.msra.mxu0 0.0
    %1122 = vmatprep.subr.mxu0 0.0
    %1123 = vmatpush1.msra.mxu0 0.0
    %1124 = vmatprep.subr.mxu0 0.0
    %1125 = vmatpush1.msra.mxu0 0.0
    %1126 = vmatprep.subr.mxu0 0.0
    %1127 = vmatpush1.msra.mxu0 0.0
    %1128 = vmatprep.subr.mxu0 0.0
    %1129 = vmatpush1.msra.mxu0 0.0
    %1130 = vmatprep.subr.mxu0 0.0
    %1131 = vmatpush1.msra.mxu0 0.0
    %1132 = vmatprep.subr.mxu0 0.0
    %1133 = vmatpush1.msra.mxu0 0.0
    %1134 = vmatprep.subr.mxu0 0.0
    %1135 = vmatpush1.msra.mxu0 0.0
    %1136 = vmatprep.subr.mxu0 0.0
    %1137 = vmatpush1.msra.mxu0 0.0
    %1138 = vmatprep.subr.mxu0 0.0
    %1139 = vmatpush1.msra.mxu0 0.0
    %1140 = vmatprep.subr.mxu0 0.0
    %1141 = vmatpush1.msra.mxu0 0.0
    %1142 = vmatprep.subr.mxu0 0.0
    %1143 = vmatpush1.msra.mxu0 0.0
    %1144 = vmatprep.subr.mxu0 0.0
    %1145 = vmatpush1.msra.mxu0 0.0
    %1146 = vmatprep.subr.mxu0 0.0
    %1147 = vmatpush1.msra.mxu0 0.0
    %1148 = vmatprep.subr.mxu0 0.0
    %1149 = vmatpush1.msra.mxu0 0.0
    %1150 = vmatprep.subr.mxu0 0.0
    %1151 = vmatpush1.msra.mxu0 0.0
    %1152 = vmatprep.subr.mxu0 0.0
    %1153 = vmatpush1.msra.mxu0 0.0
    %1154 = vmatprep.subr.mxu0 0.0
    %1155 = vmatpush1.msra.mxu0 0.0
    %1156 = vmatprep.subr.mxu0 0.0
    %1157 = vmatpush1.msra.mxu0 0.0
    %1158 = vmatprep.subr.mxu0 0.0
    %1159 = vmatpush1.msra.mxu0 0.0
    %1160 = vmatprep.subr.mxu0 0.0
    %1161 = vmatpush1.msra.mxu0 0.0
    %1162 = vmatprep.subr.mxu0 0.0
    %1163 = vmatpush1.msra.mxu0 0.0
    %1164 = vmatprep.subr.mxu0 0.0
    %1165 = vmatpush1.msra.mxu0 0.0
    %1166 = vmatprep.mubr.f32.mxu0 0.0
    %1167 = vmatmul.mubr.f32.gmra.mrb[0].mxu0 %v1100
    %v1168 = vpop.f32.mrb[0].mxu0
    %v1169 = vadd.f32 0.0, %v1168
    %v1170 = vpop.f32.mrb[0].mxu0
    %v1171 = vadd.f32 0.0, %v1170
    %1172 = vdwg.mxu0
    %v1173 = vadd.f32 %v1095, %v1169
    %v1174 = vadd.f32 %v1096, %v1171
    %v1175 = vxor.u32 %v1173, 2147483648
    %v1176 = vxor.u32 %v1174, 2147483648
    %v1177 = vmul.f32 %v1175, 1.442695
    %v1178 = vpow.pop %v1177
    %v1179 = vmul.f32 %v1176, 1.442695
    %v1180 = vpow.pop %v1179
    %v1181 = vadd.f32 %v1178, 1.0
    %v1182 = vadd.f32 %v1180, 1.0
    %v1183 = vrcp.pop %v1181
    %v1184 = vmul.f32 1.0, %v1183
    %v1185 = vrcp.pop %v1182
    %v1186 = vmul.f32 1.0, %v1185
    %v1187 = vtanh.pop %v1174
    %v1188 = vmul.f32 %v1184, %v1072
    %v1189 = vmul.f32 %v1184, %v1187
    %1191 = vrot.lane.b32.xlu0 %v1189, 64
    %v1192 = vpop.permute.xlu0 %1191
    %v1194 = vadd.f32 %v1188, %v1192
    %v1195 = vtanh.pop %v1194
    %v1196 = vmul.f32 %v1186, %v1195
    %v1197 = vsel %vm709, %v1091, %v1081
    %v1198 = vsel %vm710, %v1092, %v1082
    %1200 = vrot.lane.b32.xlu0 %v1196, 64
    %v1201 = vpop.permute.xlu0 %1200
    %v1202 = vsel %vm733, %v1201, 0
    %1204 = vmatprep.subr.mxu0 %v667
    %1205 = vmatpush1.msra.mxu0 %v666
    %1206 = vmatprep.subr.mxu0 %v669
    %1207 = vmatpush1.msra.mxu0 %v668
    %1208 = vmatprep.subr.mxu0 %v671
    %1209 = vmatpush1.msra.mxu0 %v670
    %1210 = vmatprep.subr.mxu0 %v673
    %1211 = vmatpush1.msra.mxu0 %v672
    %1212 = vmatprep.subr.mxu0 %v675
    %1213 = vmatpush1.msra.mxu0 %v674
    %1214 = vmatprep.subr.mxu0 %v677
    %1215 = vmatpush1.msra.mxu0 %v676
    %1216 = vmatprep.subr.mxu0 %v679
    %1217 = vmatpush1.msra.mxu0 %v678
    %1218 = vmatprep.subr.mxu0 %v681
    %1219 = vmatpush1.msra.mxu0 %v680
    %1220 = vmatprep.subr.mxu0 0.0
    %1221 = vmatpush1.msra.mxu0 0.0
    %1222 = vmatprep.subr.mxu0 0.0
    %1223 = vmatpush1.msra.mxu0 0.0
    %1224 = vmatprep.subr.mxu0 0.0
    %1225 = vmatpush1.msra.mxu0 0.0
    %1226 = vmatprep.subr.mxu0 0.0
    %1227 = vmatpush1.msra.mxu0 0.0
    %1228 = vmatprep.subr.mxu0 0.0
    %1229 = vmatpush1.msra.mxu0 0.0
    %1230 = vmatprep.subr.mxu0 0.0
    %1231 = vmatpush1.msra.mxu0 0.0
    %1232 = vmatprep.subr.mxu0 0.0
    %1233 = vmatpush1.msra.mxu0 0.0
    %1234 = vmatprep.subr.mxu0 0.0
    %1235 = vmatpush1.msra.mxu0 0.0
    %1236 = vmatprep.subr.mxu0 0.0
    %1237 = vmatpush1.msra.mxu0 0.0
    %1238 = vmatprep.subr.mxu0 0.0
    %1239 = vmatpush1.msra.mxu0 0.0
    %1240 = vmatprep.subr.mxu0 0.0
    %1241 = vmatpush1.msra.mxu0 0.0
    %1242 = vmatprep.subr.mxu0 0.0
    %1243 = vmatpush1.msra.mxu0 0.0
    %1244 = vmatprep.subr.mxu0 0.0
    %1245 = vmatpush1.msra.mxu0 0.0
    %1246 = vmatprep.subr.mxu0 0.0
    %1247 = vmatpush1.msra.mxu0 0.0
    %1248 = vmatprep.subr.mxu0 0.0
    %1249 = vmatpush1.msra.mxu0 0.0
    %1250 = vmatprep.subr.mxu0 0.0
    %1251 = vmatpush1.msra.mxu0 0.0
    %1252 = vmatprep.subr.mxu0 0.0
    %1253 = vmatpush1.msra.mxu0 0.0
    %1254 = vmatprep.subr.mxu0 0.0
    %1255 = vmatpush1.msra.mxu0 0.0
    %1256 = vmatprep.subr.mxu0 0.0
    %1257 = vmatpush1.msra.mxu0 0.0
    %1258 = vmatprep.subr.mxu0 0.0
    %1259 = vmatpush1.msra.mxu0 0.0
    %1260 = vmatprep.subr.mxu0 0.0
    %1261 = vmatpush1.msra.mxu0 0.0
    %1262 = vmatprep.subr.mxu0 0.0
    %1263 = vmatpush1.msra.mxu0 0.0
    %1264 = vmatprep.subr.mxu0 0.0
    %1265 = vmatpush1.msra.mxu0 0.0
    %1266 = vmatprep.subr.mxu0 0.0
    %1267 = vmatpush1.msra.mxu0 0.0
    %1268 = vmatprep.mubr.f32.mxu0 0.0
    %1269 = vmatmul.mubr.f32.gmra.mrb[0].mxu0 %v1202
    %v1270 = vpop.f32.mrb[0].mxu0
    %v1271 = vadd.f32 0.0, %v1270
    %v1272 = vpop.f32.mrb[0].mxu0
    %v1273 = vadd.f32 0.0, %v1272
    %1274 = vdwg.mxu0
    %v1275 = vadd.f32 %v1197, %v1271
    %v1276 = vadd.f32 %v1198, %v1273
    %v1277 = vxor.u32 %v1275, 2147483648
    %v1278 = vxor.u32 %v1276, 2147483648
    %v1279 = vmul.f32 %v1277, 1.442695
    %v1280 = vpow.pop %v1279
    %v1281 = vmul.f32 %v1278, 1.442695
    %v1282 = vpow.pop %v1281
    %v1283 = vadd.f32 %v1280, 1.0
    %v1284 = vadd.f32 %v1282, 1.0
    %v1285 = vrcp.pop %v1283
    %v1286 = vmul.f32 1.0, %v1285
    %v1287 = vrcp.pop %v1284
    %v1288 = vmul.f32 1.0, %v1287
    %v1289 = vtanh.pop %v1276
    %v1290 = vmul.f32 %v1286, %v1194
    %v1291 = vmul.f32 %v1286, %v1289
    %1293 = vrot.lane.b32.xlu0 %v1291, 64
    %v1294 = vpop.permute.xlu0 %1293
    %v1296 = vadd.f32 %v1290, %v1294
    %v1297 = vtanh.pop %v1296
    %v1298 = vmul.f32 %v1288, %v1297
    %v1299 = vsel %vm709, %v969, %v959
    %v1300 = vsel %vm710, %v970, %v960
    %1302 = vrot.lane.b32.xlu0 %v1298, 64
    %v1303 = vpop.permute.xlu0 %1302
    %v1304 = vsel %vm733, %v1303, 0
    %1306 = vmatprep.subr.mxu0 %v667
    %1307 = vmatpush1.msra.mxu0 %v666
    %1308 = vmatprep.subr.mxu0 %v669
    %1309 = vmatpush1.msra.mxu0 %v668
    %1310 = vmatprep.subr.mxu0 %v671
    %1311 = vmatpush1.msra.mxu0 %v670
    %1312 = vmatprep.subr.mxu0 %v673
    %1313 = vmatpush1.msra.mxu0 %v672
    %1314 = vmatprep.subr.mxu0 %v675
    %1315 = vmatpush1.msra.mxu0 %v674
    %1316 = vmatprep.subr.mxu0 %v677
    %1317 = vmatpush1.msra.mxu0 %v676
    %1318 = vmatprep.subr.mxu0 %v679
    %1319 = vmatpush1.msra.mxu0 %v678
    %1320 = vmatprep.subr.mxu0 %v681
    %1321 = vmatpush1.msra.mxu0 %v680
    %1322 = vmatprep.subr.mxu0 0.0
    %1323 = vmatpush1.msra.mxu0 0.0
    %1324 = vmatprep.subr.mxu0 0.0
    %1325 = vmatpush1.msra.mxu0 0.0
    %1326 = vmatprep.subr.mxu0 0.0
    %1327 = vmatpush1.msra.mxu0 0.0
    %1328 = vmatprep.subr.mxu0 0.0
    %1329 = vmatpush1.msra.mxu0 0.0
    %1330 = vmatprep.subr.mxu0 0.0
    %1331 = vmatpush1.msra.mxu0 0.0
    %1332 = vmatprep.subr.mxu0 0.0
    %1333 = vmatpush1.msra.mxu0 0.0
    %1334 = vmatprep.subr.mxu0 0.0
    %1335 = vmatpush1.msra.mxu0 0.0
    %1336 = vmatprep.subr.mxu0 0.0
    %1337 = vmatpush1.msra.mxu0 0.0
    %1338 = vmatprep.subr.mxu0 0.0
    %1339 = vmatpush1.msra.mxu0 0.0
    %1340 = vmatprep.subr.mxu0 0.0
    %1341 = vmatpush1.msra.mxu0 0.0
    %1342 = vmatprep.subr.mxu0 0.0
    %1343 = vmatpush1.msra.mxu0 0.0
    %1344 = vmatprep.subr.mxu0 0.0
    %1345 = vmatpush1.msra.mxu0 0.0
    %1346 = vmatprep.subr.mxu0 0.0
    %1347 = vmatpush1.msra.mxu0 0.0
    %1348 = vmatprep.subr.mxu0 0.0
    %1349 = vmatpush1.msra.mxu0 0.0
    %1350 = vmatprep.subr.mxu0 0.0
    %1351 = vmatpush1.msra.mxu0 0.0
    %1352 = vmatprep.subr.mxu0 0.0
    %1353 = vmatpush1.msra.mxu0 0.0
    %1354 = vmatprep.subr.mxu0 0.0
    %1355 = vmatpush1.msra.mxu0 0.0
    %1356 = vmatprep.subr.mxu0 0.0
    %1357 = vmatpush1.msra.mxu0 0.0
    %1358 = vmatprep.subr.mxu0 0.0
    %1359 = vmatpush1.msra.mxu0 0.0
    %1360 = vmatprep.subr.mxu0 0.0
    %1361 = vmatpush1.msra.mxu0 0.0
    %1362 = vmatprep.subr.mxu0 0.0
    %1363 = vmatpush1.msra.mxu0 0.0
    %1364 = vmatprep.subr.mxu0 0.0
    %1365 = vmatpush1.msra.mxu0 0.0
    %1366 = vmatprep.subr.mxu0 0.0
    %1367 = vmatpush1.msra.mxu0 0.0
    %1368 = vmatprep.subr.mxu0 0.0
    %1369 = vmatpush1.msra.mxu0 0.0
    %1370 = vmatprep.mubr.f32.mxu0 0.0
    %1371 = vmatmul.mubr.f32.gmra.mrb[0].mxu0 %v1304
    %v1372 = vpop.f32.mrb[0].mxu0
    %v1373 = vadd.f32 0.0, %v1372
    %v1374 = vpop.f32.mrb[0].mxu0
    %v1375 = vadd.f32 0.0, %v1374
    %1376 = vdwg.mxu0
    %v1377 = vadd.f32 %v1299, %v1373
    %v1378 = vadd.f32 %v1300, %v1375
    %v1379 = vxor.u32 %v1377, 2147483648
    %v1380 = vxor.u32 %v1378, 2147483648
    %v1381 = vmul.f32 %v1379, 1.442695
    %v1382 = vpow.pop %v1381
    %v1383 = vmul.f32 %v1380, 1.442695
    %v1384 = vpow.pop %v1383
    %v1385 = vadd.f32 %v1382, 1.0
    %v1386 = vadd.f32 %v1384, 1.0
    %v1387 = vrcp.pop %v1385
    %v1388 = vmul.f32 1.0, %v1387
    %v1389 = vrcp.pop %v1386
    %v1390 = vmul.f32 1.0, %v1389
    %v1391 = vtanh.pop %v1378
    %v1392 = vmul.f32 %v1388, %v1296
    %v1393 = vmul.f32 %v1388, %v1391
    %1395 = vrot.lane.b32.xlu0 %v1393, 64
    %v1396 = vpop.permute.xlu0 %1395
    %v1398 = vadd.f32 %v1392, %v1396
    %v1399 = vtanh.pop %v1398
    %v1400 = vmul.f32 %v1390, %v1399
    %v1401 = vsel %vm709, %v847, %v837
    %v1402 = vsel %vm710, %v848, %v838
    %1404 = vrot.lane.b32.xlu0 %v1400, 64
    %v1405 = vpop.permute.xlu0 %1404
    %v1406 = vsel %vm733, %v1405, 0
    %1408 = vmatprep.subr.mxu0 %v667
    %1409 = vmatpush1.msra.mxu0 %v666
    %1410 = vmatprep.subr.mxu0 %v669
    %1411 = vmatpush1.msra.mxu0 %v668
    %1412 = vmatprep.subr.mxu0 %v671
    %1413 = vmatpush1.msra.mxu0 %v670
    %1414 = vmatprep.subr.mxu0 %v673
    %1415 = vmatpush1.msra.mxu0 %v672
    %1416 = vmatprep.subr.mxu0 %v675
    %1417 = vmatpush1.msra.mxu0 %v674
    %1418 = vmatprep.subr.mxu0 %v677
    %1419 = vmatpush1.msra.mxu0 %v676
    %1420 = vmatprep.subr.mxu0 %v679
    %1421 = vmatpush1.msra.mxu0 %v678
    %1422 = vmatprep.subr.mxu0 %v681
    %1423 = vmatpush1.msra.mxu0 %v680
    %1424 = vmatprep.subr.mxu0 0.0
    %1425 = vmatpush1.msra.mxu0 0.0
    %1426 = vmatprep.subr.mxu0 0.0
    %1427 = vmatpush1.msra.mxu0 0.0
    %1428 = vmatprep.subr.mxu0 0.0
    %1429 = vmatpush1.msra.mxu0 0.0
    %1430 = vmatprep.subr.mxu0 0.0
    %1431 = vmatpush1.msra.mxu0 0.0
    %1432 = vmatprep.subr.mxu0 0.0
    %1433 = vmatpush1.msra.mxu0 0.0
    %1434 = vmatprep.subr.mxu0 0.0
    %1435 = vmatpush1.msra.mxu0 0.0
    %1436 = vmatprep.subr.mxu0 0.0
    %1437 = vmatpush1.msra.mxu0 0.0
    %1438 = vmatprep.subr.mxu0 0.0
    %1439 = vmatpush1.msra.mxu0 0.0
    %1440 = vmatprep.subr.mxu0 0.0
    %1441 = vmatpush1.msra.mxu0 0.0
    %1442 = vmatprep.subr.mxu0 0.0
    %1443 = vmatpush1.msra.mxu0 0.0
    %1444 = vmatprep.subr.mxu0 0.0
    %1445 = vmatpush1.msra.mxu0 0.0
    %1446 = vmatprep.subr.mxu0 0.0
    %1447 = vmatpush1.msra.mxu0 0.0
    %1448 = vmatprep.subr.mxu0 0.0
    %1449 = vmatpush1.msra.mxu0 0.0
    %1450 = vmatprep.subr.mxu0 0.0
    %1451 = vmatpush1.msra.mxu0 0.0
    %1452 = vmatprep.subr.mxu0 0.0
    %1453 = vmatpush1.msra.mxu0 0.0
    %1454 = vmatprep.subr.mxu0 0.0
    %1455 = vmatpush1.msra.mxu0 0.0
    %1456 = vmatprep.subr.mxu0 0.0
    %1457 = vmatpush1.msra.mxu0 0.0
    %1458 = vmatprep.subr.mxu0 0.0
    %1459 = vmatpush1.msra.mxu0 0.0
    %1460 = vmatprep.subr.mxu0 0.0
    %1461 = vmatpush1.msra.mxu0 0.0
    %1462 = vmatprep.subr.mxu0 0.0
    %1463 = vmatpush1.msra.mxu0 0.0
    %1464 = vmatprep.subr.mxu0 0.0
    %1465 = vmatpush1.msra.mxu0 0.0
    %1466 = vmatprep.subr.mxu0 0.0
    %1467 = vmatpush1.msra.mxu0 0.0
    %1468 = vmatprep.subr.mxu0 0.0
    %1469 = vmatpush1.msra.mxu0 0.0
    %1470 = vmatprep.subr.mxu0 0.0
    %1471 = vmatpush1.msra.mxu0 0.0
    %1472 = vmatprep.mubr.f32.mxu0 0.0
    %1473 = vmatmul.mubr.f32.gmra.mrb[0].mxu0 %v1406
    %v1474 = vpop.f32.mrb[0].mxu0
    %v1475 = vadd.f32 0.0, %v1474
    %v1476 = vpop.f32.mrb[0].mxu0
    %v1477 = vadd.f32 0.0, %v1476
    %1478 = vdwg.mxu0
    %v1479 = vadd.f32 %v1401, %v1475
    %v1480 = vadd.f32 %v1402, %v1477
    %v1481 = vxor.u32 %v1479, 2147483648
    %v1482 = vxor.u32 %v1480, 2147483648
    %v1483 = vmul.f32 %v1481, 1.442695
    %v1484 = vpow.pop %v1483
    %v1485 = vmul.f32 %v1482, 1.442695
    %v1486 = vpow.pop %v1485
    %v1487 = vadd.f32 %v1484, 1.0
    %v1488 = vadd.f32 %v1486, 1.0
    %v1489 = vrcp.pop %v1487
    %v1490 = vmul.f32 1.0, %v1489
    %v1491 = vrcp.pop %v1488
    %v1492 = vmul.f32 1.0, %v1491
    %v1493 = vtanh.pop %v1480
    %v1494 = vmul.f32 %v1490, %v1398
    %v1495 = vmul.f32 %v1490, %v1493
    %1497 = vrot.lane.b32.xlu0 %v1495, 64
    %v1498 = vpop.permute.xlu0 %1497
    %v1500 = vadd.f32 %v1494, %v1498
    %v1501 = vtanh.pop %v1500
    %v1502 = vmul.f32 %v1492, %v1501
    %v1503 = vsel %vm709, %v727, %v717
    %v1504 = vsel %vm710, %v728, %v718
    %1506 = vrot.lane.b32.xlu0 %v1502, 64
    %v1507 = vpop.permute.xlu0 %1506
    %v1508 = vsel %vm733, %v1507, 0
    %1510 = vmatprep.subr.mxu0 %v667
    %1511 = vmatpush1.msra.mxu0 %v666
    %1512 = vmatprep.subr.mxu0 %v669
    %1513 = vmatpush1.msra.mxu0 %v668
    %1514 = vmatprep.subr.mxu0 %v671
    %1515 = vmatpush1.msra.mxu0 %v670
    %1516 = vmatprep.subr.mxu0 %v673
    %1517 = vmatpush1.msra.mxu0 %v672
    %1518 = vmatprep.subr.mxu0 %v675
    %1519 = vmatpush1.msra.mxu0 %v674
    %1520 = vmatprep.subr.mxu0 %v677
    %1521 = vmatpush1.msra.mxu0 %v676
    %1522 = vmatprep.subr.mxu0 %v679
    %1523 = vmatpush1.msra.mxu0 %v678
    %1524 = vmatprep.subr.mxu0 %v681
    %1525 = vmatpush1.msra.mxu0 %v680
    %1526 = vmatprep.subr.mxu0 0.0
    %1527 = vmatpush1.msra.mxu0 0.0
    %1528 = vmatprep.subr.mxu0 0.0
    %1529 = vmatpush1.msra.mxu0 0.0
    %1530 = vmatprep.subr.mxu0 0.0
    %1531 = vmatpush1.msra.mxu0 0.0
    %1532 = vmatprep.subr.mxu0 0.0
    %1533 = vmatpush1.msra.mxu0 0.0
    %1534 = vmatprep.subr.mxu0 0.0
    %1535 = vmatpush1.msra.mxu0 0.0
    %1536 = vmatprep.subr.mxu0 0.0
    %1537 = vmatpush1.msra.mxu0 0.0
    %1538 = vmatprep.subr.mxu0 0.0
    %1539 = vmatpush1.msra.mxu0 0.0
    %1540 = vmatprep.subr.mxu0 0.0
    %1541 = vmatpush1.msra.mxu0 0.0
    %1542 = vmatprep.subr.mxu0 0.0
    %1543 = vmatpush1.msra.mxu0 0.0
    %1544 = vmatprep.subr.mxu0 0.0
    %1545 = vmatpush1.msra.mxu0 0.0
    %1546 = vmatprep.subr.mxu0 0.0
    %1547 = vmatpush1.msra.mxu0 0.0
    %1548 = vmatprep.subr.mxu0 0.0
    %1549 = vmatpush1.msra.mxu0 0.0
    %1550 = vmatprep.subr.mxu0 0.0
    %1551 = vmatpush1.msra.mxu0 0.0
    %1552 = vmatprep.subr.mxu0 0.0
    %1553 = vmatpush1.msra.mxu0 0.0
    %1554 = vmatprep.subr.mxu0 0.0
    %1555 = vmatpush1.msra.mxu0 0.0
    %1556 = vmatprep.subr.mxu0 0.0
    %1557 = vmatpush1.msra.mxu0 0.0
    %1558 = vmatprep.subr.mxu0 0.0
    %1559 = vmatpush1.msra.mxu0 0.0
    %1560 = vmatprep.subr.mxu0 0.0
    %1561 = vmatpush1.msra.mxu0 0.0
    %1562 = vmatprep.subr.mxu0 0.0
    %1563 = vmatpush1.msra.mxu0 0.0
    %1564 = vmatprep.subr.mxu0 0.0
    %1565 = vmatpush1.msra.mxu0 0.0
    %1566 = vmatprep.subr.mxu0 0.0
    %1567 = vmatpush1.msra.mxu0 0.0
    %1568 = vmatprep.subr.mxu0 0.0
    %1569 = vmatpush1.msra.mxu0 0.0
    %1570 = vmatprep.subr.mxu0 0.0
    %1571 = vmatpush1.msra.mxu0 0.0
    %1572 = vmatprep.subr.mxu0 0.0
    %1573 = vmatpush1.msra.mxu0 0.0
    %1574 = vmatprep.mubr.f32.mxu0 0.0
    %1575 = vmatmul.mubr.f32.gmra.mrb[0].mxu0 %v1508
    %v1576 = vpop.f32.mrb[0].mxu0
    %v1577 = vadd.f32 0.0, %v1576
    %v1578 = vpop.f32.mrb[0].mxu0
    %v1579 = vadd.f32 0.0, %v1578
    %1580 = vdwg.mxu0
    %v1581 = vadd.f32 %v1503, %v1577
    %v1582 = vadd.f32 %v1504, %v1579
    %v1583 = vxor.u32 %v1581, 2147483648
    %v1584 = vxor.u32 %v1582, 2147483648
    %v1585 = vmul.f32 %v1583, 1.442695
    %v1586 = vpow.pop %v1585
    %v1587 = vmul.f32 %v1584, 1.442695
    %v1588 = vpow.pop %v1587
    %v1589 = vadd.f32 %v1586, 1.0
    %v1590 = vadd.f32 %v1588, 1.0
    %v1591 = vrcp.pop %v1589
    %v1592 = vmul.f32 1.0, %v1591
    %v1593 = vrcp.pop %v1590
    %v1594 = vmul.f32 1.0, %v1593
    %v1595 = vtanh.pop %v1582
    %v1596 = vmul.f32 %v1592, %v1500
    %v1597 = vmul.f32 %v1592, %v1595
    %1599 = vrot.lane.b32.xlu0 %v1597, 64
    %v1600 = vpop.permute.xlu0 %1599
    %v1602 = vadd.f32 %v1596, %v1600
    %v1603 = vtanh.pop %v1602
    %v1604 = vmul.f32 %v1594, %v1603
    %1607 = vrot.lane.b32.xlu0 %v1604, 64
    %v1608 = vpop.permute.xlu0 %1607
    %vm1610 = vcmask 261120
    %v1611 = vsel %vm1610, %v855, %v1608
    %v1614 = vsel %vm1610, %v977, %v1507
    %v1617 = vsel %vm1610, %v1099, %v1405
    %v1620 = vsel %vm1610, %v1201, %v1303
    %v1621 = vsel %vm1610, %v1303, %v1201
    %v1622 = vsel %vm1610, %v1405, %v1099
    %v1623 = vsel %vm1610, %v1507, %v977
    %v1624 = vsel %vm1610, %v1608, %v855
    %v1626 = vrot.slane %v1614, 6
    %v1629 = vrot.slane %v1617, 4
    %v1632 = vrot.slane %v1620, 2
    %v1635 = vrot.slane %v1622, 6
    %v1638 = vrot.slane %v1623, 4
    %v1641 = vrot.slane %v1624, 2
    %v1643 = vsel %vm439, %v1611, %v1626
    %vm1644 = vcmask 1043456
    %v1645 = vsel %vm1644, %v1643, %v1629
    %vm1646 = vcmask 1045504
    %v1647 = vsel %vm1646, %v1645, %v1632
    %v1648 = vsel %vm439, %v1621, %v1635
    %v1649 = vsel %vm1644, %v1648, %v1638
    %v1650 = vsel %vm1646, %v1649, %v1641
    %v1651 = vld [vmem:[%s3] sm:$0xff]
    %v1652 = vld [vmem:[%s3 + $0x8] sm:$0xff]
    %v1653 = vadd.f32 %v1647, %v1651
    %v1654 = vadd.f32 %v1650, %v1652
    %v1655 = vld [vmem:[%s2] sm:$0xff]
    %v1656 = vld [vmem:[%s2 + $0x8] sm:$0xff]
    %v1657 = vld [vmem:[%s7] sm:$0xff]
    %v1658 = vld [vmem:[%s7 + $0x8] sm:$0x3]
    %v1659 = vld [vmem:[%s21 + $0x1] ss:$0 sm:$0xff]
    %vm1660 = vcmask 80896
    %v1662 = vsel %vm1660, %v1655, 0
    %v1665 = vsel %vm1660, %v1656, 0
    %v1668 = vsel %vm439, %v1658, 0
    %1670 = vmatprep.subr.mxu0 0.0
    %1671 = vmatpush1.msra.mxu0 %v1657
    %1672 = vmatprep.subr.mxu0 0.0
    %1673 = vmatpush1.msra.mxu0 %v1668
    %1674 = vmatprep.subr.mxu0 0.0
    %1675 = vmatpush1.msra.mxu0 0.0
    %1676 = vmatprep.subr.mxu0 0.0
    %1677 = vmatpush1.msra.mxu0 0.0
    %1678 = vmatprep.subr.mxu0 0.0
    %1679 = vmatpush1.msra.mxu0 0.0
    %1680 = vmatprep.subr.mxu0 0.0
    %1681 = vmatpush1.msra.mxu0 0.0
    %1682 = vmatprep.subr.mxu0 0.0
    %1683 = vmatpush1.msra.mxu0 0.0
    %1684 = vmatprep.subr.mxu0 0.0
    %1685 = vmatpush1.msra.mxu0 0.0
    %1686 = vmatprep.subr.mxu0 0.0
    %1687 = vmatpush1.msra.mxu0 0.0
    %1688 = vmatprep.subr.mxu0 0.0
    %1689 = vmatpush1.msra.mxu0 0.0
    %1690 = vmatprep.subr.mxu0 0.0
    %1691 = vmatpush1.msra.mxu0 0.0
    %1692 = vmatprep.subr.mxu0 0.0
    %1693 = vmatpush1.msra.mxu0 0.0
    %1694 = vmatprep.subr.mxu0 0.0
    %1695 = vmatpush1.msra.mxu0 0.0
    %1696 = vmatprep.subr.mxu0 0.0
    %1697 = vmatpush1.msra.mxu0 0.0
    %1698 = vmatprep.subr.mxu0 0.0
    %1699 = vmatpush1.msra.mxu0 0.0
    %1700 = vmatprep.subr.mxu0 0.0
    %1701 = vmatpush1.msra.mxu0 0.0
    %1702 = vmatprep.subr.mxu0 0.0
    %1703 = vmatpush1.msra.mxu0 0.0
    %1704 = vmatprep.subr.mxu0 0.0
    %1705 = vmatpush1.msra.mxu0 0.0
    %1706 = vmatprep.subr.mxu0 0.0
    %1707 = vmatpush1.msra.mxu0 0.0
    %1708 = vmatprep.subr.mxu0 0.0
    %1709 = vmatpush1.msra.mxu0 0.0
    %1710 = vmatprep.subr.mxu0 0.0
    %1711 = vmatpush1.msra.mxu0 0.0
    %1712 = vmatprep.subr.mxu0 0.0
    %1713 = vmatpush1.msra.mxu0 0.0
    %1714 = vmatprep.subr.mxu0 0.0
    %1715 = vmatpush1.msra.mxu0 0.0
    %1716 = vmatprep.subr.mxu0 0.0
    %1717 = vmatpush1.msra.mxu0 0.0
    %1718 = vmatprep.subr.mxu0 0.0
    %1719 = vmatpush1.msra.mxu0 0.0
    %1720 = vmatprep.subr.mxu0 0.0
    %1721 = vmatpush1.msra.mxu0 0.0
    %1722 = vmatprep.subr.mxu0 0.0
    %1723 = vmatpush1.msra.mxu0 0.0
    %1724 = vmatprep.subr.mxu0 0.0
    %1725 = vmatpush1.msra.mxu0 0.0
    %1726 = vmatprep.subr.mxu0 0.0
    %1727 = vmatpush1.msra.mxu0 0.0
    %1728 = vmatprep.subr.mxu0 0.0
    %1729 = vmatpush1.msra.mxu0 0.0
    %1730 = vmatprep.subr.mxu0 0.0
    %1731 = vmatpush1.msra.mxu0 0.0
    %1732 = vmatprep.subr.mxu0 0.0
    %1733 = vmatpush1.msra.mxu0 0.0
    %1734 = vmatprep.mubr.f32.mxu0 0.0
    %1735 = vmatmul.mubr.f32.gmra.mrb[0].mxu0 %v1662
    %v1736 = vpop.f32.mrb[0].mxu0
    %v1737 = vadd.f32 %v1659, %v1736
    %v1738 = vpop.f32.mrb[0].mxu0
    %1739 = vmatprep.mubr.f32.mxu0 0.0
    %1740 = vmatmul.mubr.f32.gmra.mrb[0].mxu0 %v1665
    %v1741 = vpop.f32.mrb[0].mxu0
    %v1742 = vadd.f32 %v1659, %v1741
    %v1743 = vpop.f32.mrb[0].mxu0
    %1744 = vdwg.mxu0
    %v1745 = vmax.f32 %v1737, 0.0
    %v1746 = vmax.f32 %v1742, 0.0
    %v1747 = vld [vmem:[%s8] sm:$0xff]
    %v1748 = vld [vmem:[%s8 + $0x8] sm:$0xff]
    %v1749 = vld [vmem:[%s21 + $0x2] ss:$0 sm:$0xff]
    %v1751 = vsel %vm542, %v1745, 0
    %v1754 = vsel %vm542, %v1746, 0
    %1756 = vmatprep.subr.mxu0 0.0
    %1757 = vmatpush1.msra.mxu0 %v1747
    %1758 = vmatprep.subr.mxu0 0.0
    %1759 = vmatpush1.msra.mxu0 %v1748
    %1760 = vmatprep.subr.mxu0 0.0
    %1761 = vmatpush1.msra.mxu0 0.0
    %1762 = vmatprep.subr.mxu0 0.0
    %1763 = vmatpush1.msra.mxu0 0.0
    %1764 = vmatprep.subr.mxu0 0.0
    %1765 = vmatpush1.msra.mxu0 0.0
    %1766 = vmatprep.subr.mxu0 0.0
    %1767 = vmatpush1.msra.mxu0 0.0
    %1768 = vmatprep.subr.mxu0 0.0
    %1769 = vmatpush1.msra.mxu0 0.0
    %1770 = vmatprep.subr.mxu0 0.0
    %1771 = vmatpush1.msra.mxu0 0.0
    %1772 = vmatprep.subr.mxu0 0.0
    %1773 = vmatpush1.msra.mxu0 0.0
    %1774 = vmatprep.subr.mxu0 0.0
    %1775 = vmatpush1.msra.mxu0 0.0
    %1776 = vmatprep.subr.mxu0 0.0
    %1777 = vmatpush1.msra.mxu0 0.0
    %1778 = vmatprep.subr.mxu0 0.0
    %1779 = vmatpush1.msra.mxu0 0.0
    %1780 = vmatprep.subr.mxu0 0.0
    %1781 = vmatpush1.msra.mxu0 0.0
    %1782 = vmatprep.subr.mxu0 0.0
    %1783 = vmatpush1.msra.mxu0 0.0
    %1784 = vmatprep.subr.mxu0 0.0
    %1785 = vmatpush1.msra.mxu0 0.0
    %1786 = vmatprep.subr.mxu0 0.0
    %1787 = vmatpush1.msra.mxu0 0.0
    %1788 = vmatprep.subr.mxu0 0.0
    %1789 = vmatpush1.msra.mxu0 0.0
    %1790 = vmatprep.subr.mxu0 0.0
    %1791 = vmatpush1.msra.mxu0 0.0
    %1792 = vmatprep.subr.mxu0 0.0
    %1793 = vmatpush1.msra.mxu0 0.0
    %1794 = vmatprep.subr.mxu0 0.0
    %1795 = vmatpush1.msra.mxu0 0.0
    %1796 = vmatprep.subr.mxu0 0.0
    %1797 = vmatpush1.msra.mxu0 0.0
    %1798 = vmatprep.subr.mxu0 0.0
    %1799 = vmatpush1.msra.mxu0 0.0
    %1800 = vmatprep.subr.mxu0 0.0
    %1801 = vmatpush1.msra.mxu0 0.0
    %1802 = vmatprep.subr.mxu0 0.0
    %1803 = vmatpush1.msra.mxu0 0.0
    %1804 = vmatprep.subr.mxu0 0.0
    %1805 = vmatpush1.msra.mxu0 0.0
    %1806 = vmatprep.subr.mxu0 0.0
    %1807 = vmatpush1.msra.mxu0 0.0
    %1808 = vmatprep.subr.mxu0 0.0
    %1809 = vmatpush1.msra.mxu0 0.0
    %1810 = vmatprep.subr.mxu0 0.0
    %1811 = vmatpush1.msra.mxu0 0.0
    %1812 = vmatprep.subr.mxu0 0.0
    %1813 = vmatpush1.msra.mxu0 0.0
    %1814 = vmatprep.subr.mxu0 0.0
    %1815 = vmatpush1.msra.mxu0 0.0
    %1816 = vmatprep.subr.mxu0 0.0
    %1817 = vmatpush1.msra.mxu0 0.0
    %1818 = vmatprep.subr.mxu0 0.0
    %1819 = vmatpush1.msra.mxu0 0.0
    %1820 = vmatprep.mubr.f32.mxu0 0.0
    %1821 = vmatmul.mubr.f32.gmra.mrb[0].mxu0 %v1751
    %v1822 = vpop.f32.mrb[0].mxu0
    %v1823 = vadd.f32 %v1749, %v1822
    %v1824 = vpop.f32.mrb[0].mxu0
    %1825 = vmatprep.mubr.f32.mxu0 0.0
    %1826 = vmatmul.mubr.f32.gmra.mrb[0].mxu0 %v1754
    %v1827 = vpop.f32.mrb[0].mxu0
    %v1828 = vadd.f32 %v1749, %v1827
    %v1829 = vpop.f32.mrb[0].mxu0
    %1830 = vdwg.mxu0
    %v1831 = vsel %vm542, %v1823, 0.0
    %v1832 = vrot.slane %v1831, 4
    %v1833 = vadd.f32 %v1831, %v1832
    %v1834 = vrot.slane %v1833, 2
    %v1835 = vadd.f32 %v1833, %v1834
    %v1836 = vrot.slane %v1835, 1
    %v1837 = vadd.f32 %v1835, %v1836
    %v1838 = vsel %vm542, %v1828, 0.0
    %v1839 = vrot.slane %v1838, 4
    %v1840 = vadd.f32 %v1838, %v1839
    %v1841 = vrot.slane %v1840, 2
    %v1842 = vadd.f32 %v1840, %v1841
    %v1843 = vrot.slane %v1842, 1
    %v1844 = vadd.f32 %v1842, %v1843
    %v1845 = vrcp.pop 8.0
    %v1846 = vmul.f32 %v1837, %v1845
    %v1847 = vmul.f32 %v1844, %v1845
    %vm1850 = vcmask 1041409
    %v1851 = vsel %vm1850, %v1847, %v1846
    %1852 = vrot.lane.b32.xlu0 %v1851, 64
    %v1853 = vpop.permute.xlu0 %1852
    %v1855 = vsel %vm733, %v1608, %v1853
    %v1856 = vld [vmem:[%s9] sm:$0xff]
    %v1857 = vld [vmem:[%s9 + $0x8] sm:$0xff]
    %v1858 = vld [vmem:[%s9 + $0x10] sm:$0xff]
    %v1859 = vld [vmem:[%s9 + $0x18] sm:$0xff]
    %v1860 = vld [vmem:[%s9 + $0x20] sm:$0xff]
    %v1861 = vld [vmem:[%s9 + $0x28] sm:$0xff]
    %v1862 = vld [vmem:[%s9 + $0x30] sm:$0xff]
    %v1863 = vld [vmem:[%s9 + $0x38] sm:$0xff]
    %v1864 = vld [vmem:[%s9 + $0x40] sm:$0xff]
    %v1865 = vld [vmem:[%s9 + $0x48] sm:$0xff]
    %v1866 = vld [vmem:[%s21 + $0x3] ss:$0 sm:$0xff]
    %vm1867 = vcmask 654336
    %v1869 = vsel %vm1867, %v1855, 0
    %1871 = vmatprep.subr.mxu0 0.0
    %1872 = vmatpush1.msra.mxu0 %v1856
    %1873 = vmatprep.subr.mxu0 0.0
    %1874 = vmatpush1.msra.mxu0 %v1857
    %1875 = vmatprep.subr.mxu0 0.0
    %1876 = vmatpush1.msra.mxu0 %v1858
    %1877 = vmatprep.subr.mxu0 0.0
    %1878 = vmatpush1.msra.mxu0 %v1859
    %1879 = vmatprep.subr.mxu0 0.0
    %1880 = vmatpush1.msra.mxu0 %v1860
    %1881 = vmatprep.subr.mxu0 0.0
    %1882 = vmatpush1.msra.mxu0 %v1861
    %1883 = vmatprep.subr.mxu0 0.0
    %1884 = vmatpush1.msra.mxu0 %v1862
    %1885 = vmatprep.subr.mxu0 0.0
    %1886 = vmatpush1.msra.mxu0 %v1863
    %1887 = vmatprep.subr.mxu0 0.0
    %1888 = vmatpush1.msra.mxu0 %v1864
    %1889 = vmatprep.subr.mxu0 0.0
    %1890 = vmatpush1.msra.mxu0 %v1865
    %1891 = vmatprep.subr.mxu0 0.0
    %1892 = vmatpush1.msra.mxu0 0.0
    %1893 = vmatprep.subr.mxu0 0.0
    %1894 = vmatpush1.msra.mxu0 0.0
    %1895 = vmatprep.subr.mxu0 0.0
    %1896 = vmatpush1.msra.mxu0 0.0
    %1897 = vmatprep.subr.mxu0 0.0
    %1898 = vmatpush1.msra.mxu0 0.0
    %1899 = vmatprep.subr.mxu0 0.0
    %1900 = vmatpush1.msra.mxu0 0.0
    %1901 = vmatprep.subr.mxu0 0.0
    %1902 = vmatpush1.msra.mxu0 0.0
    %1903 = vmatprep.subr.mxu0 0.0
    %1904 = vmatpush1.msra.mxu0 0.0
    %1905 = vmatprep.subr.mxu0 0.0
    %1906 = vmatpush1.msra.mxu0 0.0
    %1907 = vmatprep.subr.mxu0 0.0
    %1908 = vmatpush1.msra.mxu0 0.0
    %1909 = vmatprep.subr.mxu0 0.0
    %1910 = vmatpush1.msra.mxu0 0.0
    %1911 = vmatprep.subr.mxu0 0.0
    %1912 = vmatpush1.msra.mxu0 0.0
    %1913 = vmatprep.subr.mxu0 0.0
    %1914 = vmatpush1.msra.mxu0 0.0
    %1915 = vmatprep.subr.mxu0 0.0
    %1916 = vmatpush1.msra.mxu0 0.0
    %1917 = vmatprep.subr.mxu0 0.0
    %1918 = vmatpush1.msra.mxu0 0.0
    %1919 = vmatprep.subr.mxu0 0.0
    %1920 = vmatpush1.msra.mxu0 0.0
    %1921 = vmatprep.subr.mxu0 0.0
    %1922 = vmatpush1.msra.mxu0 0.0
    %1923 = vmatprep.subr.mxu0 0.0
    %1924 = vmatpush1.msra.mxu0 0.0
    %1925 = vmatprep.subr.mxu0 0.0
    %1926 = vmatpush1.msra.mxu0 0.0
    %1927 = vmatprep.subr.mxu0 0.0
    %1928 = vmatpush1.msra.mxu0 0.0
    %1929 = vmatprep.subr.mxu0 0.0
    %1930 = vmatpush1.msra.mxu0 0.0
    %1931 = vmatprep.subr.mxu0 0.0
    %1932 = vmatpush1.msra.mxu0 0.0
    %1933 = vmatprep.subr.mxu0 0.0
    %1934 = vmatpush1.msra.mxu0 0.0
    %1935 = vmatprep.mubr.f32.mxu0 0.0
    %1936 = vmatmul.mubr.f32.gmra.mrb[0].mxu0 %v1869
    %v1937 = vpop.f32.mrb[0].mxu0
    %v1938 = vadd.f32 %v1866, %v1937
    %v1939 = vpop.f32.mrb[0].mxu0
    %1940 = vdwg.mxu0
    %v1941 = vmax.f32 %v1938, 0.0
    %vm1942 = vcmask 517120
    %v1943 = vsel %vm1942, %v1941, 0.0
    %1944 = vadd.xlane.f32.xlu0 %v1943
    %v1945 = vpop.xlane.xlu0 %1944
    %v1946 = vrcp.pop 64.0
    %v1947 = vmul.f32 %v1945, %v1946
    %v1948 = vsub.f32 %v1941, %v1947
    %v1949 = vmul.f32 %v1948, %v1948
    %v1950 = vsel %vm1942, %v1949, 0.0
    %1951 = vadd.xlane.f32.xlu0 %v1950
    %v1952 = vpop.xlane.xlu0 %1951
    %v1953 = vmul.f32 %v1952, %v1946
    %v1954 = vadd.f32 %v1953, 1e-05
    %v1955 = vrsqrt.pop %v1954
    %v1956 = vmul.f32 %v1948, %v1955
    %v1957 = vld [vmem:[%s21 + $0x4] ss:$0 sm:$0xff]
    %v1958 = vmul.f32 %v1956, %v1957
    %v1959 = vld [vmem:[%s21 + $0x5] ss:$0 sm:$0xff]
    %v1960 = vadd.f32 %v1958, %v1959
    %v1961 = vld [vmem:[%s10] sm:$0xff]
    %v1962 = vld [vmem:[%s10 + $0x8] sm:$0xff]
    %v1963 = vld [vmem:[%s10 + $0x10] sm:$0xff]
    %v1964 = vld [vmem:[%s10 + $0x18] sm:$0xff]
    %v1965 = vld [vmem:[%s10 + $0x20] sm:$0xff]
    %v1966 = vld [vmem:[%s10 + $0x28] sm:$0xff]
    %v1967 = vld [vmem:[%s10 + $0x30] sm:$0xff]
    %v1968 = vld [vmem:[%s10 + $0x38] sm:$0xff]
    %v1969 = vld [vmem:[%s21 + $0x6] ss:$0 sm:$0xff]
    %v1971 = vsel %vm733, %v1960, 0
    %1973 = vmatprep.subr.mxu0 0.0
    %1974 = vmatpush1.msra.mxu0 %v1961
    %1975 = vmatprep.subr.mxu0 0.0
    %1976 = vmatpush1.msra.mxu0 %v1962
    %1977 = vmatprep.subr.mxu0 0.0
    %1978 = vmatpush1.msra.mxu0 %v1963
    %1979 = vmatprep.subr.mxu0 0.0
    %1980 = vmatpush1.msra.mxu0 %v1964
    %1981 = vmatprep.subr.mxu0 0.0
    %1982 = vmatpush1.msra.mxu0 %v1965
    %1983 = vmatprep.subr.mxu0 0.0
    %1984 = vmatpush1.msra.mxu0 %v1966
    %1985 = vmatprep.subr.mxu0 0.0
    %1986 = vmatpush1.msra.mxu0 %v1967
    %1987 = vmatprep.subr.mxu0 0.0
    %1988 = vmatpush1.msra.mxu0 %v1968
    %1989 = vmatprep.subr.mxu0 0.0
    %1990 = vmatpush1.msra.mxu0 0.0
    %1991 = vmatprep.subr.mxu0 0.0
    %1992 = vmatpush1.msra.mxu0 0.0
    %1993 = vmatprep.subr.mxu0 0.0
    %1994 = vmatpush1.msra.mxu0 0.0
    %1995 = vmatprep.subr.mxu0 0.0
    %1996 = vmatpush1.msra.mxu0 0.0
    %1997 = vmatprep.subr.mxu0 0.0
    %1998 = vmatpush1.msra.mxu0 0.0
    %1999 = vmatprep.subr.mxu0 0.0
    %2000 = vmatpush1.msra.mxu0 0.0
    %2001 = vmatprep.subr.mxu0 0.0
    %2002 = vmatpush1.msra.mxu0 0.0
    %2003 = vmatprep.subr.mxu0 0.0
    %2004 = vmatpush1.msra.mxu0 0.0
    %2005 = vmatprep.subr.mxu0 0.0
    %2006 = vmatpush1.msra.mxu0 0.0
    %2007 = vmatprep.subr.mxu0 0.0
    %2008 = vmatpush1.msra.mxu0 0.0
    %2009 = vmatprep.subr.mxu0 0.0
    %2010 = vmatpush1.msra.mxu0 0.0
    %2011 = vmatprep.subr.mxu0 0.0
    %2012 = vmatpush1.msra.mxu0 0.0
    %2013 = vmatprep.subr.mxu0 0.0
    %2014 = vmatpush1.msra.mxu0 0.0
    %2015 = vmatprep.subr.mxu0 0.0
    %2016 = vmatpush1.msra.mxu0 0.0
    %2017 = vmatprep.subr.mxu0 0.0
    %2018 = vmatpush1.msra.mxu0 0.0
    %2019 = vmatprep.subr.mxu0 0.0
    %2020 = vmatpush1.msra.mxu0 0.0
    %2021 = vmatprep.subr.mxu0 0.0
    %2022 = vmatpush1.msra.mxu0 0.0
    %2023 = vmatprep.subr.mxu0 0.0
    %2024 = vmatpush1.msra.mxu0 0.0
    %2025 = vmatprep.subr.mxu0 0.0
    %2026 = vmatpush1.msra.mxu0 0.0
    %2027 = vmatprep.subr.mxu0 0.0
    %2028 = vmatpush1.msra.mxu0 0.0
    %2029 = vmatprep.subr.mxu0 0.0
    %2030 = vmatpush1.msra.mxu0 0.0
    %2031 = vmatprep.subr.mxu0 0.0
    %2032 = vmatpush1.msra.mxu0 0.0
    %2033 = vmatprep.subr.mxu0 0.0
    %2034 = vmatpush1.msra.mxu0 0.0
    %2035 = vmatprep.subr.mxu0 0.0
    %2036 = vmatpush1.msra.mxu0 0.0
    %2037 = vmatprep.mubr.f32.mxu0 0.0
    %2038 = vmatmul.mubr.f32.gmra.mrb[0].mxu0 %v1971
    %v2039 = vpop.f32.mrb[0].mxu0
    %v2040 = vadd.f32 %v1969, %v2039
    %v2041 = vpop.f32.mrb[0].mxu0
    %2042 = vdwg.mxu0
    %v2043 = vld [vmem:[%s11] sm:$0xff]
    %v2044 = vld [vmem:[%s11 + $0x8] sm:$0xff]
    %v2045 = vld [vmem:[%s11 + $0x10] sm:$0xff]
    %v2046 = vld [vmem:[%s11 + $0x18] sm:$0xff]
    %v2047 = vld [vmem:[%s11 + $0x20] sm:$0xff]
    %v2048 = vld [vmem:[%s11 + $0x28] sm:$0xff]
    %v2049 = vld [vmem:[%s11 + $0x30] sm:$0xff]
    %v2050 = vld [vmem:[%s11 + $0x38] sm:$0xff]
    %v2051 = vld [vmem:[%s21 + $0x7] ss:$0 sm:$0xff]
    %v2053 = vsel %vm733, %v1653, 0
    %v2056 = vsel %vm733, %v1654, 0
    %2058 = vmatprep.subr.mxu0 0.0
    %2059 = vmatpush1.msra.mxu0 %v2043
    %2060 = vmatprep.subr.mxu0 0.0
    %2061 = vmatpush1.msra.mxu0 %v2044
    %2062 = vmatprep.subr.mxu0 0.0
    %2063 = vmatpush1.msra.mxu0 %v2045
    %2064 = vmatprep.subr.mxu0 0.0
    %2065 = vmatpush1.msra.mxu0 %v2046
    %2066 = vmatprep.subr.mxu0 0.0
    %2067 = vmatpush1.msra.mxu0 %v2047
    %2068 = vmatprep.subr.mxu0 0.0
    %2069 = vmatpush1.msra.mxu0 %v2048
    %2070 = vmatprep.subr.mxu0 0.0
    %2071 = vmatpush1.msra.mxu0 %v2049
    %2072 = vmatprep.subr.mxu0 0.0
    %2073 = vmatpush1.msra.mxu0 %v2050
    %2074 = vmatprep.subr.mxu0 0.0
    %2075 = vmatpush1.msra.mxu0 0.0
    %2076 = vmatprep.subr.mxu0 0.0
    %2077 = vmatpush1.msra.mxu0 0.0
    %2078 = vmatprep.subr.mxu0 0.0
    %2079 = vmatpush1.msra.mxu0 0.0
    %2080 = vmatprep.subr.mxu0 0.0
    %2081 = vmatpush1.msra.mxu0 0.0
    %2082 = vmatprep.subr.mxu0 0.0
    %2083 = vmatpush1.msra.mxu0 0.0
    %2084 = vmatprep.subr.mxu0 0.0
    %2085 = vmatpush1.msra.mxu0 0.0
    %2086 = vmatprep.subr.mxu0 0.0
    %2087 = vmatpush1.msra.mxu0 0.0
    %2088 = vmatprep.subr.mxu0 0.0
    %2089 = vmatpush1.msra.mxu0 0.0
    %2090 = vmatprep.subr.mxu0 0.0
    %2091 = vmatpush1.msra.mxu0 0.0
    %2092 = vmatprep.subr.mxu0 0.0
    %2093 = vmatpush1.msra.mxu0 0.0
    %2094 = vmatprep.subr.mxu0 0.0
    %2095 = vmatpush1.msra.mxu0 0.0
    %2096 = vmatprep.subr.mxu0 0.0
    %2097 = vmatpush1.msra.mxu0 0.0
    %2098 = vmatprep.subr.mxu0 0.0
    %2099 = vmatpush1.msra.mxu0 0.0
    %2100 = vmatprep.subr.mxu0 0.0
    %2101 = vmatpush1.msra.mxu0 0.0
    %2102 = vmatprep.subr.mxu0 0.0
    %2103 = vmatpush1.msra.mxu0 0.0
    %2104 = vmatprep.subr.mxu0 0.0
    %2105 = vmatpush1.msra.mxu0 0.0
    %2106 = vmatprep.subr.mxu0 0.0
    %2107 = vmatpush1.msra.mxu0 0.0
    %2108 = vmatprep.subr.mxu0 0.0
    %2109 = vmatpush1.msra.mxu0 0.0
    %2110 = vmatprep.subr.mxu0 0.0
    %2111 = vmatpush1.msra.mxu0 0.0
    %2112 = vmatprep.subr.mxu0 0.0
    %2113 = vmatpush1.msra.mxu0 0.0
    %2114 = vmatprep.subr.mxu0 0.0
    %2115 = vmatpush1.msra.mxu0 0.0
    %2116 = vmatprep.subr.mxu0 0.0
    %2117 = vmatpush1.msra.mxu0 0.0
    %2118 = vmatprep.subr.mxu0 0.0
    %2119 = vmatpush1.msra.mxu0 0.0
    %2120 = vmatprep.subr.mxu0 0.0
    %2121 = vmatpush1.msra.mxu0 0.0
    %2122 = vmatprep.mubr.f32.mxu0 0.0
    %2123 = vmatmul.mubr.f32.gmra.mrb[0].mxu0 %v2053
    %v2124 = vpop.f32.mrb[0].mxu0
    %v2125 = vadd.f32 %v2051, %v2124
    %v2126 = vpop.f32.mrb[0].mxu0
    %2127 = vmatprep.mubr.f32.mxu0 0.0
    %2128 = vmatmul.mubr.f32.gmra.mrb[0].mxu0 %v2056
    %v2129 = vpop.f32.mrb[0].mxu0
    %v2130 = vadd.f32 %v2051, %v2129
    %v2131 = vpop.f32.mrb[0].mxu0
    %2132 = vdwg.mxu0
    %v2135 = vcombine.high %v2125, %v2125
    %v2137 = vunpack.c.l.s4 1983009808
    %v2138 = vunpack.c.0.s8 %v2137
    %v2139 = vlaneseq
    %v2140 = vshrl.u32 %v2139, 7
    %v2141 = vsub.s32 %v2138, %v2140
    %v2142 = vrot.slane %v2125, %v2141
    %v2144 = vunpack.c.l.s4 1983009808
    %v2145 = vunpack.c.0.s8 %v2144
    %v2146 = vlaneseq
    %v2147 = vshrl.u32 %v2146, 7
    %v2148 = vsub.s32 %v2145, %v2147
    %v2149 = vrot.slane %v2135, %v2148
    %v2150 = vcombine.high %v2142, %v2142
    %v2151 = vcombine.high %v2149, %v2149
    %v2152 = vcombine.high %v2130, %v2130
    %v2154 = vunpack.c.l.s4 1983009808
    %v2155 = vunpack.c.0.s8 %v2154
    %v2156 = vlaneseq
    %v2157 = vshrl.u32 %v2156, 7
    %v2158 = vsub.s32 %v2155, %v2157
    %v2159 = vrot.slane %v2130, %v2158
    %v2161 = vunpack.c.l.s4 1983009808
    %v2162 = vunpack.c.0.s8 %v2161
    %v2163 = vlaneseq
    %v2164 = vshrl.u32 %v2163, 7
    %v2165 = vsub.s32 %v2162, %v2164
    %v2166 = vrot.slane %v2152, %v2165
    %v2167 = vcombine.high %v2159, %v2159
    %v2168 = vcombine.high %v2166, %v2166
    %v2177 = vmul.f32 %v2142, %v2040
    %v2178 = vmul.f32 %v2150, %v2040
    %v2179 = vmul.f32 %v2149, %v2040
    %v2180 = vmul.f32 %v2151, %v2040
    %v2181 = vmul.f32 %v2159, %v2040
    %v2182 = vmul.f32 %v2167, %v2040
    %v2183 = vmul.f32 %v2166, %v2040
    %v2184 = vmul.f32 %v2168, %v2040
    %v2185 = vld [vmem:[%s19] sm:$0xff]
    %v2186 = vld [vmem:[%s19 + $0x8] sm:$0xff]
    %v2187 = vld [vmem:[%s19 + $0x10] sm:$0xff]
    %v2188 = vld [vmem:[%s19 + $0x18] sm:$0xff]
    %v2189 = vld [vmem:[%s19 + $0x20] sm:$0xff]
    %v2190 = vld [vmem:[%s19 + $0x28] sm:$0xff]
    %v2191 = vld [vmem:[%s19 + $0x30] sm:$0xff]
    %v2192 = vld [vmem:[%s19 + $0x38] sm:$0xff]
    %v2201 = vcombine.low %v2177, %v2178
    %v2202 = vcombine.low %v2179, %v2180
    %v2204 = vunpack.c.l.s4 1983009808
    %v2205 = vunpack.c.0.s8 %v2204
    %v2206 = vlaneseq
    %v2207 = vshrl.u32 %v2206, 7
    %v2208 = vsub.s32 %v2205, %v2207
    %v2209 = vrot.slane %v2201, %v2208
    %v2211 = vunpack.c.l.s4 1983009808
    %v2212 = vunpack.c.0.s8 %v2211
    %v2213 = vlaneseq
    %v2214 = vshrl.u32 %v2213, 7
    %v2215 = vsub.s32 %v2212, %v2214
    %v2216 = vrot.slane %v2202, %v2215
    %v2217 = vcombine.low %v2209, %v2216
    %v2218 = vcombine.low %v2181, %v2182
    %v2219 = vcombine.low %v2183, %v2184
    %v2221 = vunpack.c.l.s4 1983009808
    %v2222 = vunpack.c.0.s8 %v2221
    %v2223 = vlaneseq
    %v2224 = vshrl.u32 %v2223, 7
    %v2225 = vsub.s32 %v2222, %v2224
    %v2226 = vrot.slane %v2218, %v2225
    %v2228 = vunpack.c.l.s4 1983009808
    %v2229 = vunpack.c.0.s8 %v2228
    %v2230 = vlaneseq
    %v2231 = vshrl.u32 %v2230, 7
    %v2232 = vsub.s32 %v2229, %v2231
    %v2233 = vrot.slane %v2219, %v2232
    %v2234 = vcombine.low %v2226, %v2233
    %v2235 = vsel %vm733, %v2217, 0
    %v2237 = vsel %vm733, %v2234, 0
    %2239 = vmatprep.subr.mxu0 0.0
    %2240 = vmatpush1.msra.mxu0 %v2185
    %2241 = vmatprep.subr.mxu0 0.0
    %2242 = vmatpush1.msra.mxu0 %v2186
    %2243 = vmatprep.subr.mxu0 0.0
    %2244 = vmatpush1.msra.mxu0 %v2187
    %2245 = vmatprep.subr.mxu0 0.0
    %2246 = vmatpush1.msra.mxu0 %v2188
    %2247 = vmatprep.subr.mxu0 0.0
    %2248 = vmatpush1.msra.mxu0 %v2189
    %2249 = vmatprep.subr.mxu0 0.0
    %2250 = vmatpush1.msra.mxu0 %v2190
    %2251 = vmatprep.subr.mxu0 0.0
    %2252 = vmatpush1.msra.mxu0 %v2191
    %2253 = vmatprep.subr.mxu0 0.0
    %2254 = vmatpush1.msra.mxu0 %v2192
    %2255 = vmatprep.subr.mxu0 0.0
    %2256 = vmatpush1.msra.mxu0 0.0
    %2257 = vmatprep.subr.mxu0 0.0
    %2258 = vmatpush1.msra.mxu0 0.0
    %2259 = vmatprep.subr.mxu0 0.0
    %2260 = vmatpush1.msra.mxu0 0.0
    %2261 = vmatprep.subr.mxu0 0.0
    %2262 = vmatpush1.msra.mxu0 0.0
    %2263 = vmatprep.subr.mxu0 0.0
    %2264 = vmatpush1.msra.mxu0 0.0
    %2265 = vmatprep.subr.mxu0 0.0
    %2266 = vmatpush1.msra.mxu0 0.0
    %2267 = vmatprep.subr.mxu0 0.0
    %2268 = vmatpush1.msra.mxu0 0.0
    %2269 = vmatprep.subr.mxu0 0.0
    %2270 = vmatpush1.msra.mxu0 0.0
    %2271 = vmatprep.subr.mxu0 0.0
    %2272 = vmatpush1.msra.mxu0 0.0
    %2273 = vmatprep.subr.mxu0 0.0
    %2274 = vmatpush1.msra.mxu0 0.0
    %2275 = vmatprep.subr.mxu0 0.0
    %2276 = vmatpush1.msra.mxu0 0.0
    %2277 = vmatprep.subr.mxu0 0.0
    %2278 = vmatpush1.msra.mxu0 0.0
    %2279 = vmatprep.subr.mxu0 0.0
    %2280 = vmatpush1.msra.mxu0 0.0
    %2281 = vmatprep.subr.mxu0 0.0
    %2282 = vmatpush1.msra.mxu0 0.0
    %2283 = vmatprep.subr.mxu0 0.0
    %2284 = vmatpush1.msra.mxu0 0.0
    %2285 = vmatprep.subr.mxu0 0.0
    %2286 = vmatpush1.msra.mxu0 0.0
    %2287 = vmatprep.subr.mxu0 0.0
    %2288 = vmatpush1.msra.mxu0 0.0
    %2289 = vmatprep.subr.mxu0 0.0
    %2290 = vmatpush1.msra.mxu0 0.0
    %2291 = vmatprep.subr.mxu0 0.0
    %2292 = vmatpush1.msra.mxu0 0.0
    %2293 = vmatprep.subr.mxu0 0.0
    %2294 = vmatpush1.msra.mxu0 0.0
    %2295 = vmatprep.subr.mxu0 0.0
    %2296 = vmatpush1.msra.mxu0 0.0
    %2297 = vmatprep.subr.mxu0 0.0
    %2298 = vmatpush1.msra.mxu0 0.0
    %2299 = vmatprep.subr.mxu0 0.0
    %2300 = vmatpush1.msra.mxu0 0.0
    %2301 = vmatprep.subr.mxu0 0.0
    %2302 = vmatpush1.msra.mxu0 0.0
    %2303 = vmatprep.mubr.f32.mxu0 0.0
    %2304 = vmatmul.mubr.f32.gmra.mrb[0].mxu0 %v2235
    %v2305 = vpop.f32.mrb[0].mxu0
    %v2306 = vadd.f32 0.0, %v2305
    %v2307 = vpop.f32.mrb[0].mxu0
    %2308 = vmatprep.mubr.f32.mxu0 0.0
    %2309 = vmatmul.mubr.f32.gmra.mrb[0].mxu0 %v2237
    %v2310 = vpop.f32.mrb[0].mxu0
    %v2311 = vadd.f32 0.0, %v2310
    %v2312 = vpop.f32.mrb[0].mxu0
    %2313 = vdwg.mxu0
    %v2316 = vcombine.high %v2306, %v2306
    %v2318 = vunpack.c.l.s4 1983009808
    %v2319 = vunpack.c.0.s8 %v2318
    %v2320 = vlaneseq
    %v2321 = vshrl.u32 %v2320, 7
    %v2322 = vsub.s32 %v2319, %v2321
    %v2323 = vrot.slane %v2306, %v2322
    %v2325 = vunpack.c.l.s4 1983009808
    %v2326 = vunpack.c.0.s8 %v2325
    %v2327 = vlaneseq
    %v2328 = vshrl.u32 %v2327, 7
    %v2329 = vsub.s32 %v2326, %v2328
    %v2330 = vrot.slane %v2316, %v2329
    %v2331 = vcombine.high %v2323, %v2323
    %v2332 = vcombine.high %v2330, %v2330
    %v2333 = vcombine.high %v2311, %v2311
    %v2335 = vunpack.c.l.s4 1983009808
    %v2336 = vunpack.c.0.s8 %v2335
    %v2337 = vlaneseq
    %v2338 = vshrl.u32 %v2337, 7
    %v2339 = vsub.s32 %v2336, %v2338
    %v2340 = vrot.slane %v2311, %v2339
    %v2342 = vunpack.c.l.s4 1983009808
    %v2343 = vunpack.c.0.s8 %v2342
    %v2344 = vlaneseq
    %v2345 = vshrl.u32 %v2344, 7
    %v2346 = vsub.s32 %v2343, %v2345
    %v2347 = vrot.slane %v2333, %v2346
    %v2348 = vcombine.high %v2340, %v2340
    %v2349 = vcombine.high %v2347, %v2347
    %vm2358 = vcmask 58368
    %v2359 = vsel %vm2358, %v2323, -inf
    %v2360 = vsel %vm2358, %v2331, -inf
    %v2361 = vsel %vm2358, %v2330, -inf
    %v2362 = vsel %vm2358, %v2332, -inf
    %v2363 = vsel %vm2358, %v2340, -inf
    %v2364 = vmax.f32 %v2359, %v2363
    %v2365 = vsel %vm2358, %v2348, -inf
    %v2366 = vmax.f32 %v2360, %v2365
    %v2367 = vsel %vm2358, %v2347, -inf
    %v2368 = vmax.f32 %v2361, %v2367
    %v2369 = vsel %vm2358, %v2349, -inf
    %v2370 = vmax.f32 %v2362, %v2369
    %v2371 = vmax.f32 %v2364, %v2366
    %v2372 = vmax.f32 %v2368, %v2370
    %v2373 = vmax.f32 %v2371, %v2372
    %v2374 = vsub.f32 %v2323, %v2373
    %v2375 = vsub.f32 %v2331, %v2373
    %v2376 = vsub.f32 %v2330, %v2373
    %v2377 = vsub.f32 %v2332, %v2373
    %v2378 = vsub.f32 %v2340, %v2373
    %v2379 = vsub.f32 %v2348, %v2373
    %v2380 = vsub.f32 %v2347, %v2373
    %v2381 = vsub.f32 %v2349, %v2373
    %v2382 = vmul.f32 %v2374, 1.442695
    %v2383 = vpow.pop %v2382
    %v2384 = vmul.f32 %v2375, 1.442695
    %v2385 = vpow.pop %v2384
    %v2386 = vmul.f32 %v2376, 1.442695
    %v2387 = vpow.pop %v2386
    %v2388 = vmul.f32 %v2377, 1.442695
    %v2389 = vpow.pop %v2388
    %v2390 = vmul.f32 %v2378, 1.442695
    %v2391 = vpow.pop %v2390
    %v2392 = vmul.f32 %v2379, 1.442695
    %v2393 = vpow.pop %v2392
    %v2394 = vmul.f32 %v2380, 1.442695
    %v2395 = vpow.pop %v2394
    %v2396 = vmul.f32 %v2381, 1.442695
    %v2397 = vpow.pop %v2396
    %v2398 = vsel %vm2358, %v2383, 0.0
    %v2399 = vsel %vm2358, %v2385, 0.0
    %v2400 = vadd.f32 %v2398, %v2399
    %v2401 = vsel %vm2358, %v2387, 0.0
    %v2402 = vadd.f32 %v2400, %v2401
    %v2403 = vsel %vm2358, %v2389, 0.0
    %v2404 = vadd.f32 %v2402, %v2403
    %v2405 = vsel %vm2358, %v2391, 0.0
    %v2406 = vadd.f32 %v2404, %v2405
    %v2407 = vsel %vm2358, %v2393, 0.0
    %v2408 = vadd.f32 %v2406, %v2407
    %v2409 = vsel %vm2358, %v2395, 0.0
    %v2410 = vadd.f32 %v2408, %v2409
    %v2411 = vsel %vm2358, %v2397, 0.0
    %v2412 = vadd.f32 %v2410, %v2411
    %v2413 = vrcp.pop %v2412
    %v2414 = vmul.f32 %v2383, %v2413
    %v2415 = vmul.f32 %v2385, %v2413
    %v2416 = vmul.f32 %v2387, %v2413
    %v2417 = vmul.f32 %v2389, %v2413
    %v2418 = vmul.f32 %v2391, %v2413
    %v2419 = vmul.f32 %v2393, %v2413
    %v2420 = vmul.f32 %v2395, %v2413
    %v2421 = vmul.f32 %v2397, %v2413
    %v2422 = vld [vmem:[%s20] sm:$0xff]
    %v2431 = vcombine.low %v2414, %v2415
    %v2432 = vcombine.low %v2416, %v2417
    %v2434 = vunpack.c.l.s4 1983009808
    %v2435 = vunpack.c.0.s8 %v2434
    %v2436 = vlaneseq
    %v2437 = vshrl.u32 %v2436, 7
    %v2438 = vsub.s32 %v2435, %v2437
    %v2439 = vrot.slane %v2431, %v2438
    %v2441 = vunpack.c.l.s4 1983009808
    %v2442 = vunpack.c.0.s8 %v2441
    %v2443 = vlaneseq
    %v2444 = vshrl.u32 %v2443, 7
    %v2445 = vsub.s32 %v2442, %v2444
    %v2446 = vrot.slane %v2432, %v2445
    %v2447 = vcombine.low %v2439, %v2446
    %v2448 = vcombine.low %v2418, %v2419
    %v2449 = vcombine.low %v2420, %v2421
    %v2451 = vunpack.c.l.s4 1983009808
    %v2452 = vunpack.c.0.s8 %v2451
    %v2453 = vlaneseq
    %v2454 = vshrl.u32 %v2453, 7
    %v2455 = vsub.s32 %v2452, %v2454
    %v2456 = vrot.slane %v2448, %v2455
    %v2458 = vunpack.c.l.s4 1983009808
    %v2459 = vunpack.c.0.s8 %v2458
    %v2460 = vlaneseq
    %v2461 = vshrl.u32 %v2460, 7
    %v2462 = vsub.s32 %v2459, %v2461
    %v2463 = vrot.slane %v2449, %v2462
    %v2464 = vcombine.low %v2456, %v2463
    %vm2465 = vcmask 64512
    %v2466 = vsel %vm2465, %v2447, 0
    %v2468 = vsel %vm2465, %v2464, 0
    %2470 = vmatprep.subr.mxu0 0.0
    %2471 = vmatpush1.msra.mxu0 %v2422
    %2472 = vmatprep.subr.mxu0 0.0
    %2473 = vmatpush1.msra.mxu0 0.0
    %2474 = vmatprep.subr.mxu0 0.0
    %2475 = vmatpush1.msra.mxu0 0.0
    %2476 = vmatprep.subr.mxu0 0.0
    %2477 = vmatpush1.msra.mxu0 0.0
    %2478 = vmatprep.subr.mxu0 0.0
    %2479 = vmatpush1.msra.mxu0 0.0
    %2480 = vmatprep.subr.mxu0 0.0
    %2481 = vmatpush1.msra.mxu0 0.0
    %2482 = vmatprep.subr.mxu0 0.0
    %2483 = vmatpush1.msra.mxu0 0.0
    %2484 = vmatprep.subr.mxu0 0.0
    %2485 = vmatpush1.msra.mxu0 0.0
    %2486 = vmatprep.subr.mxu0 0.0
    %2487 = vmatpush1.msra.mxu0 0.0
    %2488 = vmatprep.subr.mxu0 0.0
    %2489 = vmatpush1.msra.mxu0 0.0
    %2490 = vmatprep.subr.mxu0 0.0
    %2491 = vmatpush1.msra.mxu0 0.0
    %2492 = vmatprep.subr.mxu0 0.0
    %2493 = vmatpush1.msra.mxu0 0.0
    %2494 = vmatprep.subr.mxu0 0.0
    %2495 = vmatpush1.msra.mxu0 0.0
    %2496 = vmatprep.subr.mxu0 0.0
    %2497 = vmatpush1.msra.mxu0 0.0
    %2498 = vmatprep.subr.mxu0 0.0
    %2499 = vmatpush1.msra.mxu0 0.0
    %2500 = vmatprep.subr.mxu0 0.0
    %2501 = vmatpush1.msra.mxu0 0.0
    %2502 = vmatprep.subr.mxu0 0.0
    %2503 = vmatpush1.msra.mxu0 0.0
    %2504 = vmatprep.subr.mxu0 0.0
    %2505 = vmatpush1.msra.mxu0 0.0
    %2506 = vmatprep.subr.mxu0 0.0
    %2507 = vmatpush1.msra.mxu0 0.0
    %2508 = vmatprep.subr.mxu0 0.0
    %2509 = vmatpush1.msra.mxu0 0.0
    %2510 = vmatprep.subr.mxu0 0.0
    %2511 = vmatpush1.msra.mxu0 0.0
    %2512 = vmatprep.subr.mxu0 0.0
    %2513 = vmatpush1.msra.mxu0 0.0
    %2514 = vmatprep.subr.mxu0 0.0
    %2515 = vmatpush1.msra.mxu0 0.0
    %2516 = vmatprep.subr.mxu0 0.0
    %2517 = vmatpush1.msra.mxu0 0.0
    %2518 = vmatprep.subr.mxu0 0.0
    %2519 = vmatpush1.msra.mxu0 0.0
    %2520 = vmatprep.subr.mxu0 0.0
    %2521 = vmatpush1.msra.mxu0 0.0
    %2522 = vmatprep.subr.mxu0 0.0
    %2523 = vmatpush1.msra.mxu0 0.0
    %2524 = vmatprep.subr.mxu0 0.0
    %2525 = vmatpush1.msra.mxu0 0.0
    %2526 = vmatprep.subr.mxu0 0.0
    %2527 = vmatpush1.msra.mxu0 0.0
    %2528 = vmatprep.subr.mxu0 0.0
    %2529 = vmatpush1.msra.mxu0 0.0
    %2530 = vmatprep.subr.mxu0 0.0
    %2531 = vmatpush1.msra.mxu0 0.0
    %2532 = vmatprep.subr.mxu0 0.0
    %2533 = vmatpush1.msra.mxu0 0.0
    %2534 = vmatprep.mubr.f32.mxu0 0.0
    %2535 = vmatmul.mubr.f32.gmra.mrb[0].mxu0 %v2466
    %v2536 = vpop.f32.mrb[0].mxu0
    %v2537 = vadd.f32 0.0, %v2536
    %v2538 = vpop.f32.mrb[0].mxu0
    %2539 = vmatprep.mubr.f32.mxu0 0.0
    %2540 = vmatmul.mubr.f32.gmra.mrb[0].mxu0 %v2468
    %v2541 = vpop.f32.mrb[0].mxu0
    %v2542 = vadd.f32 0.0, %v2541
    %v2543 = vpop.f32.mrb[0].mxu0
    %2544 = vdwg.mxu0
    %2545 = vrot.lane.b32.xlu0 %v2125, 64
    %v2546 = vpop.permute.xlu0 %2545
    %2547 = vrot.lane.b32.xlu0 %v2130, 64
    %v2548 = vpop.permute.xlu0 %2547
    %v2551 = vmul.f32 %v2537, %v2546
    %v2552 = vmul.f32 %v2542, %v2548
    %v2555 = vcombine.high %v2551, %v2551
    %v2557 = vunpack.c.l.s4 1983009808
    %v2558 = vunpack.c.0.s8 %v2557
    %v2559 = vlaneseq
    %v2560 = vshrl.u32 %v2559, 7
    %v2561 = vsub.s32 %v2558, %v2560
    %v2562 = vrot.slane %v2551, %v2561
    %v2564 = vunpack.c.l.s4 1983009808
    %v2565 = vunpack.c.0.s8 %v2564
    %v2566 = vlaneseq
    %v2567 = vshrl.u32 %v2566, 7
    %v2568 = vsub.s32 %v2565, %v2567
    %v2569 = vrot.slane %v2555, %v2568
    %v2570 = vcombine.high %v2562, %v2562
    %v2571 = vcombine.high %v2569, %v2569
    %v2572 = vcombine.high %v2552, %v2552
    %v2574 = vunpack.c.l.s4 1983009808
    %v2575 = vunpack.c.0.s8 %v2574
    %v2576 = vlaneseq
    %v2577 = vshrl.u32 %v2576, 7
    %v2578 = vsub.s32 %v2575, %v2577
    %v2579 = vrot.slane %v2552, %v2578
    %v2581 = vunpack.c.l.s4 1983009808
    %v2582 = vunpack.c.0.s8 %v2581
    %v2583 = vlaneseq
    %v2584 = vshrl.u32 %v2583, 7
    %v2585 = vsub.s32 %v2582, %v2584
    %v2586 = vrot.slane %v2572, %v2585
    %v2587 = vcombine.high %v2579, %v2579
    %v2588 = vcombine.high %v2586, %v2586
    %v2597 = vsel %vm1942, %v2562, 0.0
    %v2598 = vsel %vm1942, %v2570, 0.0
    %v2599 = vadd.f32 %v2597, %v2598
    %v2600 = vsel %vm1942, %v2569, 0.0
    %v2601 = vadd.f32 %v2599, %v2600
    %v2602 = vsel %vm1942, %v2571, 0.0
    %v2603 = vadd.f32 %v2601, %v2602
    %v2604 = vsel %vm1942, %v2579, 0.0
    %v2605 = vadd.f32 %v2603, %v2604
    %v2606 = vsel %vm1942, %v2587, 0.0
    %v2607 = vadd.f32 %v2605, %v2606
    %v2608 = vsel %vm1942, %v2586, 0.0
    %v2609 = vadd.f32 %v2607, %v2608
    %v2610 = vsel %vm1942, %v2588, 0.0
    %v2611 = vadd.f32 %v2609, %v2610
    %v2612 = vld [vmem:[%s12] sm:$0xff]
    %v2613 = vld [vmem:[%s12 + $0x8] sm:$0xff]
    %v2614 = vld [vmem:[%s12 + $0x10] sm:$0xff]
    %v2615 = vld [vmem:[%s12 + $0x18] sm:$0xff]
    %v2616 = vld [vmem:[%s12 + $0x20] sm:$0xff]
    %v2617 = vld [vmem:[%s12 + $0x28] sm:$0xff]
    %v2618 = vld [vmem:[%s12 + $0x30] sm:$0xff]
    %v2619 = vld [vmem:[%s12 + $0x38] sm:$0xff]
    %v2620 = vld [vmem:[%s21 + $0x10] ss:$0 sm:$0xff]
    %v2622 = vsel %vm733, %v2611, 0
    %2624 = vmatprep.subr.mxu0 0.0
    %2625 = vmatpush1.msra.mxu0 %v2612
    %2626 = vmatprep.subr.mxu0 0.0
    %2627 = vmatpush1.msra.mxu0 %v2613
    %2628 = vmatprep.subr.mxu0 0.0
    %2629 = vmatpush1.msra.mxu0 %v2614
    %2630 = vmatprep.subr.mxu0 0.0
    %2631 = vmatpush1.msra.mxu0 %v2615
    %2632 = vmatprep.subr.mxu0 0.0
    %2633 = vmatpush1.msra.mxu0 %v2616
    %2634 = vmatprep.subr.mxu0 0.0
    %2635 = vmatpush1.msra.mxu0 %v2617
    %2636 = vmatprep.subr.mxu0 0.0
    %2637 = vmatpush1.msra.mxu0 %v2618
    %2638 = vmatprep.subr.mxu0 0.0
    %2639 = vmatpush1.msra.mxu0 %v2619
    %2640 = vmatprep.subr.mxu0 0.0
    %2641 = vmatpush1.msra.mxu0 0.0
    %2642 = vmatprep.subr.mxu0 0.0
    %2643 = vmatpush1.msra.mxu0 0.0
    %2644 = vmatprep.subr.mxu0 0.0
    %2645 = vmatpush1.msra.mxu0 0.0
    %2646 = vmatprep.subr.mxu0 0.0
    %2647 = vmatpush1.msra.mxu0 0.0
    %2648 = vmatprep.subr.mxu0 0.0
    %2649 = vmatpush1.msra.mxu0 0.0
    %2650 = vmatprep.subr.mxu0 0.0
    %2651 = vmatpush1.msra.mxu0 0.0
    %2652 = vmatprep.subr.mxu0 0.0
    %2653 = vmatpush1.msra.mxu0 0.0
    %2654 = vmatprep.subr.mxu0 0.0
    %2655 = vmatpush1.msra.mxu0 0.0
    %2656 = vmatprep.subr.mxu0 0.0
    %2657 = vmatpush1.msra.mxu0 0.0
    %2658 = vmatprep.subr.mxu0 0.0
    %2659 = vmatpush1.msra.mxu0 0.0
    %2660 = vmatprep.subr.mxu0 0.0
    %2661 = vmatpush1.msra.mxu0 0.0
    %2662 = vmatprep.subr.mxu0 0.0
    %2663 = vmatpush1.msra.mxu0 0.0
    %2664 = vmatprep.subr.mxu0 0.0
    %2665 = vmatpush1.msra.mxu0 0.0
    %2666 = vmatprep.subr.mxu0 0.0
    %2667 = vmatpush1.msra.mxu0 0.0
    %2668 = vmatprep.subr.mxu0 0.0
    %2669 = vmatpush1.msra.mxu0 0.0
    %2670 = vmatprep.subr.mxu0 0.0
    %2671 = vmatpush1.msra.mxu0 0.0
    %2672 = vmatprep.subr.mxu0 0.0
    %2673 = vmatpush1.msra.mxu0 0.0
    %2674 = vmatprep.subr.mxu0 0.0
    %2675 = vmatpush1.msra.mxu0 0.0
    %2676 = vmatprep.subr.mxu0 0.0
    %2677 = vmatpush1.msra.mxu0 0.0
    %2678 = vmatprep.subr.mxu0 0.0
    %2679 = vmatpush1.msra.mxu0 0.0
    %2680 = vmatprep.subr.mxu0 0.0
    %2681 = vmatpush1.msra.mxu0 0.0
    %2682 = vmatprep.subr.mxu0 0.0
    %2683 = vmatpush1.msra.mxu0 0.0
    %2684 = vmatprep.subr.mxu0 0.0
    %2685 = vmatpush1.msra.mxu0 0.0
    %2686 = vmatprep.subr.mxu0 0.0
    %2687 = vmatpush1.msra.mxu0 0.0
    %2688 = vmatprep.mubr.f32.mxu0 0.0
    %2689 = vmatmul.mubr.f32.gmra.mrb[0].mxu0 %v2622
    %v2690 = vpop.f32.mrb[0].mxu0
    %v2691 = vadd.f32 %v2620, %v2690
    %v2692 = vpop.f32.mrb[0].mxu0
    %2693 = vdwg.mxu0
    %v2694 = vld [vmem:[%s13] sm:$0xff]
    %v2695 = vld [vmem:[%s13 + $0x8] sm:$0xff]
    %v2696 = vld [vmem:[%s13 + $0x10] sm:$0xff]
    %v2697 = vld [vmem:[%s13 + $0x18] sm:$0xff]
    %v2698 = vld [vmem:[%s13 + $0x20] sm:$0xff]
    %v2699 = vld [vmem:[%s13 + $0x28] sm:$0xff]
    %v2700 = vld [vmem:[%s13 + $0x30] sm:$0xff]
    %v2701 = vld [vmem:[%s13 + $0x38] sm:$0xff]
    %v2702 = vld [vmem:[%s21 + $0x11] ss:$0 sm:$0xff]
    %v2704 = vsel %vm733, %v2691, 0
    %2706 = vmatprep.subr.mxu0 0.0
    %2707 = vmatpush1.msra.mxu0 %v2694
    %2708 = vmatprep.subr.mxu0 0.0
    %2709 = vmatpush1.msra.mxu0 %v2695
    %2710 = vmatprep.subr.mxu0 0.0
    %2711 = vmatpush1.msra.mxu0 %v2696
    %2712 = vmatprep.subr.mxu0 0.0
    %2713 = vmatpush1.msra.mxu0 %v2697
    %2714 = vmatprep.subr.mxu0 0.0
    %2715 = vmatpush1.msra.mxu0 %v2698
    %2716 = vmatprep.subr.mxu0 0.0
    %2717 = vmatpush1.msra.mxu0 %v2699
    %2718 = vmatprep.subr.mxu0 0.0
    %2719 = vmatpush1.msra.mxu0 %v2700
    %2720 = vmatprep.subr.mxu0 0.0
    %2721 = vmatpush1.msra.mxu0 %v2701
    %2722 = vmatprep.subr.mxu0 0.0
    %2723 = vmatpush1.msra.mxu0 0.0
    %2724 = vmatprep.subr.mxu0 0.0
    %2725 = vmatpush1.msra.mxu0 0.0
    %2726 = vmatprep.subr.mxu0 0.0
    %2727 = vmatpush1.msra.mxu0 0.0
    %2728 = vmatprep.subr.mxu0 0.0
    %2729 = vmatpush1.msra.mxu0 0.0
    %2730 = vmatprep.subr.mxu0 0.0
    %2731 = vmatpush1.msra.mxu0 0.0
    %2732 = vmatprep.subr.mxu0 0.0
    %2733 = vmatpush1.msra.mxu0 0.0
    %2734 = vmatprep.subr.mxu0 0.0
    %2735 = vmatpush1.msra.mxu0 0.0
    %2736 = vmatprep.subr.mxu0 0.0
    %2737 = vmatpush1.msra.mxu0 0.0
    %2738 = vmatprep.subr.mxu0 0.0
    %2739 = vmatpush1.msra.mxu0 0.0
    %2740 = vmatprep.subr.mxu0 0.0
    %2741 = vmatpush1.msra.mxu0 0.0
    %2742 = vmatprep.subr.mxu0 0.0
    %2743 = vmatpush1.msra.mxu0 0.0
    %2744 = vmatprep.subr.mxu0 0.0
    %2745 = vmatpush1.msra.mxu0 0.0
    %2746 = vmatprep.subr.mxu0 0.0
    %2747 = vmatpush1.msra.mxu0 0.0
    %2748 = vmatprep.subr.mxu0 0.0
    %2749 = vmatpush1.msra.mxu0 0.0
    %2750 = vmatprep.subr.mxu0 0.0
    %2751 = vmatpush1.msra.mxu0 0.0
    %2752 = vmatprep.subr.mxu0 0.0
    %2753 = vmatpush1.msra.mxu0 0.0
    %2754 = vmatprep.subr.mxu0 0.0
    %2755 = vmatpush1.msra.mxu0 0.0
    %2756 = vmatprep.subr.mxu0 0.0
    %2757 = vmatpush1.msra.mxu0 0.0
    %2758 = vmatprep.subr.mxu0 0.0
    %2759 = vmatpush1.msra.mxu0 0.0
    %2760 = vmatprep.subr.mxu0 0.0
    %2761 = vmatpush1.msra.mxu0 0.0
    %2762 = vmatprep.subr.mxu0 0.0
    %2763 = vmatpush1.msra.mxu0 0.0
    %2764 = vmatprep.subr.mxu0 0.0
    %2765 = vmatpush1.msra.mxu0 0.0
    %2766 = vmatprep.subr.mxu0 0.0
    %2767 = vmatpush1.msra.mxu0 0.0
    %2768 = vmatprep.subr.mxu0 0.0
    %2769 = vmatpush1.msra.mxu0 0.0
    %2770 = vmatprep.mubr.f32.mxu0 0.0
    %2771 = vmatmul.mubr.f32.gmra.mrb[0].mxu0 %v2704
    %v2772 = vpop.f32.mrb[0].mxu0
    %v2773 = vadd.f32 %v2702, %v2772
    %v2774 = vpop.f32.mrb[0].mxu0
    %2775 = vdwg.mxu0
    %v2776 = vmax.f32 %v2773, 0.0
    %v2777 = vld [vmem:[%s21 + $0x12] ss:$0 sm:$0xff]
    %v2778 = vmul.f32 %v2776, %v2777
    %vm2779 = vcmask 254976
    %v2780 = vsel %vm2779, %v2778, 0.0
    %2781 = vadd.xlane.f32.xlu0 %v2780
    %v2782 = vpop.xlane.xlu0 %2781
    %s2783 = sld [smem:[#allocation2 + $0x2]]
    %v2784 = vstv %s2783
    %v2785 = vadd.f32 %v2782, %v2784
    %vm2786 = vcmask 1024
    %2787 = vst.msk [vmem:[%s23] sm:$0x3] %vm2786, %v2785
    %v2788 = vxor.u32 %v2785, 2147483648
    %v2789 = vmul.f32 %v2788, 1.442695
    %v2790 = vpow.pop %v2789
    %v2791 = vadd.f32 %v2790, 1.0
    %v2792 = vrcp.pop %v2791
    %v2793 = vmul.f32 1.0, %v2792
    %s2794 = scalar_lea.vmem %s1, 14
    %v2795 = vld [vmem:[%s2794] sm:$0x3]
    %v2796 = vld [vmem:[%s17] sm:$0xff]
    %v2797 = vld [vmem:[%s17 + $0x8] sm:$0xff]
    %v2798 = vld [vmem:[%s17 + $0x10] sm:$0xff]
    %v2799 = vld [vmem:[%s17 + $0x18] sm:$0x3f]
    %v2800 = vld [vmem:[%s21 + $0x16] ss:$0 sm:$0xff]
    %v2802 = vsel %vm235, %v2795, 0
    %v2805 = vsel %vm1646, %v2799, 0
    %2807 = vmatprep.subr.mxu0 0.0
    %2808 = vmatpush1.msra.mxu0 %v2796
    %2809 = vmatprep.subr.mxu0 0.0
    %2810 = vmatpush1.msra.mxu0 %v2797
    %2811 = vmatprep.subr.mxu0 0.0
    %2812 = vmatpush1.msra.mxu0 %v2798
    %2813 = vmatprep.subr.mxu0 0.0
    %2814 = vmatpush1.msra.mxu0 %v2805
    %2815 = vmatprep.subr.mxu0 0.0
    %2816 = vmatpush1.msra.mxu0 0.0
    %2817 = vmatprep.subr.mxu0 0.0
    %2818 = vmatpush1.msra.mxu0 0.0
    %2819 = vmatprep.subr.mxu0 0.0
    %2820 = vmatpush1.msra.mxu0 0.0
    %2821 = vmatprep.subr.mxu0 0.0
    %2822 = vmatpush1.msra.mxu0 0.0
    %2823 = vmatprep.subr.mxu0 0.0
    %2824 = vmatpush1.msra.mxu0 0.0
    %2825 = vmatprep.subr.mxu0 0.0
    %2826 = vmatpush1.msra.mxu0 0.0
    %2827 = vmatprep.subr.mxu0 0.0
    %2828 = vmatpush1.msra.mxu0 0.0
    %2829 = vmatprep.subr.mxu0 0.0
    %2830 = vmatpush1.msra.mxu0 0.0
    %2831 = vmatprep.subr.mxu0 0.0
    %2832 = vmatpush1.msra.mxu0 0.0
    %2833 = vmatprep.subr.mxu0 0.0
    %2834 = vmatpush1.msra.mxu0 0.0
    %2835 = vmatprep.subr.mxu0 0.0
    %2836 = vmatpush1.msra.mxu0 0.0
    %2837 = vmatprep.subr.mxu0 0.0
    %2838 = vmatpush1.msra.mxu0 0.0
    %2839 = vmatprep.subr.mxu0 0.0
    %2840 = vmatpush1.msra.mxu0 0.0
    %2841 = vmatprep.subr.mxu0 0.0
    %2842 = vmatpush1.msra.mxu0 0.0
    %2843 = vmatprep.subr.mxu0 0.0
    %2844 = vmatpush1.msra.mxu0 0.0
    %2845 = vmatprep.subr.mxu0 0.0
    %2846 = vmatpush1.msra.mxu0 0.0
    %2847 = vmatprep.subr.mxu0 0.0
    %2848 = vmatpush1.msra.mxu0 0.0
    %2849 = vmatprep.subr.mxu0 0.0
    %2850 = vmatpush1.msra.mxu0 0.0
    %2851 = vmatprep.subr.mxu0 0.0
    %2852 = vmatpush1.msra.mxu0 0.0
    %2853 = vmatprep.subr.mxu0 0.0
    %2854 = vmatpush1.msra.mxu0 0.0
    %2855 = vmatprep.subr.mxu0 0.0
    %2856 = vmatpush1.msra.mxu0 0.0
    %2857 = vmatprep.subr.mxu0 0.0
    %2858 = vmatpush1.msra.mxu0 0.0
    %2859 = vmatprep.subr.mxu0 0.0
    %2860 = vmatpush1.msra.mxu0 0.0
    %2861 = vmatprep.subr.mxu0 0.0
    %2862 = vmatpush1.msra.mxu0 0.0
    %2863 = vmatprep.subr.mxu0 0.0
    %2864 = vmatpush1.msra.mxu0 0.0
    %2865 = vmatprep.subr.mxu0 0.0
    %2866 = vmatpush1.msra.mxu0 0.0
    %2867 = vmatprep.subr.mxu0 0.0
    %2868 = vmatpush1.msra.mxu0 0.0
    %2869 = vmatprep.subr.mxu0 0.0
    %2870 = vmatpush1.msra.mxu0 0.0
    %2871 = vmatprep.mubr.f32.mxu0 0.0
    %2872 = vmatmul.mubr.f32.gmra.mrb[0].mxu0 %v2802
    %v2873 = vpop.f32.mrb[0].mxu0
    %v2874 = vadd.f32 %v2800, %v2873
    %v2875 = vpop.f32.mrb[0].mxu0
    %2876 = vdwg.mxu0
    %v2877 = vmax.f32 %v2874, 0.0
    %v2878 = vld [vmem:[%s18] sm:$0xff]
    %v2879 = vld [vmem:[%s18 + $0x8] sm:$0xff]
    %v2880 = vld [vmem:[%s18 + $0x10] sm:$0xff]
    %v2881 = vld [vmem:[%s18 + $0x18] sm:$0xff]
    %v2882 = vld [vmem:[%s21 + $0x17] ss:$0 sm:$0xff]
    %v2884 = vsel %vm1610, %v2877, 0
    %2886 = vmatprep.subr.mxu0 0.0
    %2887 = vmatpush1.msra.mxu0 %v2878
    %2888 = vmatprep.subr.mxu0 0.0
    %2889 = vmatpush1.msra.mxu0 %v2879
    %2890 = vmatprep.subr.mxu0 0.0
    %2891 = vmatpush1.msra.mxu0 %v2880
    %2892 = vmatprep.subr.mxu0 0.0
    %2893 = vmatpush1.msra.mxu0 %v2881
    %2894 = vmatprep.subr.mxu0 0.0
    %2895 = vmatpush1.msra.mxu0 0.0
    %2896 = vmatprep.subr.mxu0 0.0
    %2897 = vmatpush1.msra.mxu0 0.0
    %2898 = vmatprep.subr.mxu0 0.0
    %2899 = vmatpush1.msra.mxu0 0.0
    %2900 = vmatprep.subr.mxu0 0.0
    %2901 = vmatpush1.msra.mxu0 0.0
    %2902 = vmatprep.subr.mxu0 0.0
    %2903 = vmatpush1.msra.mxu0 0.0
    %2904 = vmatprep.subr.mxu0 0.0
    %2905 = vmatpush1.msra.mxu0 0.0
    %2906 = vmatprep.subr.mxu0 0.0
    %2907 = vmatpush1.msra.mxu0 0.0
    %2908 = vmatprep.subr.mxu0 0.0
    %2909 = vmatpush1.msra.mxu0 0.0
    %2910 = vmatprep.subr.mxu0 0.0
    %2911 = vmatpush1.msra.mxu0 0.0
    %2912 = vmatprep.subr.mxu0 0.0
    %2913 = vmatpush1.msra.mxu0 0.0
    %2914 = vmatprep.subr.mxu0 0.0
    %2915 = vmatpush1.msra.mxu0 0.0
    %2916 = vmatprep.subr.mxu0 0.0
    %2917 = vmatpush1.msra.mxu0 0.0
    %2918 = vmatprep.subr.mxu0 0.0
    %2919 = vmatpush1.msra.mxu0 0.0
    %2920 = vmatprep.subr.mxu0 0.0
    %2921 = vmatpush1.msra.mxu0 0.0
    %2922 = vmatprep.subr.mxu0 0.0
    %2923 = vmatpush1.msra.mxu0 0.0
    %2924 = vmatprep.subr.mxu0 0.0
    %2925 = vmatpush1.msra.mxu0 0.0
    %2926 = vmatprep.subr.mxu0 0.0
    %2927 = vmatpush1.msra.mxu0 0.0
    %2928 = vmatprep.subr.mxu0 0.0
    %2929 = vmatpush1.msra.mxu0 0.0
    %2930 = vmatprep.subr.mxu0 0.0
    %2931 = vmatpush1.msra.mxu0 0.0
    %2932 = vmatprep.subr.mxu0 0.0
    %2933 = vmatpush1.msra.mxu0 0.0
    %2934 = vmatprep.subr.mxu0 0.0
    %2935 = vmatpush1.msra.mxu0 0.0
    %2936 = vmatprep.subr.mxu0 0.0
    %2937 = vmatpush1.msra.mxu0 0.0
    %2938 = vmatprep.subr.mxu0 0.0
    %2939 = vmatpush1.msra.mxu0 0.0
    %2940 = vmatprep.subr.mxu0 0.0
    %2941 = vmatpush1.msra.mxu0 0.0
    %2942 = vmatprep.subr.mxu0 0.0
    %2943 = vmatpush1.msra.mxu0 0.0
    %2944 = vmatprep.subr.mxu0 0.0
    %2945 = vmatpush1.msra.mxu0 0.0
    %2946 = vmatprep.subr.mxu0 0.0
    %2947 = vmatpush1.msra.mxu0 0.0
    %2948 = vmatprep.subr.mxu0 0.0
    %2949 = vmatpush1.msra.mxu0 0.0
    %2950 = vmatprep.mubr.f32.mxu0 0.0
    %2951 = vmatmul.mubr.f32.gmra.mrb[0].mxu0 %v2884
    %v2952 = vpop.f32.mrb[0].mxu0
    %v2953 = vadd.f32 %v2882, %v2952
    %v2954 = vpop.f32.mrb[0].mxu0
    %2955 = vdwg.mxu0
    %v2956 = vtanh.pop %v2953
    %v2957 = vmul.f32 %v2956, %v2793
    %v2958 = vld [vmem:[%s14] sm:$0xff]
    %v2959 = vld [vmem:[%s14 + $0x8] sm:$0xff]
    %v2960 = vld [vmem:[%s14 + $0x10] sm:$0xff]
    %v2961 = vld [vmem:[%s14 + $0x18] sm:$0xff]
    %v2962 = vld [vmem:[%s14 + $0x20] sm:$0xff]
    %v2963 = vld [vmem:[%s14 + $0x28] sm:$0xff]
    %v2964 = vld [vmem:[%s14 + $0x30] sm:$0xff]
    %v2965 = vld [vmem:[%s14 + $0x38] sm:$0xff]
    %v2966 = vld [vmem:[%s21 + $0x13] ss:$0 sm:$0xff]
    %2967 = vmatprep.subr.mxu0 0.0
    %2968 = vmatpush1.msra.mxu0 %v2958
    %2969 = vmatprep.subr.mxu0 0.0
    %2970 = vmatpush1.msra.mxu0 %v2959
    %2971 = vmatprep.subr.mxu0 0.0
    %2972 = vmatpush1.msra.mxu0 %v2960
    %2973 = vmatprep.subr.mxu0 0.0
    %2974 = vmatpush1.msra.mxu0 %v2961
    %2975 = vmatprep.subr.mxu0 0.0
    %2976 = vmatpush1.msra.mxu0 %v2962
    %2977 = vmatprep.subr.mxu0 0.0
    %2978 = vmatpush1.msra.mxu0 %v2963
    %2979 = vmatprep.subr.mxu0 0.0
    %2980 = vmatpush1.msra.mxu0 %v2964
    %2981 = vmatprep.subr.mxu0 0.0
    %2982 = vmatpush1.msra.mxu0 %v2965
    %2983 = vmatprep.subr.mxu0 0.0
    %2984 = vmatpush1.msra.mxu0 0.0
    %2985 = vmatprep.subr.mxu0 0.0
    %2986 = vmatpush1.msra.mxu0 0.0
    %2987 = vmatprep.subr.mxu0 0.0
    %2988 = vmatpush1.msra.mxu0 0.0
    %2989 = vmatprep.subr.mxu0 0.0
    %2990 = vmatpush1.msra.mxu0 0.0
    %2991 = vmatprep.subr.mxu0 0.0
    %2992 = vmatpush1.msra.mxu0 0.0
    %2993 = vmatprep.subr.mxu0 0.0
    %2994 = vmatpush1.msra.mxu0 0.0
    %2995 = vmatprep.subr.mxu0 0.0
    %2996 = vmatpush1.msra.mxu0 0.0
    %2997 = vmatprep.subr.mxu0 0.0
    %2998 = vmatpush1.msra.mxu0 0.0
    %2999 = vmatprep.subr.mxu0 0.0
    %3000 = vmatpush1.msra.mxu0 0.0
    %3001 = vmatprep.subr.mxu0 0.0
    %3002 = vmatpush1.msra.mxu0 0.0
    %3003 = vmatprep.subr.mxu0 0.0
    %3004 = vmatpush1.msra.mxu0 0.0
    %3005 = vmatprep.subr.mxu0 0.0
    %3006 = vmatpush1.msra.mxu0 0.0
    %3007 = vmatprep.subr.mxu0 0.0
    %3008 = vmatpush1.msra.mxu0 0.0
    %3009 = vmatprep.subr.mxu0 0.0
    %3010 = vmatpush1.msra.mxu0 0.0
    %3011 = vmatprep.subr.mxu0 0.0
    %3012 = vmatpush1.msra.mxu0 0.0
    %3013 = vmatprep.subr.mxu0 0.0
    %3014 = vmatpush1.msra.mxu0 0.0
    %3015 = vmatprep.subr.mxu0 0.0
    %3016 = vmatpush1.msra.mxu0 0.0
    %3017 = vmatprep.subr.mxu0 0.0
    %3018 = vmatpush1.msra.mxu0 0.0
    %3019 = vmatprep.subr.mxu0 0.0
    %3020 = vmatpush1.msra.mxu0 0.0
    %3021 = vmatprep.subr.mxu0 0.0
    %3022 = vmatpush1.msra.mxu0 0.0
    %3023 = vmatprep.subr.mxu0 0.0
    %3024 = vmatpush1.msra.mxu0 0.0
    %3025 = vmatprep.subr.mxu0 0.0
    %3026 = vmatpush1.msra.mxu0 0.0
    %3027 = vmatprep.subr.mxu0 0.0
    %3028 = vmatpush1.msra.mxu0 0.0
    %3029 = vmatprep.subr.mxu0 0.0
    %3030 = vmatpush1.msra.mxu0 0.0
    %3031 = vmatprep.mubr.f32.mxu0 0.0
    %3032 = vmatmul.mubr.f32.gmra.mrb[0].mxu0 %v2704
    %v3033 = vpop.f32.mrb[0].mxu0
    %v3034 = vadd.f32 %v2966, %v3033
    %v3035 = vpop.f32.mrb[0].mxu0
    %3036 = vdwg.mxu0
    %v3037 = vmax.f32 %v3034, 0.0
    %v3038 = vld [vmem:[%s15] sm:$0xff]
    %v3039 = vld [vmem:[%s15 + $0x8] sm:$0xff]
    %v3040 = vld [vmem:[%s15 + $0x10] sm:$0xff]
    %v3041 = vld [vmem:[%s15 + $0x18] sm:$0xff]
    %v3042 = vld [vmem:[%s15 + $0x20] sm:$0xff]
    %v3043 = vld [vmem:[%s15 + $0x28] sm:$0xff]
    %v3044 = vld [vmem:[%s15 + $0x30] sm:$0xff]
    %v3045 = vld [vmem:[%s15 + $0x38] sm:$0xff]
    %v3046 = vld [vmem:[%s15 + $0x40] sm:$0xff]
    %v3047 = vld [vmem:[%s15 + $0x48] sm:$0xff]
    %v3048 = vld [vmem:[%s15 + $0x50] sm:$0xff]
    %v3049 = vld [vmem:[%s15 + $0x58] sm:$0xff]
    %v3050 = vld [vmem:[%s21 + $0x14] ss:$0 sm:$0xff]
    %vm3051 = vcmask 785408
    %v3053 = vsel %vm3051, %v3037, 0
    %3055 = vmatprep.subr.mxu0 0.0
    %3056 = vmatpush1.msra.mxu0 %v3038
    %3057 = vmatprep.subr.mxu0 0.0
    %3058 = vmatpush1.msra.mxu0 %v3039
    %3059 = vmatprep.subr.mxu0 0.0
    %3060 = vmatpush1.msra.mxu0 %v3040
    %3061 = vmatprep.subr.mxu0 0.0
    %3062 = vmatpush1.msra.mxu0 %v3041
    %3063 = vmatprep.subr.mxu0 0.0
    %3064 = vmatpush1.msra.mxu0 %v3042
    %3065 = vmatprep.subr.mxu0 0.0
    %3066 = vmatpush1.msra.mxu0 %v3043
    %3067 = vmatprep.subr.mxu0 0.0
    %3068 = vmatpush1.msra.mxu0 %v3044
    %3069 = vmatprep.subr.mxu0 0.0
    %3070 = vmatpush1.msra.mxu0 %v3045
    %3071 = vmatprep.subr.mxu0 0.0
    %3072 = vmatpush1.msra.mxu0 %v3046
    %3073 = vmatprep.subr.mxu0 0.0
    %3074 = vmatpush1.msra.mxu0 %v3047
    %3075 = vmatprep.subr.mxu0 0.0
    %3076 = vmatpush1.msra.mxu0 %v3048
    %3077 = vmatprep.subr.mxu0 0.0
    %3078 = vmatpush1.msra.mxu0 %v3049
    %3079 = vmatprep.subr.mxu0 0.0
    %3080 = vmatpush1.msra.mxu0 0.0
    %3081 = vmatprep.subr.mxu0 0.0
    %3082 = vmatpush1.msra.mxu0 0.0
    %3083 = vmatprep.subr.mxu0 0.0
    %3084 = vmatpush1.msra.mxu0 0.0
    %3085 = vmatprep.subr.mxu0 0.0
    %3086 = vmatpush1.msra.mxu0 0.0
    %3087 = vmatprep.subr.mxu0 0.0
    %3088 = vmatpush1.msra.mxu0 0.0
    %3089 = vmatprep.subr.mxu0 0.0
    %3090 = vmatpush1.msra.mxu0 0.0
    %3091 = vmatprep.subr.mxu0 0.0
    %3092 = vmatpush1.msra.mxu0 0.0
    %3093 = vmatprep.subr.mxu0 0.0
    %3094 = vmatpush1.msra.mxu0 0.0
    %3095 = vmatprep.subr.mxu0 0.0
    %3096 = vmatpush1.msra.mxu0 0.0
    %3097 = vmatprep.subr.mxu0 0.0
    %3098 = vmatpush1.msra.mxu0 0.0
    %3099 = vmatprep.subr.mxu0 0.0
    %3100 = vmatpush1.msra.mxu0 0.0
    %3101 = vmatprep.subr.mxu0 0.0
    %3102 = vmatpush1.msra.mxu0 0.0
    %3103 = vmatprep.subr.mxu0 0.0
    %3104 = vmatpush1.msra.mxu0 0.0
    %3105 = vmatprep.subr.mxu0 0.0
    %3106 = vmatpush1.msra.mxu0 0.0
    %3107 = vmatprep.subr.mxu0 0.0
    %3108 = vmatpush1.msra.mxu0 0.0
    %3109 = vmatprep.subr.mxu0 0.0
    %3110 = vmatpush1.msra.mxu0 0.0
    %3111 = vmatprep.subr.mxu0 0.0
    %3112 = vmatpush1.msra.mxu0 0.0
    %3113 = vmatprep.subr.mxu0 0.0
    %3114 = vmatpush1.msra.mxu0 0.0
    %3115 = vmatprep.subr.mxu0 0.0
    %3116 = vmatpush1.msra.mxu0 0.0
    %3117 = vmatprep.subr.mxu0 0.0
    %3118 = vmatpush1.msra.mxu0 0.0
    %3119 = vmatprep.mubr.f32.mxu0 0.0
    %3120 = vmatmul.mubr.f32.gmra.mrb[0].mxu0 %v3053
    %v3121 = vpop.f32.mrb[0].mxu0
    %v3122 = vadd.f32 %v3050, %v3121
    %v3123 = vpop.f32.mrb[0].mxu0
    %3124 = vdwg.mxu0
    %v3125 = vmax.f32 %v3122, 0.0
    %v3126 = vld [vmem:[%s16] sm:$0xff]
    %v3127 = vld [vmem:[%s16 + $0x8] sm:$0xff]
    %v3128 = vld [vmem:[%s16 + $0x10] sm:$0xff]
    %v3129 = vld [vmem:[%s16 + $0x18] sm:$0xff]
    %v3130 = vld [vmem:[%s16 + $0x20] sm:$0xff]
    %v3131 = vld [vmem:[%s16 + $0x28] sm:$0xff]
    %v3132 = vld [vmem:[%s21 + $0x15] ss:$0 sm:$0xff]
    %vm3133 = vcmask 392192
    %v3135 = vsel %vm3133, %v3125, 0
    %3137 = vmatprep.subr.mxu0 0.0
    %3138 = vmatpush1.msra.mxu0 %v3126
    %3139 = vmatprep.subr.mxu0 0.0
    %3140 = vmatpush1.msra.mxu0 %v3127
    %3141 = vmatprep.subr.mxu0 0.0
    %3142 = vmatpush1.msra.mxu0 %v3128
    %3143 = vmatprep.subr.mxu0 0.0
    %3144 = vmatpush1.msra.mxu0 %v3129
    %3145 = vmatprep.subr.mxu0 0.0
    %3146 = vmatpush1.msra.mxu0 %v3130
    %3147 = vmatprep.subr.mxu0 0.0
    %3148 = vmatpush1.msra.mxu0 %v3131
    %3149 = vmatprep.subr.mxu0 0.0
    %3150 = vmatpush1.msra.mxu0 0.0
    %3151 = vmatprep.subr.mxu0 0.0
    %3152 = vmatpush1.msra.mxu0 0.0
    %3153 = vmatprep.subr.mxu0 0.0
    %3154 = vmatpush1.msra.mxu0 0.0
    %3155 = vmatprep.subr.mxu0 0.0
    %3156 = vmatpush1.msra.mxu0 0.0
    %3157 = vmatprep.subr.mxu0 0.0
    %3158 = vmatpush1.msra.mxu0 0.0
    %3159 = vmatprep.subr.mxu0 0.0
    %3160 = vmatpush1.msra.mxu0 0.0
    %3161 = vmatprep.subr.mxu0 0.0
    %3162 = vmatpush1.msra.mxu0 0.0
    %3163 = vmatprep.subr.mxu0 0.0
    %3164 = vmatpush1.msra.mxu0 0.0
    %3165 = vmatprep.subr.mxu0 0.0
    %3166 = vmatpush1.msra.mxu0 0.0
    %3167 = vmatprep.subr.mxu0 0.0
    %3168 = vmatpush1.msra.mxu0 0.0
    %3169 = vmatprep.subr.mxu0 0.0
    %3170 = vmatpush1.msra.mxu0 0.0
    %3171 = vmatprep.subr.mxu0 0.0
    %3172 = vmatpush1.msra.mxu0 0.0
    %3173 = vmatprep.subr.mxu0 0.0
    %3174 = vmatpush1.msra.mxu0 0.0
    %3175 = vmatprep.subr.mxu0 0.0
    %3176 = vmatpush1.msra.mxu0 0.0
    %3177 = vmatprep.subr.mxu0 0.0
    %3178 = vmatpush1.msra.mxu0 0.0
    %3179 = vmatprep.subr.mxu0 0.0
    %3180 = vmatpush1.msra.mxu0 0.0
    %3181 = vmatprep.subr.mxu0 0.0
    %3182 = vmatpush1.msra.mxu0 0.0
    %3183 = vmatprep.subr.mxu0 0.0
    %3184 = vmatpush1.msra.mxu0 0.0
    %3185 = vmatprep.subr.mxu0 0.0
    %3186 = vmatpush1.msra.mxu0 0.0
    %3187 = vmatprep.subr.mxu0 0.0
    %3188 = vmatpush1.msra.mxu0 0.0
    %3189 = vmatprep.subr.mxu0 0.0
    %3190 = vmatpush1.msra.mxu0 0.0
    %3191 = vmatprep.subr.mxu0 0.0
    %3192 = vmatpush1.msra.mxu0 0.0
    %3193 = vmatprep.subr.mxu0 0.0
    %3194 = vmatpush1.msra.mxu0 0.0
    %3195 = vmatprep.subr.mxu0 0.0
    %3196 = vmatpush1.msra.mxu0 0.0
    %3197 = vmatprep.subr.mxu0 0.0
    %3198 = vmatpush1.msra.mxu0 0.0
    %3199 = vmatprep.subr.mxu0 0.0
    %3200 = vmatpush1.msra.mxu0 0.0
    %3201 = vmatprep.mubr.f32.mxu0 0.0
    %3202 = vmatmul.mubr.f32.gmra.mrb[0].mxu0 %v3135
    %v3203 = vpop.f32.mrb[0].mxu0
    %v3204 = vadd.f32 %v3132, %v3203
    %v3205 = vpop.f32.mrb[0].mxu0
    %3206 = vdwg.mxu0
    %s3207 = sld [smem:[#allocation2]]
    %v3208 = vstv %s3207
    %v3209 = vmul.f32 %v3208, %v2795
    %s3210 = sld [smem:[#allocation2 + $0x1]]
    %v3211 = vstv %s3210
    %v3212 = vmul.f32 %v3211, %v2957
    %v3213 = vadd.f32 %v3209, %v3212
    %3215 = vrot.lane.b32.xlu0 %v3213, 30
    %v3216 = vpop.permute.xlu0 %3215
    %3218 = vrot.lane.b32.xlu0 %v3213, 60
    %v3219 = vpop.permute.xlu0 %3218
    %v3221 = vsel %vm235, %v3213, %v3216
    %v3222 = vsel %vm243, %v3221, %v3219
    %v3223 = vadd.f32 %v3204, %v3222
    %vm3224 = vcmask 730112
    %3225 = vst.msk [vmem:[%s22] sm:$0x3] %vm3224, %v3223
    // Predicated region
    $region94: #{forward.1} parent=1 // pred_check
      _
    $region95: #{forward.1} parent=1 // pred_check_branch
      %3227 = sbr.rel (0) target = $region97
    $region96: #{forward.1} parent=1 // pred_region
      _
    $region97: #{forward.1} parent=1 // pred_fallthru
      _
    // Predicated region
    $region98: #{forward.1} parent=1 // pred_check
      _
    $region99: #{forward.1} parent=1 // pred_check_branch
      %3229 = sbr.rel (0) target = $region101
    $region100: #{forward.1} parent=1 // pred_region
      _
    $region101: #{forward.1} parent=1 // pred_fallthru
      _
    // Predicated region
    $region102: #{forward.1} parent=1 // pred_check
      _
    $region103: #{forward.1} parent=1 // pred_check_branch
      %3231 = sbr.rel (0) target = $region105
    $region104: #{forward.1} parent=1 // pred_region
      _
    $region105: #{forward.1} parent=1 // pred_fallthru
      _
    // Predicated region
    $region106: #{forward.1} parent=1 // pred_check
      _
    $region107: #{forward.1} parent=1 // pred_check_branch
      %3233 = sbr.rel (0) target = $region109
    $region108: #{forward.1} parent=1 // pred_region
      _
    $region109: #{forward.1} parent=1 // pred_fallthru
      _
    %3234 = vsyncpa [#allocation3], 1

</llo_original>
